<compile_context>
chip_gen: v5e
topology: v5e:2x2
jax: 0.10.0
libtpu: 0.0.40
codegen_flags: <defaults>
</compile_context>

<pallas_src>
import math

import jax
import jax.numpy as jnp
from jax.experimental import pallas as pl
from jax.experimental.pallas import tpu as pltpu

# ----------------------------- configuration --------------------------------
HIDDEN = 32          # hidden_size
NUM_HEADS = 4        # num_heads  (head_dim = 8)
DEPTH = 2            # encoder depth
MLP_RATIO = 4.0
FREQ_DIM = 256       # frequency_embedding_size
IN_CHANS = 4         # sum of cond channels of the single 2-D modality
IMG = 16             # modality width
PATCH = 8            # patch_size  -> grid = 2x2 = 4 tokens / view
NVIEW = 2            # number of views N
BATCH = 2

HEAD_DIM = HIDDEN // NUM_HEADS
MLP_HIDDEN = int(HIDDEN * MLP_RATIO)
TOKENS_PER_VIEW = (IMG // PATCH) ** 2
SEQ = NVIEW * TOKENS_PER_VIEW           # conditioning tokens per batch element (8)
TOKENS = BATCH * SEQ                    # total tokens
CPP = IN_CHANS * PATCH * PATCH          # flattened patch size (c, kh, kw order)


# --------------------------- fused encoder kernel ----------------------------
def _encoder_kernel(patches_ref, tfreq_ref, pos_ref,
                    pw_ref, pb_ref, lng_ref, lnb_ref,
                    tw1_ref, tb1_ref, tw2_ref, tb2_ref,
                    wada_ref, bada_ref,
                    wq_ref, bq_ref, wk_ref, bk_ref, wv_ref, bv_ref,
                    wo_ref, bo_ref, w1_ref, b1_ref, w2_ref, b2_ref,
                    o_ref):
    f32 = jnp.float32
    bf16 = jnp.bfloat16
    D = HIDDEN
    hd = HEAD_DIM
    S = o_ref.shape[0]          # SEQ tokens of the current batch element

    def mm(a, w):               # bf16 operands, f32 MXU accumulation
        return jnp.dot(a.astype(bf16), w, preferred_element_type=f32)

    # --- PatchEmbed proj (conv-as-matmul) + mod_norm LayerNorm (eps=1e-5) + PE ---
    tok = mm(patches_ref[...], pw_ref[...]) + pb_ref[...]
    mu = jnp.mean(tok, axis=-1, keepdims=True)
    tc = tok - mu
    var = jnp.mean(tc * tc, axis=-1, keepdims=True)
    x = tc * jax.lax.rsqrt(var + 1e-5) * lng_ref[...] + lnb_ref[...] + pos_ref[...]

    # --- TimestepEmbedder MLP: Linear -> SiLU -> Linear (rows pre-repeated / token) ---
    th = mm(tfreq_ref[...], tw1_ref[...]) + tb1_ref[...]
    th = th * jax.nn.sigmoid(th)
    temb = mm(th, tw2_ref[...]) + tb2_ref[...]
    silu_t = temb * jax.nn.sigmoid(temb)          # SiLU(c) shared by every block's adaLN

    # --- loop-invariant lane head-masks (hoisted; built from 2-D iota) ---
    lane = jax.lax.broadcasted_iota(jnp.int32, (1, D), 1)
    head_masks = [((lane >= h * hd) & (lane < (h + 1) * hd)).astype(f32)
                  for h in range(NUM_HEADS)]

    def ln(z):                  # LayerNorm, elementwise_affine=False, eps=1e-6
        m = jnp.mean(z, axis=-1, keepdims=True)
        zc = z - m
        v = jnp.mean(zc * zc, axis=-1, keepdims=True)
        return zc * jax.lax.rsqrt(v + 1e-6)

    sm_scale = 1.0 / math.sqrt(hd)

    for l in range(DEPTH):      # static unroll; layer weights are VMEM-resident refs
        # adaLN chunks from pre-split weights (no lane-offset slicing): (S, D) each.
        def ada(j):
            return mm(silu_t, wada_ref[l, j]) + bada_ref[l, j]
        shift_msa, scale_msa, gate_msa = ada(0), ada(1), ada(2)
        shift_mlp, scale_mlp, gate_mlp = ada(3), ada(4), ada(5)

        # --- self-attention branch ---
        h1 = ln(x) * (1.0 + scale_msa) + shift_msa
        q = mm(h1, wq_ref[l]) + bq_ref[l]
        k = mm(h1, wk_ref[l]) + bk_ref[l]
        v = mm(h1, wv_ref[l]) + bv_ref[l]
        kb = k.astype(bf16)
        attn = jnp.zeros((S, D), f32)
        for hmask in head_masks:
            qh = (q * hmask).astype(bf16)                    # zero non-head columns
            s = jax.lax.dot_general(qh, kb, (((1,), (1,)), ((), ())),
                                    preferred_element_type=f32) * sm_scale
            s = s - jnp.max(s, axis=-1, keepdims=True)
            p = jnp.exp(s)
            p = p * pl.reciprocal(jnp.sum(p, axis=-1, keepdims=True), approx=True)
            # head output occupies only this head's disjoint column range
            attn = attn + mm(p, (v * hmask).astype(bf16))
        attn = mm(attn, wo_ref[l]) + bo_ref[l]               # single out-projection
        x = x + gate_msa * attn

        # --- MLP branch (GELU tanh approximation) ---
        h2 = ln(x) * (1.0 + scale_mlp) + shift_mlp
        g = mm(h2, w1_ref[l]) + b1_ref[l]
        g = 0.5 * g * (1.0 + jnp.tanh(0.7978845608028654 * (g + 0.044715 * g * g * g)))
        x = x + gate_mlp * (mm(g, w2_ref[l]) + b2_ref[l])

    # HIDDEN=32 makes this a masked (lane-sparse) store; at real model sizes
    # (hidden multiple of 128) it is lane-dense automatically.
    o_ref[...] = x


def _rep_spec(shape):
    """Full-array block, same block index for every grid step (stays resident)."""
    n = len(shape)
    return pl.BlockSpec(shape, lambda b: (0,) * n)


def encoder_pallas(params, patches, tfreq_rep, pos):
    weight_args = (params["patch_w"], params["patch_b"], params["ln_g"], params["ln_b"],
                   params["t_w1"], params["t_b1"], params["t_w2"], params["t_b2"],
                   params["w_ada"], params["b_ada"],
                   params["wq"], params["bq"], params["wk"], params["bk"],
                   params["wv"], params["bv"], params["wo"], params["bo"],
                   params["w1"], params["b1"], params["w2"], params["b2"])
    in_specs = [
        pl.BlockSpec((SEQ, CPP), lambda b: (b, 0)),        # per-batch patch rows
        pl.BlockSpec((SEQ, FREQ_DIM), lambda b: (b, 0)),   # per-batch (token-repeated) t-freqs
        _rep_spec(pos.shape),                              # shared positional encoding
    ] + [_rep_spec(w.shape) for w in weight_args]

    return pl.pallas_call(
        _encoder_kernel,
        out_shape=jax.ShapeDtypeStruct((TOKENS, HIDDEN), jnp.float32),
        grid=(BATCH,),
        in_specs=in_specs,
        out_specs=pl.BlockSpec((SEQ, HIDDEN), lambda b: (b, 0)),
        compiler_params=pltpu.CompilerParams(dimension_semantics=("parallel",)),
    )(patches, tfreq_rep, pos, *weight_args)


# ------------------------------- glue (JAX) ----------------------------------
def timestep_embedding(t, dim=FREQ_DIM, max_period=10000):
    half = dim // 2
    freqs = jnp.exp(-math.log(max_period) * jnp.arange(half, dtype=jnp.float32) / half)
    args = t[:, None].astype(jnp.float32) * freqs[None]
    return jnp.concatenate([jnp.cos(args), jnp.sin(args)], axis=-1)


def sinusoid_pos_enc(seq, dim):
    pos = jnp.arange(seq, dtype=jnp.float32)[:, None]
    i = jnp.arange(dim // 2, dtype=jnp.float32)[None, :]
    ang = pos / jnp.power(10000.0, 2.0 * i / dim)
    return jnp.concatenate([jnp.sin(ang), jnp.cos(ang)], axis=-1)   # (seq, dim)


def extract_patches(x):
    """(B, N, C, H, W) NCHW -> (B*N*gh*gw, C*P*P), flattened in (c, kh, kw) order
    to match a flattened Conv2d weight (D, C, P, P)."""
    B, N, C, H, W = x.shape
    P = PATCH
    gh, gw = H // P, W // P
    x = x.reshape(B * N, C, gh, P, gw, P)
    x = x.transpose(0, 2, 4, 1, 3, 5)          # (BN, gh, gw, C, P, P)
    return x.reshape(B * N * gh * gw, C * P * P)


def init_params(key):
    ks = iter(jax.random.split(key, 64))
    bf = jnp.bfloat16

    def nrm(shape, s=0.02, dtype=jnp.float32):
        return (jax.random.normal(next(ks), shape, jnp.float32) * s).astype(dtype)

    def zeros(shape):
        return jnp.zeros(shape, jnp.float32)

    D, HM = HIDDEN, MLP_HIDDEN
    # Weights that feed the MXU are stored in bf16 (f32 accumulation in-kernel);
    # biases / LayerNorm affine stay f32.
    # NOTE: the reference zero-inits adaLN (adaLN-zero); small random values are used
    # here so the attention / MLP paths are actually exercised.  For a PyTorch
    # checkpoint, w_ada[l, j] = W_adaLN[j*D:(j+1)*D, :].T (chunk j of the 6*D output).
    return {
        "patch_w": nrm((CPP, D), dtype=bf), "patch_b": zeros((1, D)),
        "ln_g": jnp.ones((1, D), jnp.float32), "ln_b": zeros((1, D)),
        "t_w1": nrm((FREQ_DIM, D), dtype=bf), "t_b1": zeros((1, D)),
        "t_w2": nrm((D, D), dtype=bf), "t_b2": zeros((1, D)),
        "w_ada": nrm((DEPTH, 6, D, D), dtype=bf), "b_ada": nrm((DEPTH, 6, 1, D)),
        "wq": nrm((DEPTH, D, D), dtype=bf), "bq": zeros((DEPTH, 1, D)),
        "wk": nrm((DEPTH, D, D), dtype=bf), "bk": zeros((DEPTH, 1, D)),
        "wv": nrm((DEPTH, D, D), dtype=bf), "bv": zeros((DEPTH, 1, D)),
        "wo": nrm((DEPTH, D, D), dtype=bf), "bo": zeros((DEPTH, 1, D)),
        "w1": nrm((DEPTH, D, HM), dtype=bf), "b1": zeros((DEPTH, 1, HM)),
        "w2": nrm((DEPTH, HM, D), dtype=bf), "b2": zeros((DEPTH, 1, D)),
    }


@jax.jit
def dit_encoder_forward(params, t, cond):
    """Encoder.forward: cond (B, N, C, H, W), t (B,) -> (tokens, seqlen, pe_s, pe_r)."""
    B = cond.shape[0]

    patches = extract_patches(cond)                              # (B*SEQ, C*P*P)
    tfreq = timestep_embedding(t, FREQ_DIM)                      # (B, 256)
    tfreq_rep = jnp.repeat(tfreq, SEQ, axis=0)                   # per-token copy (B*SEQ, 256)
    pos = sinusoid_pos_enc(SEQ, HIDDEN)                          # (SEQ, D), shared per batch

    tokens = encoder_pallas(params, patches, tfreq_rep, pos)     # (B*SEQ, D)
    tokens = tokens.reshape(B, SEQ, HIDDEN)

    # full_to_padded is identity (all tokens valid)
    seqlen_cond = jnp.full((B,), SEQ, dtype=jnp.int32)
    return tokens, seqlen_cond, None, None


# --------------------------------- main --------------------------------------
if __name__ == "__main__":
    key = jax.random.PRNGKey(0)
    kp, kx, kt = jax.random.split(key, 3)

    params = init_params(kp)
    cond = jax.random.normal(kx, (BATCH, NVIEW, IN_CHANS, IMG, IMG), jnp.float32)
    t = jax.random.uniform(kt, (BATCH,), jnp.float32) * 1000.0

    out, seqlen, _, _ = dit_encoder_forward(params, t, cond)
    out = jax.block_until_ready(out)

    assert out.shape == (BATCH, SEQ, HIDDEN), out.shape
    assert bool(jnp.all(jnp.isfinite(out)))
    print("KERNEL_OK")
</pallas_src>

<mosaic_0001>
module attributes {stable_mosaic.version = 11 : i64} {
  func.func @_encoder_kernel(%arg0: i32, %arg1: memref<8x256xf32, #tpu.memory_space<vmem>>, %arg2: memref<8x256xf32, #tpu.memory_space<vmem>>, %arg3: memref<8x32xf32, #tpu.memory_space<vmem>>, %arg4: memref<256x32xbf16, #tpu.memory_space<vmem>>, %arg5: memref<1x32xf32, #tpu.memory_space<vmem>>, %arg6: memref<1x32xf32, #tpu.memory_space<vmem>>, %arg7: memref<1x32xf32, #tpu.memory_space<vmem>>, %arg8: memref<256x32xbf16, #tpu.memory_space<vmem>>, %arg9: memref<1x32xf32, #tpu.memory_space<vmem>>, %arg10: memref<32x32xbf16, #tpu.memory_space<vmem>>, %arg11: memref<1x32xf32, #tpu.memory_space<vmem>>, %arg12: memref<2x6x32x32xbf16, #tpu.memory_space<vmem>>, %arg13: memref<2x6x1x32xf32, #tpu.memory_space<vmem>>, %arg14: memref<2x32x32xbf16, #tpu.memory_space<vmem>>, %arg15: memref<2x1x32xf32, #tpu.memory_space<vmem>>, %arg16: memref<2x32x32xbf16, #tpu.memory_space<vmem>>, %arg17: memref<2x1x32xf32, #tpu.memory_space<vmem>>, %arg18: memref<2x32x32xbf16, #tpu.memory_space<vmem>>, %arg19: memref<2x1x32xf32, #tpu.memory_space<vmem>>, %arg20: memref<2x32x32xbf16, #tpu.memory_space<vmem>>, %arg21: memref<2x1x32xf32, #tpu.memory_space<vmem>>, %arg22: memref<2x32x128xbf16, #tpu.memory_space<vmem>>, %arg23: memref<2x1x128xf32, #tpu.memory_space<vmem>>, %arg24: memref<2x128x32xbf16, #tpu.memory_space<vmem>>, %arg25: memref<2x1x32xf32, #tpu.memory_space<vmem>>, %arg26: memref<8x32xf32, #tpu.memory_space<vmem>>) attributes {dimension_semantics = [#tpu.dimension_semantics<parallel>], iteration_bounds = array<i64: 2>, scalar_prefetch = 0 : i64, scratch_operands = 0 : i64, tpu.core_type = #tpu.core_type<tc>, window_params = [{transform_indices = @transform_0, window_bounds = array<i64: 8, 256>}, {transform_indices = @transform_1, window_bounds = array<i64: 8, 256>}, {pipeline_mode = #tpu.pipeline_mode<synchronous>, transform_indices = @transform_2, window_bounds = array<i64: 8, 32>}, {pipeline_mode = #tpu.pipeline_mode<synchronous>, transform_indices = @transform_3, window_bounds = array<i64: 256, 32>}, {pipeline_mode = #tpu.pipeline_mode<synchronous>, transform_indices = @transform_4, window_bounds = array<i64: 1, 32>}, {pipeline_mode = #tpu.pipeline_mode<synchronous>, transform_indices = @transform_5, window_bounds = array<i64: 1, 32>}, {pipeline_mode = #tpu.pipeline_mode<synchronous>, transform_indices = @transform_6, window_bounds = array<i64: 1, 32>}, {pipeline_mode = #tpu.pipeline_mode<synchronous>, transform_indices = @transform_7, window_bounds = array<i64: 256, 32>}, {pipeline_mode = #tpu.pipeline_mode<synchronous>, transform_indices = @transform_8, window_bounds = array<i64: 1, 32>}, {pipeline_mode = #tpu.pipeline_mode<synchronous>, transform_indices = @transform_9, window_bounds = array<i64: 32, 32>}, {pipeline_mode = #tpu.pipeline_mode<synchronous>, transform_indices = @transform_10, window_bounds = array<i64: 1, 32>}, {pipeline_mode = #tpu.pipeline_mode<synchronous>, transform_indices = @transform_11, window_bounds = array<i64: 2, 6, 32, 32>}, {pipeline_mode = #tpu.pipeline_mode<synchronous>, transform_indices = @transform_12, window_bounds = array<i64: 2, 6, 1, 32>}, {pipeline_mode = #tpu.pipeline_mode<synchronous>, transform_indices = @transform_13, window_bounds = array<i64: 2, 32, 32>}, {pipeline_mode = #tpu.pipeline_mode<synchronous>, transform_indices = @transform_14, window_bounds = array<i64: 2, 1, 32>}, {pipeline_mode = #tpu.pipeline_mode<synchronous>, transform_indices = @transform_15, window_bounds = array<i64: 2, 32, 32>}, {pipeline_mode = #tpu.pipeline_mode<synchronous>, transform_indices = @transform_16, window_bounds = array<i64: 2, 1, 32>}, {pipeline_mode = #tpu.pipeline_mode<synchronous>, transform_indices = @transform_17, window_bounds = array<i64: 2, 32, 32>}, {pipeline_mode = #tpu.pipeline_mode<synchronous>, transform_indices = @transform_18, window_bounds = array<i64: 2, 1, 32>}, {pipeline_mode = #tpu.pipeline_mode<synchronous>, transform_indices = @transform_19, window_bounds = array<i64: 2, 32, 32>}, {pipeline_mode = #tpu.pipeline_mode<synchronous>, transform_indices = @transform_20, window_bounds = array<i64: 2, 1, 32>}, {pipeline_mode = #tpu.pipeline_mode<synchronous>, transform_indices = @transform_21, window_bounds = array<i64: 2, 32, 128>}, {pipeline_mode = #tpu.pipeline_mode<synchronous>, transform_indices = @transform_22, window_bounds = array<i64: 2, 1, 128>}, {pipeline_mode = #tpu.pipeline_mode<synchronous>, transform_indices = @transform_23, window_bounds = array<i64: 2, 128, 32>}, {pipeline_mode = #tpu.pipeline_mode<synchronous>, transform_indices = @transform_24, window_bounds = array<i64: 2, 1, 32>}, {transform_indices = @transform_25, window_bounds = array<i64: 8, 32>}]} {
    %c0 = arith.constant 0 : index
    %c0_0 = arith.constant 0 : index
    %0 = vector.load %arg1[%c0, %c0_0] : memref<8x256xf32, #tpu.memory_space<vmem>>, vector<8x256xf32>
    %c0_1 = arith.constant 0 : index
    %c0_2 = arith.constant 0 : index
    %1 = vector.load %arg4[%c0_1, %c0_2] : memref<256x32xbf16, #tpu.memory_space<vmem>>, vector<256x32xbf16>
    %2 = arith.truncf %0 : vector<8x256xf32> to vector<8x256xbf16>
    %cst = arith.constant dense<0.000000e+00> : vector<8x32xf32>
    %3 = tpu.matmul %2, %1, %cst {dimension_numbers = #tpu.dot_dimension_numbers<[1], [0], [0], [1], [0, 0, 1, 1], [], []>} : vector<8x256xbf16>, vector<256x32xbf16>, vector<8x32xf32> -> vector<8x32xf32>
    %c0_3 = arith.constant 0 : index
    %c0_4 = arith.constant 0 : index
    %4 = vector.load %arg5[%c0_3, %c0_4] : memref<1x32xf32, #tpu.memory_space<vmem>>, vector<1x32xf32>
    %5 = vector.broadcast %4 : vector<1x32xf32> to vector<8x32xf32>
    %6 = arith.addf %3, %5 : vector<8x32xf32>
    %cst_5 = arith.constant dense<0.000000e+00> : vector<8xf32>
    %7 = vector.multi_reduction <add>, %6, %cst_5 [1] : vector<8x32xf32> to vector<8xf32>
    %8 = vector.shape_cast %7 : vector<8xf32> to vector<8x1xf32>
    %cst_6 = arith.constant 3.200000e+01 : f32
    %9 = vector.broadcast %cst_6 : f32 to vector<8x1xf32>
    %10 = arith.divf %8, %9 : vector<8x1xf32>
    %11 = vector.broadcast %10 : vector<8x1xf32> to vector<8x32xf32>
    %12 = arith.subf %6, %11 : vector<8x32xf32>
    %13 = arith.mulf %12, %12 : vector<8x32xf32>
    %cst_7 = arith.constant dense<0.000000e+00> : vector<8xf32>
    %14 = vector.multi_reduction <add>, %13, %cst_7 [1] : vector<8x32xf32> to vector<8xf32>
    %15 = vector.shape_cast %14 : vector<8xf32> to vector<8x1xf32>
    %cst_8 = arith.constant 3.200000e+01 : f32
    %16 = vector.broadcast %cst_8 : f32 to vector<8x1xf32>
    %17 = arith.divf %15, %16 : vector<8x1xf32>
    %cst_9 = arith.constant 9.99999974E-6 : f32
    %18 = vector.broadcast %cst_9 : f32 to vector<8x1xf32>
    %19 = arith.addf %17, %18 : vector<8x1xf32>
    %20 = math.rsqrt %19 : vector<8x1xf32>
    %21 = vector.broadcast %20 : vector<8x1xf32> to vector<8x32xf32>
    %22 = arith.mulf %12, %21 : vector<8x32xf32>
    %c0_10 = arith.constant 0 : index
    %c0_11 = arith.constant 0 : index
    %23 = vector.load %arg6[%c0_10, %c0_11] : memref<1x32xf32, #tpu.memory_space<vmem>>, vector<1x32xf32>
    %24 = vector.broadcast %23 : vector<1x32xf32> to vector<8x32xf32>
    %25 = arith.mulf %22, %24 : vector<8x32xf32>
    %c0_12 = arith.constant 0 : index
    %c0_13 = arith.constant 0 : index
    %26 = vector.load %arg7[%c0_12, %c0_13] : memref<1x32xf32, #tpu.memory_space<vmem>>, vector<1x32xf32>
    %27 = vector.broadcast %26 : vector<1x32xf32> to vector<8x32xf32>
    %28 = arith.addf %25, %27 : vector<8x32xf32>
    %c0_14 = arith.constant 0 : index
    %c0_15 = arith.constant 0 : index
    %29 = vector.load %arg3[%c0_14, %c0_15] : memref<8x32xf32, #tpu.memory_space<vmem>>, vector<8x32xf32>
    %30 = arith.addf %28, %29 : vector<8x32xf32>
    %c0_16 = arith.constant 0 : index
    %c0_17 = arith.constant 0 : index
    %31 = vector.load %arg2[%c0_16, %c0_17] : memref<8x256xf32, #tpu.memory_space<vmem>>, vector<8x256xf32>
    %c0_18 = arith.constant 0 : index
    %c0_19 = arith.constant 0 : index
    %32 = vector.load %arg8[%c0_18, %c0_19] : memref<256x32xbf16, #tpu.memory_space<vmem>>, vector<256x32xbf16>
    %33 = arith.truncf %31 : vector<8x256xf32> to vector<8x256xbf16>
    %cst_20 = arith.constant dense<0.000000e+00> : vector<8x32xf32>
    %34 = tpu.matmul %33, %32, %cst_20 {dimension_numbers = #tpu.dot_dimension_numbers<[1], [0], [0], [1], [0, 0, 1, 1], [], []>} : vector<8x256xbf16>, vector<256x32xbf16>, vector<8x32xf32> -> vector<8x32xf32>
    %c0_21 = arith.constant 0 : index
    %c0_22 = arith.constant 0 : index
    %35 = vector.load %arg9[%c0_21, %c0_22] : memref<1x32xf32, #tpu.memory_space<vmem>>, vector<1x32xf32>
    %36 = vector.broadcast %35 : vector<1x32xf32> to vector<8x32xf32>
    %37 = arith.addf %34, %36 : vector<8x32xf32>
    %38 = arith.negf %37 : vector<8x32xf32>
    %39 = math.exp %38 : vector<8x32xf32>
    %cst_23 = arith.constant 1.000000e+00 : f32
    %40 = vector.broadcast %cst_23 : f32 to vector<8x32xf32>
    %41 = arith.addf %40, %39 : vector<8x32xf32>
    %42 = arith.divf %40, %41 : vector<8x32xf32>
    %43 = arith.mulf %37, %42 : vector<8x32xf32>
    %c0_24 = arith.constant 0 : index
    %c0_25 = arith.constant 0 : index
    %44 = vector.load %arg10[%c0_24, %c0_25] : memref<32x32xbf16, #tpu.memory_space<vmem>>, vector<32x32xbf16>
    %45 = arith.truncf %43 : vector<8x32xf32> to vector<8x32xbf16>
    %cst_26 = arith.constant dense<0.000000e+00> : vector<8x32xf32>
    %46 = tpu.matmul %45, %44, %cst_26 {dimension_numbers = #tpu.dot_dimension_numbers<[1], [0], [0], [1], [0, 0, 1, 1], [], []>} : vector<8x32xbf16>, vector<32x32xbf16>, vector<8x32xf32> -> vector<8x32xf32>
    %c0_27 = arith.constant 0 : index
    %c0_28 = arith.constant 0 : index
    %47 = vector.load %arg11[%c0_27, %c0_28] : memref<1x32xf32, #tpu.memory_space<vmem>>, vector<1x32xf32>
    %48 = vector.broadcast %47 : vector<1x32xf32> to vector<8x32xf32>
    %49 = arith.addf %46, %48 : vector<8x32xf32>
    %50 = arith.negf %49 : vector<8x32xf32>
    %51 = math.exp %50 : vector<8x32xf32>
    %cst_29 = arith.constant 1.000000e+00 : f32
    %52 = vector.broadcast %cst_29 : f32 to vector<8x32xf32>
    %53 = arith.addf %52, %51 : vector<8x32xf32>
    %54 = arith.divf %52, %53 : vector<8x32xf32>
    %55 = arith.mulf %49, %54 : vector<8x32xf32>
    %56 = tpu.iota {dimensions = array<i32: 1>} : vector<1x32xi32>
    %c0_i32 = arith.constant 0 : i32
    %57 = vector.broadcast %c0_i32 : i32 to vector<1x32xi32>
    %58 = arith.cmpi sge, %56, %57 : vector<1x32xi32>
    %c8_i32 = arith.constant 8 : i32
    %59 = vector.broadcast %c8_i32 : i32 to vector<1x32xi32>
    %60 = arith.cmpi slt, %56, %59 : vector<1x32xi32>
    %61 = arith.andi %58, %60 : vector<1x32xi1>
    %62 = arith.extui %61 : vector<1x32xi1> to vector<1x32xi32>
    %63 = arith.sitofp %62 : vector<1x32xi32> to vector<1x32xf32>
    %c8_i32_30 = arith.constant 8 : i32
    %64 = vector.broadcast %c8_i32_30 : i32 to vector<1x32xi32>
    %65 = arith.cmpi sge, %56, %64 : vector<1x32xi32>
    %c16_i32 = arith.constant 16 : i32
    %66 = vector.broadcast %c16_i32 : i32 to vector<1x32xi32>
    %67 = arith.cmpi slt, %56, %66 : vector<1x32xi32>
    %68 = arith.andi %65, %67 : vector<1x32xi1>
    %69 = arith.extui %68 : vector<1x32xi1> to vector<1x32xi32>
    %70 = arith.sitofp %69 : vector<1x32xi32> to vector<1x32xf32>
    %c16_i32_31 = arith.constant 16 : i32
    %71 = vector.broadcast %c16_i32_31 : i32 to vector<1x32xi32>
    %72 = arith.cmpi sge, %56, %71 : vector<1x32xi32>
    %c24_i32 = arith.constant 24 : i32
    %73 = vector.broadcast %c24_i32 : i32 to vector<1x32xi32>
    %74 = arith.cmpi slt, %56, %73 : vector<1x32xi32>
    %75 = arith.andi %72, %74 : vector<1x32xi1>
    %76 = arith.extui %75 : vector<1x32xi1> to vector<1x32xi32>
    %77 = arith.sitofp %76 : vector<1x32xi32> to vector<1x32xf32>
    %c24_i32_32 = arith.constant 24 : i32
    %78 = vector.broadcast %c24_i32_32 : i32 to vector<1x32xi32>
    %79 = arith.cmpi sge, %56, %78 : vector<1x32xi32>
    %c32_i32 = arith.constant 32 : i32
    %80 = vector.broadcast %c32_i32 : i32 to vector<1x32xi32>
    %81 = arith.cmpi slt, %56, %80 : vector<1x32xi32>
    %82 = arith.andi %79, %81 : vector<1x32xi1>
    %83 = arith.extui %82 : vector<1x32xi1> to vector<1x32xi32>
    %84 = arith.sitofp %83 : vector<1x32xi32> to vector<1x32xf32>
    %c0_33 = arith.constant 0 : index
    %c0_34 = arith.constant 0 : index
    %c0_35 = arith.constant 0 : index
    %c0_36 = arith.constant 0 : index
    %85 = vector.load %arg12[%c0_33, %c0_34, %c0_35, %c0_36] : memref<2x6x32x32xbf16, #tpu.memory_space<vmem>>, vector<1x1x32x32xbf16>
    %86 = vector.shape_cast %85 : vector<1x1x32x32xbf16> to vector<32x32xbf16>
    %87 = arith.truncf %55 : vector<8x32xf32> to vector<8x32xbf16>
    %cst_37 = arith.constant dense<0.000000e+00> : vector<8x32xf32>
    %88 = tpu.matmul %87, %86, %cst_37 {dimension_numbers = #tpu.dot_dimension_numbers<[1], [0], [0], [1], [0, 0, 1, 1], [], []>} : vector<8x32xbf16>, vector<32x32xbf16>, vector<8x32xf32> -> vector<8x32xf32>
    %c0_38 = arith.constant 0 : index
    %c0_39 = arith.constant 0 : index
    %c0_40 = arith.constant 0 : index
    %c0_41 = arith.constant 0 : index
    %89 = vector.load %arg13[%c0_38, %c0_39, %c0_40, %c0_41] : memref<2x6x1x32xf32, #tpu.memory_space<vmem>>, vector<1x1x1x32xf32>
    %90 = vector.shape_cast %89 : vector<1x1x1x32xf32> to vector<1x32xf32>
    %91 = vector.broadcast %90 : vector<1x32xf32> to vector<8x32xf32>
    %92 = arith.addf %88, %91 : vector<8x32xf32>
    %c0_42 = arith.constant 0 : index
    %c1 = arith.constant 1 : index
    %c0_43 = arith.constant 0 : index
    %c0_44 = arith.constant 0 : index
    %93 = vector.load %arg12[%c0_42, %c1, %c0_43, %c0_44] : memref<2x6x32x32xbf16, #tpu.memory_space<vmem>>, vector<1x1x32x32xbf16>
    %94 = vector.shape_cast %93 : vector<1x1x32x32xbf16> to vector<32x32xbf16>
    %95 = arith.truncf %55 : vector<8x32xf32> to vector<8x32xbf16>
    %cst_45 = arith.constant dense<0.000000e+00> : vector<8x32xf32>
    %96 = tpu.matmul %95, %94, %cst_45 {dimension_numbers = #tpu.dot_dimension_numbers<[1], [0], [0], [1], [0, 0, 1, 1], [], []>} : vector<8x32xbf16>, vector<32x32xbf16>, vector<8x32xf32> -> vector<8x32xf32>
    %c0_46 = arith.constant 0 : index
    %c1_47 = arith.constant 1 : index
    %c0_48 = arith.constant 0 : index
    %c0_49 = arith.constant 0 : index
    %97 = vector.load %arg13[%c0_46, %c1_47, %c0_48, %c0_49] : memref<2x6x1x32xf32, #tpu.memory_space<vmem>>, vector<1x1x1x32xf32>
    %98 = vector.shape_cast %97 : vector<1x1x1x32xf32> to vector<1x32xf32>
    %99 = vector.broadcast %98 : vector<1x32xf32> to vector<8x32xf32>
    %100 = arith.addf %96, %99 : vector<8x32xf32>
    %c0_50 = arith.constant 0 : index
    %c2 = arith.constant 2 : index
    %c0_51 = arith.constant 0 : index
    %c0_52 = arith.constant 0 : index
    %101 = vector.load %arg12[%c0_50, %c2, %c0_51, %c0_52] : memref<2x6x32x32xbf16, #tpu.memory_space<vmem>>, vector<1x1x32x32xbf16>
    %102 = vector.shape_cast %101 : vector<1x1x32x32xbf16> to vector<32x32xbf16>
    %103 = arith.truncf %55 : vector<8x32xf32> to vector<8x32xbf16>
    %cst_53 = arith.constant dense<0.000000e+00> : vector<8x32xf32>
    %104 = tpu.matmul %103, %102, %cst_53 {dimension_numbers = #tpu.dot_dimension_numbers<[1], [0], [0], [1], [0, 0, 1, 1], [], []>} : vector<8x32xbf16>, vector<32x32xbf16>, vector<8x32xf32> -> vector<8x32xf32>
    %c0_54 = arith.constant 0 : index
    %c2_55 = arith.constant 2 : index
    %c0_56 = arith.constant 0 : index
    %c0_57 = arith.constant 0 : index
    %105 = vector.load %arg13[%c0_54, %c2_55, %c0_56, %c0_57] : memref<2x6x1x32xf32, #tpu.memory_space<vmem>>, vector<1x1x1x32xf32>
    %106 = vector.shape_cast %105 : vector<1x1x1x32xf32> to vector<1x32xf32>
    %107 = vector.broadcast %106 : vector<1x32xf32> to vector<8x32xf32>
    %108 = arith.addf %104, %107 : vector<8x32xf32>
    %c0_58 = arith.constant 0 : index
    %c3 = arith.constant 3 : index
    %c0_59 = arith.constant 0 : index
    %c0_60 = arith.constant 0 : index
    %109 = vector.load %arg12[%c0_58, %c3, %c0_59, %c0_60] : memref<2x6x32x32xbf16, #tpu.memory_space<vmem>>, vector<1x1x32x32xbf16>
    %110 = vector.shape_cast %109 : vector<1x1x32x32xbf16> to vector<32x32xbf16>
    %111 = arith.truncf %55 : vector<8x32xf32> to vector<8x32xbf16>
    %cst_61 = arith.constant dense<0.000000e+00> : vector<8x32xf32>
    %112 = tpu.matmul %111, %110, %cst_61 {dimension_numbers = #tpu.dot_dimension_numbers<[1], [0], [0], [1], [0, 0, 1, 1], [], []>} : vector<8x32xbf16>, vector<32x32xbf16>, vector<8x32xf32> -> vector<8x32xf32>
    %c0_62 = arith.constant 0 : index
    %c3_63 = arith.constant 3 : index
    %c0_64 = arith.constant 0 : index
    %c0_65 = arith.constant 0 : index
    %113 = vector.load %arg13[%c0_62, %c3_63, %c0_64, %c0_65] : memref<2x6x1x32xf32, #tpu.memory_space<vmem>>, vector<1x1x1x32xf32>
    %114 = vector.shape_cast %113 : vector<1x1x1x32xf32> to vector<1x32xf32>
    %115 = vector.broadcast %114 : vector<1x32xf32> to vector<8x32xf32>
    %116 = arith.addf %112, %115 : vector<8x32xf32>
    %c0_66 = arith.constant 0 : index
    %c4 = arith.constant 4 : index
    %c0_67 = arith.constant 0 : index
    %c0_68 = arith.constant 0 : index
    %117 = vector.load %arg12[%c0_66, %c4, %c0_67, %c0_68] : memref<2x6x32x32xbf16, #tpu.memory_space<vmem>>, vector<1x1x32x32xbf16>
    %118 = vector.shape_cast %117 : vector<1x1x32x32xbf16> to vector<32x32xbf16>
    %119 = arith.truncf %55 : vector<8x32xf32> to vector<8x32xbf16>
    %cst_69 = arith.constant dense<0.000000e+00> : vector<8x32xf32>
    %120 = tpu.matmul %119, %118, %cst_69 {dimension_numbers = #tpu.dot_dimension_numbers<[1], [0], [0], [1], [0, 0, 1, 1], [], []>} : vector<8x32xbf16>, vector<32x32xbf16>, vector<8x32xf32> -> vector<8x32xf32>
    %c0_70 = arith.constant 0 : index
    %c4_71 = arith.constant 4 : index
    %c0_72 = arith.constant 0 : index
    %c0_73 = arith.constant 0 : index
    %121 = vector.load %arg13[%c0_70, %c4_71, %c0_72, %c0_73] : memref<2x6x1x32xf32, #tpu.memory_space<vmem>>, vector<1x1x1x32xf32>
    %122 = vector.shape_cast %121 : vector<1x1x1x32xf32> to vector<1x32xf32>
    %123 = vector.broadcast %122 : vector<1x32xf32> to vector<8x32xf32>
    %124 = arith.addf %120, %123 : vector<8x32xf32>
    %c0_74 = arith.constant 0 : index
    %c5 = arith.constant 5 : index
    %c0_75 = arith.constant 0 : index
    %c0_76 = arith.constant 0 : index
    %125 = vector.load %arg12[%c0_74, %c5, %c0_75, %c0_76] : memref<2x6x32x32xbf16, #tpu.memory_space<vmem>>, vector<1x1x32x32xbf16>
    %126 = vector.shape_cast %125 : vector<1x1x32x32xbf16> to vector<32x32xbf16>
    %127 = arith.truncf %55 : vector<8x32xf32> to vector<8x32xbf16>
    %cst_77 = arith.constant dense<0.000000e+00> : vector<8x32xf32>
    %128 = tpu.matmul %127, %126, %cst_77 {dimension_numbers = #tpu.dot_dimension_numbers<[1], [0], [0], [1], [0, 0, 1, 1], [], []>} : vector<8x32xbf16>, vector<32x32xbf16>, vector<8x32xf32> -> vector<8x32xf32>
    %c0_78 = arith.constant 0 : index
    %c5_79 = arith.constant 5 : index
    %c0_80 = arith.constant 0 : index
    %c0_81 = arith.constant 0 : index
    %129 = vector.load %arg13[%c0_78, %c5_79, %c0_80, %c0_81] : memref<2x6x1x32xf32, #tpu.memory_space<vmem>>, vector<1x1x1x32xf32>
    %130 = vector.shape_cast %129 : vector<1x1x1x32xf32> to vector<1x32xf32>
    %131 = vector.broadcast %130 : vector<1x32xf32> to vector<8x32xf32>
    %132 = arith.addf %128, %131 : vector<8x32xf32>
    %cst_82 = arith.constant dense<0.000000e+00> : vector<8xf32>
    %133 = vector.multi_reduction <add>, %30, %cst_82 [1] : vector<8x32xf32> to vector<8xf32>
    %134 = vector.shape_cast %133 : vector<8xf32> to vector<8x1xf32>
    %cst_83 = arith.constant 3.200000e+01 : f32
    %135 = vector.broadcast %cst_83 : f32 to vector<8x1xf32>
    %136 = arith.divf %134, %135 : vector<8x1xf32>
    %137 = vector.broadcast %136 : vector<8x1xf32> to vector<8x32xf32>
    %138 = arith.subf %30, %137 : vector<8x32xf32>
    %139 = arith.mulf %138, %138 : vector<8x32xf32>
    %cst_84 = arith.constant dense<0.000000e+00> : vector<8xf32>
    %140 = vector.multi_reduction <add>, %139, %cst_84 [1] : vector<8x32xf32> to vector<8xf32>
    %141 = vector.shape_cast %140 : vector<8xf32> to vector<8x1xf32>
    %cst_85 = arith.constant 3.200000e+01 : f32
    %142 = vector.broadcast %cst_85 : f32 to vector<8x1xf32>
    %143 = arith.divf %141, %142 : vector<8x1xf32>
    %cst_86 = arith.constant 9.99999997E-7 : f32
    %144 = vector.broadcast %cst_86 : f32 to vector<8x1xf32>
    %145 = arith.addf %143, %144 : vector<8x1xf32>
    %146 = math.rsqrt %145 : vector<8x1xf32>
    %147 = vector.broadcast %146 : vector<8x1xf32> to vector<8x32xf32>
    %148 = arith.mulf %138, %147 : vector<8x32xf32>
    %cst_87 = arith.constant 1.000000e+00 : f32
    %149 = vector.broadcast %cst_87 : f32 to vector<8x32xf32>
    %150 = arith.addf %149, %100 : vector<8x32xf32>
    %151 = arith.mulf %148, %150 : vector<8x32xf32>
    %152 = arith.addf %151, %92 : vector<8x32xf32>
    %c0_88 = arith.constant 0 : index
    %c0_89 = arith.constant 0 : index
    %c0_90 = arith.constant 0 : index
    %153 = vector.load %arg14[%c0_88, %c0_89, %c0_90] : memref<2x32x32xbf16, #tpu.memory_space<vmem>>, vector<1x32x32xbf16>
    %154 = vector.shape_cast %153 : vector<1x32x32xbf16> to vector<32x32xbf16>
    %155 = arith.truncf %152 : vector<8x32xf32> to vector<8x32xbf16>
    %cst_91 = arith.constant dense<0.000000e+00> : vector<8x32xf32>
    %156 = tpu.matmul %155, %154, %cst_91 {dimension_numbers = #tpu.dot_dimension_numbers<[1], [0], [0], [1], [0, 0, 1, 1], [], []>} : vector<8x32xbf16>, vector<32x32xbf16>, vector<8x32xf32> -> vector<8x32xf32>
    %c0_92 = arith.constant 0 : index
    %c0_93 = arith.constant 0 : index
    %c0_94 = arith.constant 0 : index
    %157 = vector.load %arg15[%c0_92, %c0_93, %c0_94] : memref<2x1x32xf32, #tpu.memory_space<vmem>>, vector<1x1x32xf32>
    %158 = vector.shape_cast %157 : vector<1x1x32xf32> to vector<1x32xf32>
    %159 = vector.broadcast %158 : vector<1x32xf32> to vector<8x32xf32>
    %160 = arith.addf %156, %159 : vector<8x32xf32>
    %c0_95 = arith.constant 0 : index
    %c0_96 = arith.constant 0 : index
    %c0_97 = arith.constant 0 : index
    %161 = vector.load %arg16[%c0_95, %c0_96, %c0_97] : memref<2x32x32xbf16, #tpu.memory_space<vmem>>, vector<1x32x32xbf16>
    %162 = vector.shape_cast %161 : vector<1x32x32xbf16> to vector<32x32xbf16>
    %163 = arith.truncf %152 : vector<8x32xf32> to vector<8x32xbf16>
    %cst_98 = arith.constant dense<0.000000e+00> : vector<8x32xf32>
    %164 = tpu.matmul %163, %162, %cst_98 {dimension_numbers = #tpu.dot_dimension_numbers<[1], [0], [0], [1], [0, 0, 1, 1], [], []>} : vector<8x32xbf16>, vector<32x32xbf16>, vector<8x32xf32> -> vector<8x32xf32>
    %c0_99 = arith.constant 0 : index
    %c0_100 = arith.constant 0 : index
    %c0_101 = arith.constant 0 : index
    %165 = vector.load %arg17[%c0_99, %c0_100, %c0_101] : memref<2x1x32xf32, #tpu.memory_space<vmem>>, vector<1x1x32xf32>
    %166 = vector.shape_cast %165 : vector<1x1x32xf32> to vector<1x32xf32>
    %167 = vector.broadcast %166 : vector<1x32xf32> to vector<8x32xf32>
    %168 = arith.addf %164, %167 : vector<8x32xf32>
    %c0_102 = arith.constant 0 : index
    %c0_103 = arith.constant 0 : index
    %c0_104 = arith.constant 0 : index
    %169 = vector.load %arg18[%c0_102, %c0_103, %c0_104] : memref<2x32x32xbf16, #tpu.memory_space<vmem>>, vector<1x32x32xbf16>
    %170 = vector.shape_cast %169 : vector<1x32x32xbf16> to vector<32x32xbf16>
    %171 = arith.truncf %152 : vector<8x32xf32> to vector<8x32xbf16>
    %cst_105 = arith.constant dense<0.000000e+00> : vector<8x32xf32>
    %172 = tpu.matmul %171, %170, %cst_105 {dimension_numbers = #tpu.dot_dimension_numbers<[1], [0], [0], [1], [0, 0, 1, 1], [], []>} : vector<8x32xbf16>, vector<32x32xbf16>, vector<8x32xf32> -> vector<8x32xf32>
    %c0_106 = arith.constant 0 : index
    %c0_107 = arith.constant 0 : index
    %c0_108 = arith.constant 0 : index
    %173 = vector.load %arg19[%c0_106, %c0_107, %c0_108] : memref<2x1x32xf32, #tpu.memory_space<vmem>>, vector<1x1x32xf32>
    %174 = vector.shape_cast %173 : vector<1x1x32xf32> to vector<1x32xf32>
    %175 = vector.broadcast %174 : vector<1x32xf32> to vector<8x32xf32>
    %176 = arith.addf %172, %175 : vector<8x32xf32>
    %177 = arith.truncf %168 : vector<8x32xf32> to vector<8x32xbf16>
    %cst_109 = arith.constant 0.000000e+00 : f32
    %178 = vector.broadcast %cst_109 : f32 to vector<8x32xf32>
    %179 = vector.broadcast %63 : vector<1x32xf32> to vector<8x32xf32>
    %180 = arith.mulf %160, %179 : vector<8x32xf32>
    %181 = arith.truncf %180 : vector<8x32xf32> to vector<8x32xbf16>
    %cst_110 = arith.constant dense<0.000000e+00> : vector<8x8xf32>
    %182 = tpu.matmul %181, %177, %cst_110 {dimension_numbers = #tpu.dot_dimension_numbers<[1], [1], [0], [0], [0, 0, 1, 0], [], []>} : vector<8x32xbf16>, vector<8x32xbf16>, vector<8x8xf32> -> vector<8x8xf32>
    %cst_111 = arith.constant 0.353553385 : f32
    %183 = vector.broadcast %cst_111 : f32 to vector<8x8xf32>
    %184 = arith.mulf %182, %183 : vector<8x8xf32>
    %cst_112 = arith.constant dense<0xFF800000> : vector<8xf32>
    %185 = vector.multi_reduction <maximumf>, %184, %cst_112 [1] : vector<8x8xf32> to vector<8xf32>
    %186 = vector.shape_cast %185 : vector<8xf32> to vector<8x1xf32>
    %187 = vector.broadcast %186 : vector<8x1xf32> to vector<8x8xf32>
    %188 = arith.subf %184, %187 : vector<8x8xf32>
    %189 = math.exp %188 : vector<8x8xf32>
    %cst_113 = arith.constant dense<0.000000e+00> : vector<8xf32>
    %190 = vector.multi_reduction <add>, %189, %cst_113 [1] : vector<8x8xf32> to vector<8xf32>
    %191 = vector.shape_cast %190 : vector<8xf32> to vector<8x1xf32>
    %192 = tpu.reciprocal %191 {approx = true} : vector<8x1xf32> -> vector<8x1xf32>
    %193 = vector.broadcast %192 : vector<8x1xf32> to vector<8x8xf32>
    %194 = arith.mulf %189, %193 : vector<8x8xf32>
    %195 = vector.broadcast %63 : vector<1x32xf32> to vector<8x32xf32>
    %196 = arith.mulf %176, %195 : vector<8x32xf32>
    %197 = arith.truncf %196 : vector<8x32xf32> to vector<8x32xbf16>
    %198 = arith.truncf %194 : vector<8x8xf32> to vector<8x8xbf16>
    %cst_114 = arith.constant dense<0.000000e+00> : vector<8x32xf32>
    %199 = tpu.matmul %198, %197, %cst_114 {dimension_numbers = #tpu.dot_dimension_numbers<[1], [0], [0], [1], [0, 0, 1, 1], [], []>} : vector<8x8xbf16>, vector<8x32xbf16>, vector<8x32xf32> -> vector<8x32xf32>
    %200 = arith.addf %178, %199 : vector<8x32xf32>
    %201 = vector.broadcast %70 : vector<1x32xf32> to vector<8x32xf32>
    %202 = arith.mulf %160, %201 : vector<8x32xf32>
    %203 = arith.truncf %202 : vector<8x32xf32> to vector<8x32xbf16>
    %cst_115 = arith.constant dense<0.000000e+00> : vector<8x8xf32>
    %204 = tpu.matmul %203, %177, %cst_115 {dimension_numbers = #tpu.dot_dimension_numbers<[1], [1], [0], [0], [0, 0, 1, 0], [], []>} : vector<8x32xbf16>, vector<8x32xbf16>, vector<8x8xf32> -> vector<8x8xf32>
    %cst_116 = arith.constant 0.353553385 : f32
    %205 = vector.broadcast %cst_116 : f32 to vector<8x8xf32>
    %206 = arith.mulf %204, %205 : vector<8x8xf32>
    %cst_117 = arith.constant dense<0xFF800000> : vector<8xf32>
    %207 = vector.multi_reduction <maximumf>, %206, %cst_117 [1] : vector<8x8xf32> to vector<8xf32>
    %208 = vector.shape_cast %207 : vector<8xf32> to vector<8x1xf32>
    %209 = vector.broadcast %208 : vector<8x1xf32> to vector<8x8xf32>
    %210 = arith.subf %206, %209 : vector<8x8xf32>
    %211 = math.exp %210 : vector<8x8xf32>
    %cst_118 = arith.constant dense<0.000000e+00> : vector<8xf32>
    %212 = vector.multi_reduction <add>, %211, %cst_118 [1] : vector<8x8xf32> to vector<8xf32>
    %213 = vector.shape_cast %212 : vector<8xf32> to vector<8x1xf32>
    %214 = tpu.reciprocal %213 {approx = true} : vector<8x1xf32> -> vector<8x1xf32>
    %215 = vector.broadcast %214 : vector<8x1xf32> to vector<8x8xf32>
    %216 = arith.mulf %211, %215 : vector<8x8xf32>
    %217 = vector.broadcast %70 : vector<1x32xf32> to vector<8x32xf32>
    %218 = arith.mulf %176, %217 : vector<8x32xf32>
    %219 = arith.truncf %218 : vector<8x32xf32> to vector<8x32xbf16>
    %220 = arith.truncf %216 : vector<8x8xf32> to vector<8x8xbf16>
    %cst_119 = arith.constant dense<0.000000e+00> : vector<8x32xf32>
    %221 = tpu.matmul %220, %219, %cst_119 {dimension_numbers = #tpu.dot_dimension_numbers<[1], [0], [0], [1], [0, 0, 1, 1], [], []>} : vector<8x8xbf16>, vector<8x32xbf16>, vector<8x32xf32> -> vector<8x32xf32>
    %222 = arith.addf %200, %221 : vector<8x32xf32>
    %223 = vector.broadcast %77 : vector<1x32xf32> to vector<8x32xf32>
    %224 = arith.mulf %160, %223 : vector<8x32xf32>
    %225 = arith.truncf %224 : vector<8x32xf32> to vector<8x32xbf16>
    %cst_120 = arith.constant dense<0.000000e+00> : vector<8x8xf32>
    %226 = tpu.matmul %225, %177, %cst_120 {dimension_numbers = #tpu.dot_dimension_numbers<[1], [1], [0], [0], [0, 0, 1, 0], [], []>} : vector<8x32xbf16>, vector<8x32xbf16>, vector<8x8xf32> -> vector<8x8xf32>
    %cst_121 = arith.constant 0.353553385 : f32
    %227 = vector.broadcast %cst_121 : f32 to vector<8x8xf32>
    %228 = arith.mulf %226, %227 : vector<8x8xf32>
    %cst_122 = arith.constant dense<0xFF800000> : vector<8xf32>
    %229 = vector.multi_reduction <maximumf>, %228, %cst_122 [1] : vector<8x8xf32> to vector<8xf32>
    %230 = vector.shape_cast %229 : vector<8xf32> to vector<8x1xf32>
    %231 = vector.broadcast %230 : vector<8x1xf32> to vector<8x8xf32>
    %232 = arith.subf %228, %231 : vector<8x8xf32>
    %233 = math.exp %232 : vector<8x8xf32>
    %cst_123 = arith.constant dense<0.000000e+00> : vector<8xf32>
    %234 = vector.multi_reduction <add>, %233, %cst_123 [1] : vector<8x8xf32> to vector<8xf32>
    %235 = vector.shape_cast %234 : vector<8xf32> to vector<8x1xf32>
    %236 = tpu.reciprocal %235 {approx = true} : vector<8x1xf32> -> vector<8x1xf32>
    %237 = vector.broadcast %236 : vector<8x1xf32> to vector<8x8xf32>
    %238 = arith.mulf %233, %237 : vector<8x8xf32>
    %239 = vector.broadcast %77 : vector<1x32xf32> to vector<8x32xf32>
    %240 = arith.mulf %176, %239 : vector<8x32xf32>
    %241 = arith.truncf %240 : vector<8x32xf32> to vector<8x32xbf16>
    %242 = arith.truncf %238 : vector<8x8xf32> to vector<8x8xbf16>
    %cst_124 = arith.constant dense<0.000000e+00> : vector<8x32xf32>
    %243 = tpu.matmul %242, %241, %cst_124 {dimension_numbers = #tpu.dot_dimension_numbers<[1], [0], [0], [1], [0, 0, 1, 1], [], []>} : vector<8x8xbf16>, vector<8x32xbf16>, vector<8x32xf32> -> vector<8x32xf32>
    %244 = arith.addf %222, %243 : vector<8x32xf32>
    %245 = vector.broadcast %84 : vector<1x32xf32> to vector<8x32xf32>
    %246 = arith.mulf %160, %245 : vector<8x32xf32>
    %247 = arith.truncf %246 : vector<8x32xf32> to vector<8x32xbf16>
    %cst_125 = arith.constant dense<0.000000e+00> : vector<8x8xf32>
    %248 = tpu.matmul %247, %177, %cst_125 {dimension_numbers = #tpu.dot_dimension_numbers<[1], [1], [0], [0], [0, 0, 1, 0], [], []>} : vector<8x32xbf16>, vector<8x32xbf16>, vector<8x8xf32> -> vector<8x8xf32>
    %cst_126 = arith.constant 0.353553385 : f32
    %249 = vector.broadcast %cst_126 : f32 to vector<8x8xf32>
    %250 = arith.mulf %248, %249 : vector<8x8xf32>
    %cst_127 = arith.constant dense<0xFF800000> : vector<8xf32>
    %251 = vector.multi_reduction <maximumf>, %250, %cst_127 [1] : vector<8x8xf32> to vector<8xf32>
    %252 = vector.shape_cast %251 : vector<8xf32> to vector<8x1xf32>
    %253 = vector.broadcast %252 : vector<8x1xf32> to vector<8x8xf32>
    %254 = arith.subf %250, %253 : vector<8x8xf32>
    %255 = math.exp %254 : vector<8x8xf32>
    %cst_128 = arith.constant dense<0.000000e+00> : vector<8xf32>
    %256 = vector.multi_reduction <add>, %255, %cst_128 [1] : vector<8x8xf32> to vector<8xf32>
    %257 = vector.shape_cast %256 : vector<8xf32> to vector<8x1xf32>
    %258 = tpu.reciprocal %257 {approx = true} : vector<8x1xf32> -> vector<8x1xf32>
    %259 = vector.broadcast %258 : vector<8x1xf32> to vector<8x8xf32>
    %260 = arith.mulf %255, %259 : vector<8x8xf32>
    %261 = vector.broadcast %84 : vector<1x32xf32> to vector<8x32xf32>
    %262 = arith.mulf %176, %261 : vector<8x32xf32>
    %263 = arith.truncf %262 : vector<8x32xf32> to vector<8x32xbf16>
    %264 = arith.truncf %260 : vector<8x8xf32> to vector<8x8xbf16>
    %cst_129 = arith.constant dense<0.000000e+00> : vector<8x32xf32>
    %265 = tpu.matmul %264, %263, %cst_129 {dimension_numbers = #tpu.dot_dimension_numbers<[1], [0], [0], [1], [0, 0, 1, 1], [], []>} : vector<8x8xbf16>, vector<8x32xbf16>, vector<8x32xf32> -> vector<8x32xf32>
    %266 = arith.addf %244, %265 : vector<8x32xf32>
    %c0_130 = arith.constant 0 : index
    %c0_131 = arith.constant 0 : index
    %c0_132 = arith.constant 0 : index
    %267 = vector.load %arg20[%c0_130, %c0_131, %c0_132] : memref<2x32x32xbf16, #tpu.memory_space<vmem>>, vector<1x32x32xbf16>
    %268 = vector.shape_cast %267 : vector<1x32x32xbf16> to vector<32x32xbf16>
    %269 = arith.truncf %266 : vector<8x32xf32> to vector<8x32xbf16>
    %cst_133 = arith.constant dense<0.000000e+00> : vector<8x32xf32>
    %270 = tpu.matmul %269, %268, %cst_133 {dimension_numbers = #tpu.dot_dimension_numbers<[1], [0], [0], [1], [0, 0, 1, 1], [], []>} : vector<8x32xbf16>, vector<32x32xbf16>, vector<8x32xf32> -> vector<8x32xf32>
    %c0_134 = arith.constant 0 : index
    %c0_135 = arith.constant 0 : index
    %c0_136 = arith.constant 0 : index
    %271 = vector.load %arg21[%c0_134, %c0_135, %c0_136] : memref<2x1x32xf32, #tpu.memory_space<vmem>>, vector<1x1x32xf32>
    %272 = vector.shape_cast %271 : vector<1x1x32xf32> to vector<1x32xf32>
    %273 = vector.broadcast %272 : vector<1x32xf32> to vector<8x32xf32>
    %274 = arith.addf %270, %273 : vector<8x32xf32>
    %275 = arith.mulf %108, %274 : vector<8x32xf32>
    %276 = arith.addf %30, %275 : vector<8x32xf32>
    %cst_137 = arith.constant dense<0.000000e+00> : vector<8xf32>
    %277 = vector.multi_reduction <add>, %276, %cst_137 [1] : vector<8x32xf32> to vector<8xf32>
    %278 = vector.shape_cast %277 : vector<8xf32> to vector<8x1xf32>
    %cst_138 = arith.constant 3.200000e+01 : f32
    %279 = vector.broadcast %cst_138 : f32 to vector<8x1xf32>
    %280 = arith.divf %278, %279 : vector<8x1xf32>
    %281 = vector.broadcast %280 : vector<8x1xf32> to vector<8x32xf32>
    %282 = arith.subf %276, %281 : vector<8x32xf32>
    %283 = arith.mulf %282, %282 : vector<8x32xf32>
    %cst_139 = arith.constant dense<0.000000e+00> : vector<8xf32>
    %284 = vector.multi_reduction <add>, %283, %cst_139 [1] : vector<8x32xf32> to vector<8xf32>
    %285 = vector.shape_cast %284 : vector<8xf32> to vector<8x1xf32>
    %cst_140 = arith.constant 3.200000e+01 : f32
    %286 = vector.broadcast %cst_140 : f32 to vector<8x1xf32>
    %287 = arith.divf %285, %286 : vector<8x1xf32>
    %cst_141 = arith.constant 9.99999997E-7 : f32
    %288 = vector.broadcast %cst_141 : f32 to vector<8x1xf32>
    %289 = arith.addf %287, %288 : vector<8x1xf32>
    %290 = math.rsqrt %289 : vector<8x1xf32>
    %291 = vector.broadcast %290 : vector<8x1xf32> to vector<8x32xf32>
    %292 = arith.mulf %282, %291 : vector<8x32xf32>
    %cst_142 = arith.constant 1.000000e+00 : f32
    %293 = vector.broadcast %cst_142 : f32 to vector<8x32xf32>
    %294 = arith.addf %293, %124 : vector<8x32xf32>
    %295 = arith.mulf %292, %294 : vector<8x32xf32>
    %296 = arith.addf %295, %116 : vector<8x32xf32>
    %c0_143 = arith.constant 0 : index
    %c0_144 = arith.constant 0 : index
    %c0_145 = arith.constant 0 : index
    %297 = vector.load %arg22[%c0_143, %c0_144, %c0_145] : memref<2x32x128xbf16, #tpu.memory_space<vmem>>, vector<1x32x128xbf16>
    %298 = vector.shape_cast %297 : vector<1x32x128xbf16> to vector<32x128xbf16>
    %299 = arith.truncf %296 : vector<8x32xf32> to vector<8x32xbf16>
    %cst_146 = arith.constant dense<0.000000e+00> : vector<8x128xf32>
    %300 = tpu.matmul %299, %298, %cst_146 {dimension_numbers = #tpu.dot_dimension_numbers<[1], [0], [0], [1], [0, 0, 1, 1], [], []>} : vector<8x32xbf16>, vector<32x128xbf16>, vector<8x128xf32> -> vector<8x128xf32>
    %c0_147 = arith.constant 0 : index
    %c0_148 = arith.constant 0 : index
    %c0_149 = arith.constant 0 : index
    %301 = vector.load %arg23[%c0_147, %c0_148, %c0_149] : memref<2x1x128xf32, #tpu.memory_space<vmem>>, vector<1x1x128xf32>
    %302 = vector.shape_cast %301 : vector<1x1x128xf32> to vector<1x128xf32>
    %303 = vector.broadcast %302 : vector<1x128xf32> to vector<8x128xf32>
    %304 = arith.addf %300, %303 : vector<8x128xf32>
    %cst_150 = arith.constant 5.000000e-01 : f32
    %305 = vector.broadcast %cst_150 : f32 to vector<8x128xf32>
    %306 = arith.mulf %305, %304 : vector<8x128xf32>
    %cst_151 = arith.constant 4.471500e-02 : f32
    %307 = vector.broadcast %cst_151 : f32 to vector<8x128xf32>
    %308 = arith.mulf %307, %304 : vector<8x128xf32>
    %309 = arith.mulf %308, %304 : vector<8x128xf32>
    %310 = arith.mulf %309, %304 : vector<8x128xf32>
    %311 = arith.addf %304, %310 : vector<8x128xf32>
    %cst_152 = arith.constant 0.797884583 : f32
    %312 = vector.broadcast %cst_152 : f32 to vector<8x128xf32>
    %313 = arith.mulf %312, %311 : vector<8x128xf32>
    %314 = math.tanh %313 : vector<8x128xf32>
    %cst_153 = arith.constant 1.000000e+00 : f32
    %315 = vector.broadcast %cst_153 : f32 to vector<8x128xf32>
    %316 = arith.addf %315, %314 : vector<8x128xf32>
    %317 = arith.mulf %306, %316 : vector<8x128xf32>
    %c0_154 = arith.constant 0 : index
    %c0_155 = arith.constant 0 : index
    %c0_156 = arith.constant 0 : index
    %318 = vector.load %arg24[%c0_154, %c0_155, %c0_156] : memref<2x128x32xbf16, #tpu.memory_space<vmem>>, vector<1x128x32xbf16>
    %319 = vector.shape_cast %318 : vector<1x128x32xbf16> to vector<128x32xbf16>
    %320 = arith.truncf %317 : vector<8x128xf32> to vector<8x128xbf16>
    %cst_157 = arith.constant dense<0.000000e+00> : vector<8x32xf32>
    %321 = tpu.matmul %320, %319, %cst_157 {dimension_numbers = #tpu.dot_dimension_numbers<[1], [0], [0], [1], [0, 0, 1, 1], [], []>} : vector<8x128xbf16>, vector<128x32xbf16>, vector<8x32xf32> -> vector<8x32xf32>
    %c0_158 = arith.constant 0 : index
    %c0_159 = arith.constant 0 : index
    %c0_160 = arith.constant 0 : index
    %322 = vector.load %arg25[%c0_158, %c0_159, %c0_160] : memref<2x1x32xf32, #tpu.memory_space<vmem>>, vector<1x1x32xf32>
    %323 = vector.shape_cast %322 : vector<1x1x32xf32> to vector<1x32xf32>
    %324 = vector.broadcast %323 : vector<1x32xf32> to vector<8x32xf32>
    %325 = arith.addf %321, %324 : vector<8x32xf32>
    %326 = arith.mulf %132, %325 : vector<8x32xf32>
    %327 = arith.addf %276, %326 : vector<8x32xf32>
    %c1_161 = arith.constant 1 : index
    %c0_162 = arith.constant 0 : index
    %c0_163 = arith.constant 0 : index
    %c0_164 = arith.constant 0 : index
    %328 = vector.load %arg12[%c1_161, %c0_162, %c0_163, %c0_164] : memref<2x6x32x32xbf16, #tpu.memory_space<vmem>>, vector<1x1x32x32xbf16>
    %329 = vector.shape_cast %328 : vector<1x1x32x32xbf16> to vector<32x32xbf16>
    %330 = arith.truncf %55 : vector<8x32xf32> to vector<8x32xbf16>
    %cst_165 = arith.constant dense<0.000000e+00> : vector<8x32xf32>
    %331 = tpu.matmul %330, %329, %cst_165 {dimension_numbers = #tpu.dot_dimension_numbers<[1], [0], [0], [1], [0, 0, 1, 1], [], []>} : vector<8x32xbf16>, vector<32x32xbf16>, vector<8x32xf32> -> vector<8x32xf32>
    %c1_166 = arith.constant 1 : index
    %c0_167 = arith.constant 0 : index
    %c0_168 = arith.constant 0 : index
    %c0_169 = arith.constant 0 : index
    %332 = vector.load %arg13[%c1_166, %c0_167, %c0_168, %c0_169] : memref<2x6x1x32xf32, #tpu.memory_space<vmem>>, vector<1x1x1x32xf32>
    %333 = vector.shape_cast %332 : vector<1x1x1x32xf32> to vector<1x32xf32>
    %334 = vector.broadcast %333 : vector<1x32xf32> to vector<8x32xf32>
    %335 = arith.addf %331, %334 : vector<8x32xf32>
    %c1_170 = arith.constant 1 : index
    %c1_171 = arith.constant 1 : index
    %c0_172 = arith.constant 0 : index
    %c0_173 = arith.constant 0 : index
    %336 = vector.load %arg12[%c1_170, %c1_171, %c0_172, %c0_173] : memref<2x6x32x32xbf16, #tpu.memory_space<vmem>>, vector<1x1x32x32xbf16>
    %337 = vector.shape_cast %336 : vector<1x1x32x32xbf16> to vector<32x32xbf16>
    %338 = arith.truncf %55 : vector<8x32xf32> to vector<8x32xbf16>
    %cst_174 = arith.constant dense<0.000000e+00> : vector<8x32xf32>
    %339 = tpu.matmul %338, %337, %cst_174 {dimension_numbers = #tpu.dot_dimension_numbers<[1], [0], [0], [1], [0, 0, 1, 1], [], []>} : vector<8x32xbf16>, vector<32x32xbf16>, vector<8x32xf32> -> vector<8x32xf32>
    %c1_175 = arith.constant 1 : index
    %c1_176 = arith.constant 1 : index
    %c0_177 = arith.constant 0 : index
    %c0_178 = arith.constant 0 : index
    %340 = vector.load %arg13[%c1_175, %c1_176, %c0_177, %c0_178] : memref<2x6x1x32xf32, #tpu.memory_space<vmem>>, vector<1x1x1x32xf32>
    %341 = vector.shape_cast %340 : vector<1x1x1x32xf32> to vector<1x32xf32>
    %342 = vector.broadcast %341 : vector<1x32xf32> to vector<8x32xf32>
    %343 = arith.addf %339, %342 : vector<8x32xf32>
    %c1_179 = arith.constant 1 : index
    %c2_180 = arith.constant 2 : index
    %c0_181 = arith.constant 0 : index
    %c0_182 = arith.constant 0 : index
    %344 = vector.load %arg12[%c1_179, %c2_180, %c0_181, %c0_182] : memref<2x6x32x32xbf16, #tpu.memory_space<vmem>>, vector<1x1x32x32xbf16>
    %345 = vector.shape_cast %344 : vector<1x1x32x32xbf16> to vector<32x32xbf16>
    %346 = arith.truncf %55 : vector<8x32xf32> to vector<8x32xbf16>
    %cst_183 = arith.constant dense<0.000000e+00> : vector<8x32xf32>
    %347 = tpu.matmul %346, %345, %cst_183 {dimension_numbers = #tpu.dot_dimension_numbers<[1], [0], [0], [1], [0, 0, 1, 1], [], []>} : vector<8x32xbf16>, vector<32x32xbf16>, vector<8x32xf32> -> vector<8x32xf32>
    %c1_184 = arith.constant 1 : index
    %c2_185 = arith.constant 2 : index
    %c0_186 = arith.constant 0 : index
    %c0_187 = arith.constant 0 : index
    %348 = vector.load %arg13[%c1_184, %c2_185, %c0_186, %c0_187] : memref<2x6x1x32xf32, #tpu.memory_space<vmem>>, vector<1x1x1x32xf32>
    %349 = vector.shape_cast %348 : vector<1x1x1x32xf32> to vector<1x32xf32>
    %350 = vector.broadcast %349 : vector<1x32xf32> to vector<8x32xf32>
    %351 = arith.addf %347, %350 : vector<8x32xf32>
    %c1_188 = arith.constant 1 : index
    %c3_189 = arith.constant 3 : index
    %c0_190 = arith.constant 0 : index
    %c0_191 = arith.constant 0 : index
    %352 = vector.load %arg12[%c1_188, %c3_189, %c0_190, %c0_191] : memref<2x6x32x32xbf16, #tpu.memory_space<vmem>>, vector<1x1x32x32xbf16>
    %353 = vector.shape_cast %352 : vector<1x1x32x32xbf16> to vector<32x32xbf16>
    %354 = arith.truncf %55 : vector<8x32xf32> to vector<8x32xbf16>
    %cst_192 = arith.constant dense<0.000000e+00> : vector<8x32xf32>
    %355 = tpu.matmul %354, %353, %cst_192 {dimension_numbers = #tpu.dot_dimension_numbers<[1], [0], [0], [1], [0, 0, 1, 1], [], []>} : vector<8x32xbf16>, vector<32x32xbf16>, vector<8x32xf32> -> vector<8x32xf32>
    %c1_193 = arith.constant 1 : index
    %c3_194 = arith.constant 3 : index
    %c0_195 = arith.constant 0 : index
    %c0_196 = arith.constant 0 : index
    %356 = vector.load %arg13[%c1_193, %c3_194, %c0_195, %c0_196] : memref<2x6x1x32xf32, #tpu.memory_space<vmem>>, vector<1x1x1x32xf32>
    %357 = vector.shape_cast %356 : vector<1x1x1x32xf32> to vector<1x32xf32>
    %358 = vector.broadcast %357 : vector<1x32xf32> to vector<8x32xf32>
    %359 = arith.addf %355, %358 : vector<8x32xf32>
    %c1_197 = arith.constant 1 : index
    %c4_198 = arith.constant 4 : index
    %c0_199 = arith.constant 0 : index
    %c0_200 = arith.constant 0 : index
    %360 = vector.load %arg12[%c1_197, %c4_198, %c0_199, %c0_200] : memref<2x6x32x32xbf16, #tpu.memory_space<vmem>>, vector<1x1x32x32xbf16>
    %361 = vector.shape_cast %360 : vector<1x1x32x32xbf16> to vector<32x32xbf16>
    %362 = arith.truncf %55 : vector<8x32xf32> to vector<8x32xbf16>
    %cst_201 = arith.constant dense<0.000000e+00> : vector<8x32xf32>
    %363 = tpu.matmul %362, %361, %cst_201 {dimension_numbers = #tpu.dot_dimension_numbers<[1], [0], [0], [1], [0, 0, 1, 1], [], []>} : vector<8x32xbf16>, vector<32x32xbf16>, vector<8x32xf32> -> vector<8x32xf32>
    %c1_202 = arith.constant 1 : index
    %c4_203 = arith.constant 4 : index
    %c0_204 = arith.constant 0 : index
    %c0_205 = arith.constant 0 : index
    %364 = vector.load %arg13[%c1_202, %c4_203, %c0_204, %c0_205] : memref<2x6x1x32xf32, #tpu.memory_space<vmem>>, vector<1x1x1x32xf32>
    %365 = vector.shape_cast %364 : vector<1x1x1x32xf32> to vector<1x32xf32>
    %366 = vector.broadcast %365 : vector<1x32xf32> to vector<8x32xf32>
    %367 = arith.addf %363, %366 : vector<8x32xf32>
    %c1_206 = arith.constant 1 : index
    %c5_207 = arith.constant 5 : index
    %c0_208 = arith.constant 0 : index
    %c0_209 = arith.constant 0 : index
    %368 = vector.load %arg12[%c1_206, %c5_207, %c0_208, %c0_209] : memref<2x6x32x32xbf16, #tpu.memory_space<vmem>>, vector<1x1x32x32xbf16>
    %369 = vector.shape_cast %368 : vector<1x1x32x32xbf16> to vector<32x32xbf16>
    %370 = arith.truncf %55 : vector<8x32xf32> to vector<8x32xbf16>
    %cst_210 = arith.constant dense<0.000000e+00> : vector<8x32xf32>
    %371 = tpu.matmul %370, %369, %cst_210 {dimension_numbers = #tpu.dot_dimension_numbers<[1], [0], [0], [1], [0, 0, 1, 1], [], []>} : vector<8x32xbf16>, vector<32x32xbf16>, vector<8x32xf32> -> vector<8x32xf32>
    %c1_211 = arith.constant 1 : index
    %c5_212 = arith.constant 5 : index
    %c0_213 = arith.constant 0 : index
    %c0_214 = arith.constant 0 : index
    %372 = vector.load %arg13[%c1_211, %c5_212, %c0_213, %c0_214] : memref<2x6x1x32xf32, #tpu.memory_space<vmem>>, vector<1x1x1x32xf32>
    %373 = vector.shape_cast %372 : vector<1x1x1x32xf32> to vector<1x32xf32>
    %374 = vector.broadcast %373 : vector<1x32xf32> to vector<8x32xf32>
    %375 = arith.addf %371, %374 : vector<8x32xf32>
    %cst_215 = arith.constant dense<0.000000e+00> : vector<8xf32>
    %376 = vector.multi_reduction <add>, %327, %cst_215 [1] : vector<8x32xf32> to vector<8xf32>
    %377 = vector.shape_cast %376 : vector<8xf32> to vector<8x1xf32>
    %cst_216 = arith.constant 3.200000e+01 : f32
    %378 = vector.broadcast %cst_216 : f32 to vector<8x1xf32>
    %379 = arith.divf %377, %378 : vector<8x1xf32>
    %380 = vector.broadcast %379 : vector<8x1xf32> to vector<8x32xf32>
    %381 = arith.subf %327, %380 : vector<8x32xf32>
    %382 = arith.mulf %381, %381 : vector<8x32xf32>
    %cst_217 = arith.constant dense<0.000000e+00> : vector<8xf32>
    %383 = vector.multi_reduction <add>, %382, %cst_217 [1] : vector<8x32xf32> to vector<8xf32>
    %384 = vector.shape_cast %383 : vector<8xf32> to vector<8x1xf32>
    %cst_218 = arith.constant 3.200000e+01 : f32
    %385 = vector.broadcast %cst_218 : f32 to vector<8x1xf32>
    %386 = arith.divf %384, %385 : vector<8x1xf32>
    %cst_219 = arith.constant 9.99999997E-7 : f32
    %387 = vector.broadcast %cst_219 : f32 to vector<8x1xf32>
    %388 = arith.addf %386, %387 : vector<8x1xf32>
    %389 = math.rsqrt %388 : vector<8x1xf32>
    %390 = vector.broadcast %389 : vector<8x1xf32> to vector<8x32xf32>
    %391 = arith.mulf %381, %390 : vector<8x32xf32>
    %cst_220 = arith.constant 1.000000e+00 : f32
    %392 = vector.broadcast %cst_220 : f32 to vector<8x32xf32>
    %393 = arith.addf %392, %343 : vector<8x32xf32>
    %394 = arith.mulf %391, %393 : vector<8x32xf32>
    %395 = arith.addf %394, %335 : vector<8x32xf32>
    %c1_221 = arith.constant 1 : index
    %c0_222 = arith.constant 0 : index
    %c0_223 = arith.constant 0 : index
    %396 = vector.load %arg14[%c1_221, %c0_222, %c0_223] : memref<2x32x32xbf16, #tpu.memory_space<vmem>>, vector<1x32x32xbf16>
    %397 = vector.shape_cast %396 : vector<1x32x32xbf16> to vector<32x32xbf16>
    %398 = arith.truncf %395 : vector<8x32xf32> to vector<8x32xbf16>
    %cst_224 = arith.constant dense<0.000000e+00> : vector<8x32xf32>
    %399 = tpu.matmul %398, %397, %cst_224 {dimension_numbers = #tpu.dot_dimension_numbers<[1], [0], [0], [1], [0, 0, 1, 1], [], []>} : vector<8x32xbf16>, vector<32x32xbf16>, vector<8x32xf32> -> vector<8x32xf32>
    %c1_225 = arith.constant 1 : index
    %c0_226 = arith.constant 0 : index
    %c0_227 = arith.constant 0 : index
    %400 = vector.load %arg15[%c1_225, %c0_226, %c0_227] : memref<2x1x32xf32, #tpu.memory_space<vmem>>, vector<1x1x32xf32>
    %401 = vector.shape_cast %400 : vector<1x1x32xf32> to vector<1x32xf32>
    %402 = vector.broadcast %401 : vector<1x32xf32> to vector<8x32xf32>
    %403 = arith.addf %399, %402 : vector<8x32xf32>
    %c1_228 = arith.constant 1 : index
    %c0_229 = arith.constant 0 : index
    %c0_230 = arith.constant 0 : index
    %404 = vector.load %arg16[%c1_228, %c0_229, %c0_230] : memref<2x32x32xbf16, #tpu.memory_space<vmem>>, vector<1x32x32xbf16>
    %405 = vector.shape_cast %404 : vector<1x32x32xbf16> to vector<32x32xbf16>
    %406 = arith.truncf %395 : vector<8x32xf32> to vector<8x32xbf16>
    %cst_231 = arith.constant dense<0.000000e+00> : vector<8x32xf32>
    %407 = tpu.matmul %406, %405, %cst_231 {dimension_numbers = #tpu.dot_dimension_numbers<[1], [0], [0], [1], [0, 0, 1, 1], [], []>} : vector<8x32xbf16>, vector<32x32xbf16>, vector<8x32xf32> -> vector<8x32xf32>
    %c1_232 = arith.constant 1 : index
    %c0_233 = arith.constant 0 : index
    %c0_234 = arith.constant 0 : index
    %408 = vector.load %arg17[%c1_232, %c0_233, %c0_234] : memref<2x1x32xf32, #tpu.memory_space<vmem>>, vector<1x1x32xf32>
    %409 = vector.shape_cast %408 : vector<1x1x32xf32> to vector<1x32xf32>
    %410 = vector.broadcast %409 : vector<1x32xf32> to vector<8x32xf32>
    %411 = arith.addf %407, %410 : vector<8x32xf32>
    %c1_235 = arith.constant 1 : index
    %c0_236 = arith.constant 0 : index
    %c0_237 = arith.constant 0 : index
    %412 = vector.load %arg18[%c1_235, %c0_236, %c0_237] : memref<2x32x32xbf16, #tpu.memory_space<vmem>>, vector<1x32x32xbf16>
    %413 = vector.shape_cast %412 : vector<1x32x32xbf16> to vector<32x32xbf16>
    %414 = arith.truncf %395 : vector<8x32xf32> to vector<8x32xbf16>
    %cst_238 = arith.constant dense<0.000000e+00> : vector<8x32xf32>
    %415 = tpu.matmul %414, %413, %cst_238 {dimension_numbers = #tpu.dot_dimension_numbers<[1], [0], [0], [1], [0, 0, 1, 1], [], []>} : vector<8x32xbf16>, vector<32x32xbf16>, vector<8x32xf32> -> vector<8x32xf32>
    %c1_239 = arith.constant 1 : index
    %c0_240 = arith.constant 0 : index
    %c0_241 = arith.constant 0 : index
    %416 = vector.load %arg19[%c1_239, %c0_240, %c0_241] : memref<2x1x32xf32, #tpu.memory_space<vmem>>, vector<1x1x32xf32>
    %417 = vector.shape_cast %416 : vector<1x1x32xf32> to vector<1x32xf32>
    %418 = vector.broadcast %417 : vector<1x32xf32> to vector<8x32xf32>
    %419 = arith.addf %415, %418 : vector<8x32xf32>
    %420 = arith.truncf %411 : vector<8x32xf32> to vector<8x32xbf16>
    %cst_242 = arith.constant 0.000000e+00 : f32
    %421 = vector.broadcast %cst_242 : f32 to vector<8x32xf32>
    %422 = vector.broadcast %63 : vector<1x32xf32> to vector<8x32xf32>
    %423 = arith.mulf %403, %422 : vector<8x32xf32>
    %424 = arith.truncf %423 : vector<8x32xf32> to vector<8x32xbf16>
    %cst_243 = arith.constant dense<0.000000e+00> : vector<8x8xf32>
    %425 = tpu.matmul %424, %420, %cst_243 {dimension_numbers = #tpu.dot_dimension_numbers<[1], [1], [0], [0], [0, 0, 1, 0], [], []>} : vector<8x32xbf16>, vector<8x32xbf16>, vector<8x8xf32> -> vector<8x8xf32>
    %cst_244 = arith.constant 0.353553385 : f32
    %426 = vector.broadcast %cst_244 : f32 to vector<8x8xf32>
    %427 = arith.mulf %425, %426 : vector<8x8xf32>
    %cst_245 = arith.constant dense<0xFF800000> : vector<8xf32>
    %428 = vector.multi_reduction <maximumf>, %427, %cst_245 [1] : vector<8x8xf32> to vector<8xf32>
    %429 = vector.shape_cast %428 : vector<8xf32> to vector<8x1xf32>
    %430 = vector.broadcast %429 : vector<8x1xf32> to vector<8x8xf32>
    %431 = arith.subf %427, %430 : vector<8x8xf32>
    %432 = math.exp %431 : vector<8x8xf32>
    %cst_246 = arith.constant dense<0.000000e+00> : vector<8xf32>
    %433 = vector.multi_reduction <add>, %432, %cst_246 [1] : vector<8x8xf32> to vector<8xf32>
    %434 = vector.shape_cast %433 : vector<8xf32> to vector<8x1xf32>
    %435 = tpu.reciprocal %434 {approx = true} : vector<8x1xf32> -> vector<8x1xf32>
    %436 = vector.broadcast %435 : vector<8x1xf32> to vector<8x8xf32>
    %437 = arith.mulf %432, %436 : vector<8x8xf32>
    %438 = vector.broadcast %63 : vector<1x32xf32> to vector<8x32xf32>
    %439 = arith.mulf %419, %438 : vector<8x32xf32>
    %440 = arith.truncf %439 : vector<8x32xf32> to vector<8x32xbf16>
    %441 = arith.truncf %437 : vector<8x8xf32> to vector<8x8xbf16>
    %cst_247 = arith.constant dense<0.000000e+00> : vector<8x32xf32>
    %442 = tpu.matmul %441, %440, %cst_247 {dimension_numbers = #tpu.dot_dimension_numbers<[1], [0], [0], [1], [0, 0, 1, 1], [], []>} : vector<8x8xbf16>, vector<8x32xbf16>, vector<8x32xf32> -> vector<8x32xf32>
    %443 = arith.addf %421, %442 : vector<8x32xf32>
    %444 = vector.broadcast %70 : vector<1x32xf32> to vector<8x32xf32>
    %445 = arith.mulf %403, %444 : vector<8x32xf32>
    %446 = arith.truncf %445 : vector<8x32xf32> to vector<8x32xbf16>
    %cst_248 = arith.constant dense<0.000000e+00> : vector<8x8xf32>
    %447 = tpu.matmul %446, %420, %cst_248 {dimension_numbers = #tpu.dot_dimension_numbers<[1], [1], [0], [0], [0, 0, 1, 0], [], []>} : vector<8x32xbf16>, vector<8x32xbf16>, vector<8x8xf32> -> vector<8x8xf32>
    %cst_249 = arith.constant 0.353553385 : f32
    %448 = vector.broadcast %cst_249 : f32 to vector<8x8xf32>
    %449 = arith.mulf %447, %448 : vector<8x8xf32>
    %cst_250 = arith.constant dense<0xFF800000> : vector<8xf32>
    %450 = vector.multi_reduction <maximumf>, %449, %cst_250 [1] : vector<8x8xf32> to vector<8xf32>
    %451 = vector.shape_cast %450 : vector<8xf32> to vector<8x1xf32>
    %452 = vector.broadcast %451 : vector<8x1xf32> to vector<8x8xf32>
    %453 = arith.subf %449, %452 : vector<8x8xf32>
    %454 = math.exp %453 : vector<8x8xf32>
    %cst_251 = arith.constant dense<0.000000e+00> : vector<8xf32>
    %455 = vector.multi_reduction <add>, %454, %cst_251 [1] : vector<8x8xf32> to vector<8xf32>
    %456 = vector.shape_cast %455 : vector<8xf32> to vector<8x1xf32>
    %457 = tpu.reciprocal %456 {approx = true} : vector<8x1xf32> -> vector<8x1xf32>
    %458 = vector.broadcast %457 : vector<8x1xf32> to vector<8x8xf32>
    %459 = arith.mulf %454, %458 : vector<8x8xf32>
    %460 = vector.broadcast %70 : vector<1x32xf32> to vector<8x32xf32>
    %461 = arith.mulf %419, %460 : vector<8x32xf32>
    %462 = arith.truncf %461 : vector<8x32xf32> to vector<8x32xbf16>
    %463 = arith.truncf %459 : vector<8x8xf32> to vector<8x8xbf16>
    %cst_252 = arith.constant dense<0.000000e+00> : vector<8x32xf32>
    %464 = tpu.matmul %463, %462, %cst_252 {dimension_numbers = #tpu.dot_dimension_numbers<[1], [0], [0], [1], [0, 0, 1, 1], [], []>} : vector<8x8xbf16>, vector<8x32xbf16>, vector<8x32xf32> -> vector<8x32xf32>
    %465 = arith.addf %443, %464 : vector<8x32xf32>
    %466 = vector.broadcast %77 : vector<1x32xf32> to vector<8x32xf32>
    %467 = arith.mulf %403, %466 : vector<8x32xf32>
    %468 = arith.truncf %467 : vector<8x32xf32> to vector<8x32xbf16>
    %cst_253 = arith.constant dense<0.000000e+00> : vector<8x8xf32>
    %469 = tpu.matmul %468, %420, %cst_253 {dimension_numbers = #tpu.dot_dimension_numbers<[1], [1], [0], [0], [0, 0, 1, 0], [], []>} : vector<8x32xbf16>, vector<8x32xbf16>, vector<8x8xf32> -> vector<8x8xf32>
    %cst_254 = arith.constant 0.353553385 : f32
    %470 = vector.broadcast %cst_254 : f32 to vector<8x8xf32>
    %471 = arith.mulf %469, %470 : vector<8x8xf32>
    %cst_255 = arith.constant dense<0xFF800000> : vector<8xf32>
    %472 = vector.multi_reduction <maximumf>, %471, %cst_255 [1] : vector<8x8xf32> to vector<8xf32>
    %473 = vector.shape_cast %472 : vector<8xf32> to vector<8x1xf32>
    %474 = vector.broadcast %473 : vector<8x1xf32> to vector<8x8xf32>
    %475 = arith.subf %471, %474 : vector<8x8xf32>
    %476 = math.exp %475 : vector<8x8xf32>
    %cst_256 = arith.constant dense<0.000000e+00> : vector<8xf32>
    %477 = vector.multi_reduction <add>, %476, %cst_256 [1] : vector<8x8xf32> to vector<8xf32>
    %478 = vector.shape_cast %477 : vector<8xf32> to vector<8x1xf32>
    %479 = tpu.reciprocal %478 {approx = true} : vector<8x1xf32> -> vector<8x1xf32>
    %480 = vector.broadcast %479 : vector<8x1xf32> to vector<8x8xf32>
    %481 = arith.mulf %476, %480 : vector<8x8xf32>
    %482 = vector.broadcast %77 : vector<1x32xf32> to vector<8x32xf32>
    %483 = arith.mulf %419, %482 : vector<8x32xf32>
    %484 = arith.truncf %483 : vector<8x32xf32> to vector<8x32xbf16>
    %485 = arith.truncf %481 : vector<8x8xf32> to vector<8x8xbf16>
    %cst_257 = arith.constant dense<0.000000e+00> : vector<8x32xf32>
    %486 = tpu.matmul %485, %484, %cst_257 {dimension_numbers = #tpu.dot_dimension_numbers<[1], [0], [0], [1], [0, 0, 1, 1], [], []>} : vector<8x8xbf16>, vector<8x32xbf16>, vector<8x32xf32> -> vector<8x32xf32>
    %487 = arith.addf %465, %486 : vector<8x32xf32>
    %488 = vector.broadcast %84 : vector<1x32xf32> to vector<8x32xf32>
    %489 = arith.mulf %403, %488 : vector<8x32xf32>
    %490 = arith.truncf %489 : vector<8x32xf32> to vector<8x32xbf16>
    %cst_258 = arith.constant dense<0.000000e+00> : vector<8x8xf32>
    %491 = tpu.matmul %490, %420, %cst_258 {dimension_numbers = #tpu.dot_dimension_numbers<[1], [1], [0], [0], [0, 0, 1, 0], [], []>} : vector<8x32xbf16>, vector<8x32xbf16>, vector<8x8xf32> -> vector<8x8xf32>
    %cst_259 = arith.constant 0.353553385 : f32
    %492 = vector.broadcast %cst_259 : f32 to vector<8x8xf32>
    %493 = arith.mulf %491, %492 : vector<8x8xf32>
    %cst_260 = arith.constant dense<0xFF800000> : vector<8xf32>
    %494 = vector.multi_reduction <maximumf>, %493, %cst_260 [1] : vector<8x8xf32> to vector<8xf32>
    %495 = vector.shape_cast %494 : vector<8xf32> to vector<8x1xf32>
    %496 = vector.broadcast %495 : vector<8x1xf32> to vector<8x8xf32>
    %497 = arith.subf %493, %496 : vector<8x8xf32>
    %498 = math.exp %497 : vector<8x8xf32>
    %cst_261 = arith.constant dense<0.000000e+00> : vector<8xf32>
    %499 = vector.multi_reduction <add>, %498, %cst_261 [1] : vector<8x8xf32> to vector<8xf32>
    %500 = vector.shape_cast %499 : vector<8xf32> to vector<8x1xf32>
    %501 = tpu.reciprocal %500 {approx = true} : vector<8x1xf32> -> vector<8x1xf32>
    %502 = vector.broadcast %501 : vector<8x1xf32> to vector<8x8xf32>
    %503 = arith.mulf %498, %502 : vector<8x8xf32>
    %504 = vector.broadcast %84 : vector<1x32xf32> to vector<8x32xf32>
    %505 = arith.mulf %419, %504 : vector<8x32xf32>
    %506 = arith.truncf %505 : vector<8x32xf32> to vector<8x32xbf16>
    %507 = arith.truncf %503 : vector<8x8xf32> to vector<8x8xbf16>
    %cst_262 = arith.constant dense<0.000000e+00> : vector<8x32xf32>
    %508 = tpu.matmul %507, %506, %cst_262 {dimension_numbers = #tpu.dot_dimension_numbers<[1], [0], [0], [1], [0, 0, 1, 1], [], []>} : vector<8x8xbf16>, vector<8x32xbf16>, vector<8x32xf32> -> vector<8x32xf32>
    %509 = arith.addf %487, %508 : vector<8x32xf32>
    %c1_263 = arith.constant 1 : index
    %c0_264 = arith.constant 0 : index
    %c0_265 = arith.constant 0 : index
    %510 = vector.load %arg20[%c1_263, %c0_264, %c0_265] : memref<2x32x32xbf16, #tpu.memory_space<vmem>>, vector<1x32x32xbf16>
    %511 = vector.shape_cast %510 : vector<1x32x32xbf16> to vector<32x32xbf16>
    %512 = arith.truncf %509 : vector<8x32xf32> to vector<8x32xbf16>
    %cst_266 = arith.constant dense<0.000000e+00> : vector<8x32xf32>
    %513 = tpu.matmul %512, %511, %cst_266 {dimension_numbers = #tpu.dot_dimension_numbers<[1], [0], [0], [1], [0, 0, 1, 1], [], []>} : vector<8x32xbf16>, vector<32x32xbf16>, vector<8x32xf32> -> vector<8x32xf32>
    %c1_267 = arith.constant 1 : index
    %c0_268 = arith.constant 0 : index
    %c0_269 = arith.constant 0 : index
    %514 = vector.load %arg21[%c1_267, %c0_268, %c0_269] : memref<2x1x32xf32, #tpu.memory_space<vmem>>, vector<1x1x32xf32>
    %515 = vector.shape_cast %514 : vector<1x1x32xf32> to vector<1x32xf32>
    %516 = vector.broadcast %515 : vector<1x32xf32> to vector<8x32xf32>
    %517 = arith.addf %513, %516 : vector<8x32xf32>
    %518 = arith.mulf %351, %517 : vector<8x32xf32>
    %519 = arith.addf %327, %518 : vector<8x32xf32>
    %cst_270 = arith.constant dense<0.000000e+00> : vector<8xf32>
    %520 = vector.multi_reduction <add>, %519, %cst_270 [1] : vector<8x32xf32> to vector<8xf32>
    %521 = vector.shape_cast %520 : vector<8xf32> to vector<8x1xf32>
    %cst_271 = arith.constant 3.200000e+01 : f32
    %522 = vector.broadcast %cst_271 : f32 to vector<8x1xf32>
    %523 = arith.divf %521, %522 : vector<8x1xf32>
    %524 = vector.broadcast %523 : vector<8x1xf32> to vector<8x32xf32>
    %525 = arith.subf %519, %524 : vector<8x32xf32>
    %526 = arith.mulf %525, %525 : vector<8x32xf32>
    %cst_272 = arith.constant dense<0.000000e+00> : vector<8xf32>
    %527 = vector.multi_reduction <add>, %526, %cst_272 [1] : vector<8x32xf32> to vector<8xf32>
    %528 = vector.shape_cast %527 : vector<8xf32> to vector<8x1xf32>
    %cst_273 = arith.constant 3.200000e+01 : f32
    %529 = vector.broadcast %cst_273 : f32 to vector<8x1xf32>
    %530 = arith.divf %528, %529 : vector<8x1xf32>
    %cst_274 = arith.constant 9.99999997E-7 : f32
    %531 = vector.broadcast %cst_274 : f32 to vector<8x1xf32>
    %532 = arith.addf %530, %531 : vector<8x1xf32>
    %533 = math.rsqrt %532 : vector<8x1xf32>
    %534 = vector.broadcast %533 : vector<8x1xf32> to vector<8x32xf32>
    %535 = arith.mulf %525, %534 : vector<8x32xf32>
    %cst_275 = arith.constant 1.000000e+00 : f32
    %536 = vector.broadcast %cst_275 : f32 to vector<8x32xf32>
    %537 = arith.addf %536, %367 : vector<8x32xf32>
    %538 = arith.mulf %535, %537 : vector<8x32xf32>
    %539 = arith.addf %538, %359 : vector<8x32xf32>
    %c1_276 = arith.constant 1 : index
    %c0_277 = arith.constant 0 : index
    %c0_278 = arith.constant 0 : index
    %540 = vector.load %arg22[%c1_276, %c0_277, %c0_278] : memref<2x32x128xbf16, #tpu.memory_space<vmem>>, vector<1x32x128xbf16>
    %541 = vector.shape_cast %540 : vector<1x32x128xbf16> to vector<32x128xbf16>
    %542 = arith.truncf %539 : vector<8x32xf32> to vector<8x32xbf16>
    %cst_279 = arith.constant dense<0.000000e+00> : vector<8x128xf32>
    %543 = tpu.matmul %542, %541, %cst_279 {dimension_numbers = #tpu.dot_dimension_numbers<[1], [0], [0], [1], [0, 0, 1, 1], [], []>} : vector<8x32xbf16>, vector<32x128xbf16>, vector<8x128xf32> -> vector<8x128xf32>
    %c1_280 = arith.constant 1 : index
    %c0_281 = arith.constant 0 : index
    %c0_282 = arith.constant 0 : index
    %544 = vector.load %arg23[%c1_280, %c0_281, %c0_282] : memref<2x1x128xf32, #tpu.memory_space<vmem>>, vector<1x1x128xf32>
    %545 = vector.shape_cast %544 : vector<1x1x128xf32> to vector<1x128xf32>
    %546 = vector.broadcast %545 : vector<1x128xf32> to vector<8x128xf32>
    %547 = arith.addf %543, %546 : vector<8x128xf32>
    %cst_283 = arith.constant 5.000000e-01 : f32
    %548 = vector.broadcast %cst_283 : f32 to vector<8x128xf32>
    %549 = arith.mulf %548, %547 : vector<8x128xf32>
    %cst_284 = arith.constant 4.471500e-02 : f32
    %550 = vector.broadcast %cst_284 : f32 to vector<8x128xf32>
    %551 = arith.mulf %550, %547 : vector<8x128xf32>
    %552 = arith.mulf %551, %547 : vector<8x128xf32>
    %553 = arith.mulf %552, %547 : vector<8x128xf32>
    %554 = arith.addf %547, %553 : vector<8x128xf32>
    %cst_285 = arith.constant 0.797884583 : f32
    %555 = vector.broadcast %cst_285 : f32 to vector<8x128xf32>
    %556 = arith.mulf %555, %554 : vector<8x128xf32>
    %557 = math.tanh %556 : vector<8x128xf32>
    %cst_286 = arith.constant 1.000000e+00 : f32
    %558 = vector.broadcast %cst_286 : f32 to vector<8x128xf32>
    %559 = arith.addf %558, %557 : vector<8x128xf32>
    %560 = arith.mulf %549, %559 : vector<8x128xf32>
    %c1_287 = arith.constant 1 : index
    %c0_288 = arith.constant 0 : index
    %c0_289 = arith.constant 0 : index
    %561 = vector.load %arg24[%c1_287, %c0_288, %c0_289] : memref<2x128x32xbf16, #tpu.memory_space<vmem>>, vector<1x128x32xbf16>
    %562 = vector.shape_cast %561 : vector<1x128x32xbf16> to vector<128x32xbf16>
    %563 = arith.truncf %560 : vector<8x128xf32> to vector<8x128xbf16>
    %cst_290 = arith.constant dense<0.000000e+00> : vector<8x32xf32>
    %564 = tpu.matmul %563, %562, %cst_290 {dimension_numbers = #tpu.dot_dimension_numbers<[1], [0], [0], [1], [0, 0, 1, 1], [], []>} : vector<8x128xbf16>, vector<128x32xbf16>, vector<8x32xf32> -> vector<8x32xf32>
    %c1_291 = arith.constant 1 : index
    %c0_292 = arith.constant 0 : index
    %c0_293 = arith.constant 0 : index
    %565 = vector.load %arg25[%c1_291, %c0_292, %c0_293] : memref<2x1x32xf32, #tpu.memory_space<vmem>>, vector<1x1x32xf32>
    %566 = vector.shape_cast %565 : vector<1x1x32xf32> to vector<1x32xf32>
    %567 = vector.broadcast %566 : vector<1x32xf32> to vector<8x32xf32>
    %568 = arith.addf %564, %567 : vector<8x32xf32>
    %569 = arith.mulf %375, %568 : vector<8x32xf32>
    %570 = arith.addf %519, %569 : vector<8x32xf32>
    %c0_294 = arith.constant 0 : index
    %c0_295 = arith.constant 0 : index
    %571 = vector.load %arg26[%c0_294, %c0_295] : memref<8x32xf32, #tpu.memory_space<vmem>>, vector<8x32xf32>
    tpu.vector_store %arg26[%c0_294, %c0_295], %570 {strides = array<i32>} : memref<8x32xf32, #tpu.memory_space<vmem>>, vector<8x32xf32>,
    return
  }
  func.func @transform_0(%arg0: i32) -> (i32, i32) {
    %c0_i32 = arith.constant 0 : i32
    %c0_i32_0 = arith.constant 0 : i32
    return %arg0, %c0_i32 : i32, i32
  }
  func.func @transform_1(%arg0: i32) -> (i32, i32) {
    %c0_i32 = arith.constant 0 : i32
    %c0_i32_0 = arith.constant 0 : i32
    return %arg0, %c0_i32 : i32, i32
  }
  func.func @transform_2(%arg0: i32) -> (i32, i32) {
    %c0_i32 = arith.constant 0 : i32
    %c0_i32_0 = arith.constant 0 : i32
    %c0_i32_1 = arith.constant 0 : i32
    return %c0_i32, %c0_i32_0 : i32, i32
  }
  func.func @transform_3(%arg0: i32) -> (i32, i32) {
    %c0_i32 = arith.constant 0 : i32
    %c0_i32_0 = arith.constant 0 : i32
    %c0_i32_1 = arith.constant 0 : i32
    return %c0_i32, %c0_i32_0 : i32, i32
  }
  func.func @transform_4(%arg0: i32) -> (i32, i32) {
    %c0_i32 = arith.constant 0 : i32
    %c0_i32_0 = arith.constant 0 : i32
    %c0_i32_1 = arith.constant 0 : i32
    return %c0_i32, %c0_i32_0 : i32, i32
  }
  func.func @transform_5(%arg0: i32) -> (i32, i32) {
    %c0_i32 = arith.constant 0 : i32
    %c0_i32_0 = arith.constant 0 : i32
    %c0_i32_1 = arith.constant 0 : i32
    return %c0_i32, %c0_i32_0 : i32, i32
  }
  func.func @transform_6(%arg0: i32) -> (i32, i32) {
    %c0_i32 = arith.constant 0 : i32
    %c0_i32_0 = arith.constant 0 : i32
    %c0_i32_1 = arith.constant 0 : i32
    return %c0_i32, %c0_i32_0 : i32, i32
  }
  func.func @transform_7(%arg0: i32) -> (i32, i32) {
    %c0_i32 = arith.constant 0 : i32
    %c0_i32_0 = arith.constant 0 : i32
    %c0_i32_1 = arith.constant 0 : i32
    return %c0_i32, %c0_i32_0 : i32, i32
  }
  func.func @transform_8(%arg0: i32) -> (i32, i32) {
    %c0_i32 = arith.constant 0 : i32
    %c0_i32_0 = arith.constant 0 : i32
    %c0_i32_1 = arith.constant 0 : i32
    return %c0_i32, %c0_i32_0 : i32, i32
  }
  func.func @transform_9(%arg0: i32) -> (i32, i32) {
    %c0_i32 = arith.constant 0 : i32
    %c0_i32_0 = arith.constant 0 : i32
    %c0_i32_1 = arith.constant 0 : i32
    return %c0_i32, %c0_i32_0 : i32, i32
  }
  func.func @transform_10(%arg0: i32) -> (i32, i32) {
    %c0_i32 = arith.constant 0 : i32
    %c0_i32_0 = arith.constant 0 : i32
    %c0_i32_1 = arith.constant 0 : i32
    return %c0_i32, %c0_i32_0 : i32, i32
  }
  func.func @transform_11(%arg0: i32) -> (i32, i32, i32, i32) {
    %c0_i32 = arith.constant 0 : i32
    %c0_i32_0 = arith.constant 0 : i32
    %c0_i32_1 = arith.constant 0 : i32
    %c0_i32_2 = arith.constant 0 : i32
    %c0_i32_3 = arith.constant 0 : i32
    return %c0_i32, %c0_i32_0, %c0_i32_1, %c0_i32_2 : i32, i32, i32, i32
  }
  func.func @transform_12(%arg0: i32) -> (i32, i32, i32, i32) {
    %c0_i32 = arith.constant 0 : i32
    %c0_i32_0 = arith.constant 0 : i32
    %c0_i32_1 = arith.constant 0 : i32
    %c0_i32_2 = arith.constant 0 : i32
    %c0_i32_3 = arith.constant 0 : i32
    return %c0_i32, %c0_i32_0, %c0_i32_1, %c0_i32_2 : i32, i32, i32, i32
  }
  func.func @transform_13(%arg0: i32) -> (i32, i32, i32) {
    %c0_i32 = arith.constant 0 : i32
    %c0_i32_0 = arith.constant 0 : i32
    %c0_i32_1 = arith.constant 0 : i32
    %c0_i32_2 = arith.constant 0 : i32
    return %c0_i32, %c0_i32_0, %c0_i32_1 : i32, i32, i32
  }
  func.func @transform_14(%arg0: i32) -> (i32, i32, i32) {
    %c0_i32 = arith.constant 0 : i32
    %c0_i32_0 = arith.constant 0 : i32
    %c0_i32_1 = arith.constant 0 : i32
    %c0_i32_2 = arith.constant 0 : i32
    return %c0_i32, %c0_i32_0, %c0_i32_1 : i32, i32, i32
  }
  func.func @transform_15(%arg0: i32) -> (i32, i32, i32) {
    %c0_i32 = arith.constant 0 : i32
    %c0_i32_0 = arith.constant 0 : i32
    %c0_i32_1 = arith.constant 0 : i32
    %c0_i32_2 = arith.constant 0 : i32
    return %c0_i32, %c0_i32_0, %c0_i32_1 : i32, i32, i32
  }
  func.func @transform_16(%arg0: i32) -> (i32, i32, i32) {
    %c0_i32 = arith.constant 0 : i32
    %c0_i32_0 = arith.constant 0 : i32
    %c0_i32_1 = arith.constant 0 : i32
    %c0_i32_2 = arith.constant 0 : i32
    return %c0_i32, %c0_i32_0, %c0_i32_1 : i32, i32, i32
  }
  func.func @transform_17(%arg0: i32) -> (i32, i32, i32) {
    %c0_i32 = arith.constant 0 : i32
    %c0_i32_0 = arith.constant 0 : i32
    %c0_i32_1 = arith.constant 0 : i32
    %c0_i32_2 = arith.constant 0 : i32
    return %c0_i32, %c0_i32_0, %c0_i32_1 : i32, i32, i32
  }
  func.func @transform_18(%arg0: i32) -> (i32, i32, i32) {
    %c0_i32 = arith.constant 0 : i32
    %c0_i32_0 = arith.constant 0 : i32
    %c0_i32_1 = arith.constant 0 : i32
    %c0_i32_2 = arith.constant 0 : i32
    return %c0_i32, %c0_i32_0, %c0_i32_1 : i32, i32, i32
  }
  func.func @transform_19(%arg0: i32) -> (i32, i32, i32) {
    %c0_i32 = arith.constant 0 : i32
    %c0_i32_0 = arith.constant 0 : i32
    %c0_i32_1 = arith.constant 0 : i32
    %c0_i32_2 = arith.constant 0 : i32
    return %c0_i32, %c0_i32_0, %c0_i32_1 : i32, i32, i32
  }
  func.func @transform_20(%arg0: i32) -> (i32, i32, i32) {
    %c0_i32 = arith.constant 0 : i32
    %c0_i32_0 = arith.constant 0 : i32
    %c0_i32_1 = arith.constant 0 : i32
    %c0_i32_2 = arith.constant 0 : i32
    return %c0_i32, %c0_i32_0, %c0_i32_1 : i32, i32, i32
  }
  func.func @transform_21(%arg0: i32) -> (i32, i32, i32) {
    %c0_i32 = arith.constant 0 : i32
    %c0_i32_0 = arith.constant 0 : i32
    %c0_i32_1 = arith.constant 0 : i32
    %c0_i32_2 = arith.constant 0 : i32
    return %c0_i32, %c0_i32_0, %c0_i32_1 : i32, i32, i32
  }
  func.func @transform_22(%arg0: i32) -> (i32, i32, i32) {
    %c0_i32 = arith.constant 0 : i32
    %c0_i32_0 = arith.constant 0 : i32
    %c0_i32_1 = arith.constant 0 : i32
    %c0_i32_2 = arith.constant 0 : i32
    return %c0_i32, %c0_i32_0, %c0_i32_1 : i32, i32, i32
  }
  func.func @transform_23(%arg0: i32) -> (i32, i32, i32) {
    %c0_i32 = arith.constant 0 : i32
    %c0_i32_0 = arith.constant 0 : i32
    %c0_i32_1 = arith.constant 0 : i32
    %c0_i32_2 = arith.constant 0 : i32
    return %c0_i32, %c0_i32_0, %c0_i32_1 : i32, i32, i32
  }
  func.func @transform_24(%arg0: i32) -> (i32, i32, i32) {
    %c0_i32 = arith.constant 0 : i32
    %c0_i32_0 = arith.constant 0 : i32
    %c0_i32_1 = arith.constant 0 : i32
    %c0_i32_2 = arith.constant 0 : i32
    return %c0_i32, %c0_i32_0, %c0_i32_1 : i32, i32, i32
  }
  func.func @transform_25(%arg0: i32) -> (i32, i32) {
    %c0_i32 = arith.constant 0 : i32
    %c0_i32_0 = arith.constant 0 : i32
    return %arg0, %c0_i32 : i32, i32
  }
}

</mosaic_0001>

<llo_original>
// kernel: dit_encoder_forward.1
$region0: #{dit_encoder_forward.1}
  #allocation0 [shape = 'u32[]', space=smem, size = 0x4, offset = 0x4, fixed_abs, tag = 'smem constant byte address 0x4 - core index']
  #allocation1 [shape = 'u32[72,128]{1,0:T(1,128)}', space=vmem, size = 0x9000, scoped, tag = 'internal scratch']
  %s0 = inlined_call_operand.vmem [shape: f32[16,256], index: 0, kind: input, shape index: {}]
  %s1 = inlined_call_operand.vmem [shape: f32[16,256], index: 1, kind: input, shape index: {}]
  %s2 = inlined_call_operand.vmem [shape: f32[8,32], index: 2, kind: input, shape index: {}]
  %s3 = inlined_call_operand.vmem [shape: bf16[256,32], index: 3, kind: input, shape index: {}]
  %s4 = inlined_call_operand.vmem [shape: f32[1,32], index: 4, kind: input, shape index: {}]
  %s5 = inlined_call_operand.vmem [shape: f32[1,32], index: 5, kind: input, shape index: {}]
  %s6 = inlined_call_operand.vmem [shape: f32[1,32], index: 6, kind: input, shape index: {}]
  %s7 = inlined_call_operand.vmem [shape: bf16[256,32], index: 7, kind: input, shape index: {}]
  %s8 = inlined_call_operand.vmem [shape: f32[1,32], index: 8, kind: input, shape index: {}]
  %s9 = inlined_call_operand.vmem [shape: bf16[32,32], index: 9, kind: input, shape index: {}]
  %s10 = inlined_call_operand.vmem [shape: f32[1,32], index: 10, kind: input, shape index: {}]
  %s11 = inlined_call_operand.vmem [shape: bf16[2,6,32,32], index: 11, kind: input, shape index: {}]
  %s12 = inlined_call_operand.vmem [shape: f32[2,6,1,32], index: 12, kind: input, shape index: {}]
  %s13 = inlined_call_operand.vmem [shape: bf16[2,32,32], index: 13, kind: input, shape index: {}]
  %s14 = inlined_call_operand.vmem [shape: f32[2,1,32], index: 14, kind: input, shape index: {}]
  %s15 = inlined_call_operand.vmem [shape: bf16[2,32,32], index: 15, kind: input, shape index: {}]
  %s16 = inlined_call_operand.vmem [shape: f32[2,1,32], index: 16, kind: input, shape index: {}]
  %s17 = inlined_call_operand.vmem [shape: bf16[2,32,32], index: 17, kind: input, shape index: {}]
  %s18 = inlined_call_operand.vmem [shape: f32[2,1,32], index: 18, kind: input, shape index: {}]
  %s19 = inlined_call_operand.vmem [shape: bf16[2,32,32], index: 19, kind: input, shape index: {}]
  %s20 = inlined_call_operand.vmem [shape: f32[2,1,32], index: 20, kind: input, shape index: {}]
  %s21 = inlined_call_operand.vmem [shape: bf16[2,32,128], index: 21, kind: input, shape index: {}]
  %s22 = inlined_call_operand.vmem [shape: f32[2,1,128], index: 22, kind: input, shape index: {}]
  %s23 = inlined_call_operand.vmem [shape: bf16[2,128,32], index: 23, kind: input, shape index: {}]
  %s24 = inlined_call_operand.vmem [shape: f32[2,1,32], index: 24, kind: input, shape index: {}]
  %s25 = inlined_call_operand.hbm [shape: f32[16,32], index: 25, kind: output, shape index: {}]
  %s26 = sld [smem:[#allocation0]]
  $region133: #{dit_encoder_forward.1} parent=0
    _
  %s28 = ssub.s32 1, %s26
  %s29 = scalar_select 0, %s28, %s26
  $region1: #{dit_encoder_forward.1} parent=0
    #allocation2 [shape = 'u8[8192]{0}', space=vmem, size = 0x2000, scoped, tag = 'output window, operand 0']
    #allocation3 [shape = 's32[2]{0}', space=sflag, size = 0x8, scoped, tag = 'scoped memory for dit_encoder_forward.1']
    %30 = vsyncpa [#allocation3], 0
    %s31 = scalar_lea.sflag [#allocation3], 1
    %32 = vsyncpa %s31, 0
    loop: start=0, step=1, limit=4
    $region2: #{dit_encoder_forward.1} parent=1 // loop_pre_header
      _
    $region3: #{dit_encoder_forward.1} parent=1 // loop_header
      %s34 = sphi 0, %s38
      %p35 = scmp.ge.s32.totalorder %s34, 4
      %s44 = sphi 0, %s46
      %s47 = sphi 0, %s44
      %s48 = sphi 0, %s47
      %s64 = sphi 0, %s48
      %s70 = sphi 0, %s72
      %s73 = sphi 0, %s70
      %s74 = sphi 0, %s73
      %s90 = sphi 0, %s74
      %s94 = sphi 0, %s94
      %s96 = sphi 0, %s94
      %s97 = sphi 0, %s96
      %s111 = sphi 0, %s97
      %s115 = sphi 0, %s115
      %s117 = sphi 0, %s115
      %s118 = sphi 0, %s117
      %s132 = sphi 0, %s118
      %s136 = sphi 0, %s136
      %s138 = sphi 0, %s136
      %s139 = sphi 0, %s138
      %s153 = sphi 0, %s139
      %s157 = sphi 0, %s157
      %s159 = sphi 0, %s157
      %s160 = sphi 0, %s159
      %s174 = sphi 0, %s160
      %s178 = sphi 0, %s178
      %s180 = sphi 0, %s178
      %s181 = sphi 0, %s180
      %s195 = sphi 0, %s181
      %s199 = sphi 0, %s199
      %s201 = sphi 0, %s199
      %s202 = sphi 0, %s201
      %s216 = sphi 0, %s202
      %s220 = sphi 0, %s220
      %s222 = sphi 0, %s220
      %s223 = sphi 0, %s222
      %s237 = sphi 0, %s223
      %s241 = sphi 0, %s241
      %s243 = sphi 0, %s241
      %s244 = sphi 0, %s243
      %s258 = sphi 0, %s244
      %s262 = sphi 0, %s262
      %s264 = sphi 0, %s262
      %s265 = sphi 0, %s264
      %s279 = sphi 0, %s265
      %s283 = sphi 0, %s283
      %s285 = sphi 0, %s283
      %s286 = sphi 0, %s285
      %s300 = sphi 0, %s286
      %s304 = sphi 0, %s304
      %s306 = sphi 0, %s304
      %s307 = sphi 0, %s306
      %s321 = sphi 0, %s307
      %s325 = sphi 0, %s325
      %s327 = sphi 0, %s325
      %s328 = sphi 0, %s327
      %s342 = sphi 0, %s328
      %s346 = sphi 0, %s346
      %s348 = sphi 0, %s346
      %s349 = sphi 0, %s348
      %s363 = sphi 0, %s349
      %s367 = sphi 0, %s367
      %s369 = sphi 0, %s367
      %s370 = sphi 0, %s369
      %s384 = sphi 0, %s370
      %s388 = sphi 0, %s388
      %s390 = sphi 0, %s388
      %s391 = sphi 0, %s390
      %s405 = sphi 0, %s391
      %s409 = sphi 0, %s409
      %s411 = sphi 0, %s409
      %s412 = sphi 0, %s411
      %s426 = sphi 0, %s412
      %s430 = sphi 0, %s430
      %s432 = sphi 0, %s430
      %s433 = sphi 0, %s432
      %s447 = sphi 0, %s433
      %s451 = sphi 0, %s451
      %s453 = sphi 0, %s451
      %s454 = sphi 0, %s453
      %s468 = sphi 0, %s454
      %s472 = sphi 0, %s472
      %s474 = sphi 0, %s472
      %s475 = sphi 0, %s474
      %s489 = sphi 0, %s475
      %s493 = sphi 0, %s493
      %s495 = sphi 0, %s493
      %s496 = sphi 0, %s495
      %s510 = sphi 0, %s496
      %s514 = sphi 0, %s514
      %s516 = sphi 0, %s514
      %s517 = sphi 0, %s516
      %s531 = sphi 0, %s517
      %s535 = sphi 0, %s535
      %s537 = sphi 0, %s535
      %s538 = sphi 0, %s537
      %s552 = sphi 0, %s538
      %s556 = sphi 0, %s556
      %s558 = sphi 0, %s556
      %s559 = sphi 0, %s558
      %s573 = sphi 0, %s559
      %s579 = sphi 0, %s581
      %s582 = sphi 0, %s579
      %s583 = sphi 0, %s582
      %s599 = sphi 0, %s583
    $region4: #{dit_encoder_forward.1} parent=1 // loop_header_branch
      %37 = sbr.rel (%p35) target = $region8
    $region5: #{dit_encoder_forward.1} parent=1 // loop_body
      %s39 = ssub.s32 %s34, 1
      %s40 = ssub.s32 %s34, 2
      %s41 = sadd.s32 %s34, 1
      %s42 = ssub.s32 %s34, %s41
      %p43 = scmp.eq.s32.totalorder %s42, 0
      %s45 = sadd.s32 %s44, 1
      %s46 = scalar_select %p43, %s44, %s45
      %p49 = pneg %p43
      %p50 = scmp.eq.s32.totalorder %s34, 1
      %p51 = por %p49, %p50
      %p52 = scmp.ne.s32.totalorder %s44, %s47
      %p53 = scmp.eq.s32.totalorder %s34, 0
      %p54 = por %p52, %p53
      %p55 = scmp.ne.s32.totalorder %s44, %s47
      %p56 = scmp.eq.s32.totalorder %s39, 1
      %p57 = por %p55, %p56
      %p58 = scmp.ne.s32.totalorder %s47, %s48
      %p59 = scmp.eq.s32.totalorder %s39, 0
      %p60 = por %p58, %p59
      %p61 = scmp.ne.s32.totalorder %s47, %s48
      %p62 = scmp.eq.s32.totalorder %s40, 1
      %p63 = por %p61, %p62
      %p65 = scmp.ne.s32.totalorder %s48, %s64
      %p66 = scmp.eq.s32.totalorder %s40, 0
      %p67 = por %p65, %p66
      %s68 = ssub.s32 %s34, %s41
      %p69 = scmp.eq.s32.totalorder %s68, 0
      %s71 = sadd.s32 %s70, 1
      %s72 = scalar_select %p69, %s70, %s71
      %p75 = pneg %p69
      %p76 = scmp.eq.s32.totalorder %s34, 1
      %p77 = por %p75, %p76
      %p78 = scmp.ne.s32.totalorder %s70, %s73
      %p79 = scmp.eq.s32.totalorder %s34, 0
      %p80 = por %p78, %p79
      %p81 = scmp.ne.s32.totalorder %s70, %s73
      %p82 = scmp.eq.s32.totalorder %s39, 1
      %p83 = por %p81, %p82
      %p84 = scmp.ne.s32.totalorder %s73, %s74
      %p85 = scmp.eq.s32.totalorder %s39, 0
      %p86 = por %p84, %p85
      %p87 = scmp.ne.s32.totalorder %s73, %s74
      %p88 = scmp.eq.s32.totalorder %s40, 1
      %p89 = por %p87, %p88
      %p91 = scmp.ne.s32.totalorder %s74, %s90
      %p92 = scmp.eq.s32.totalorder %s40, 0
      %p93 = por %p91, %p92
      %s95 = sadd.s32 %s94, 1
      %p98 = scmp.eq.s32.totalorder %s34, 1
      %p99 = scmp.ne.s32.totalorder %s94, %s96
      %p100 = scmp.eq.s32.totalorder %s34, 0
      %p101 = por %p99, %p100
      %p102 = scmp.ne.s32.totalorder %s94, %s96
      %p103 = scmp.eq.s32.totalorder %s39, 1
      %p104 = por %p102, %p103
      %p105 = scmp.ne.s32.totalorder %s96, %s97
      %p106 = scmp.eq.s32.totalorder %s39, 0
      %p107 = por %p105, %p106
      %p108 = scmp.ne.s32.totalorder %s96, %s97
      %p109 = scmp.eq.s32.totalorder %s40, 1
      %p110 = por %p108, %p109
      %p112 = scmp.ne.s32.totalorder %s97, %s111
      %p113 = scmp.eq.s32.totalorder %s40, 0
      %p114 = por %p112, %p113
      %s116 = sadd.s32 %s115, 1
      %p119 = scmp.eq.s32.totalorder %s34, 1
      %p120 = scmp.ne.s32.totalorder %s115, %s117
      %p121 = scmp.eq.s32.totalorder %s34, 0
      %p122 = por %p120, %p121
      %p123 = scmp.ne.s32.totalorder %s115, %s117
      %p124 = scmp.eq.s32.totalorder %s39, 1
      %p125 = por %p123, %p124
      %p126 = scmp.ne.s32.totalorder %s117, %s118
      %p127 = scmp.eq.s32.totalorder %s39, 0
      %p128 = por %p126, %p127
      %p129 = scmp.ne.s32.totalorder %s117, %s118
      %p130 = scmp.eq.s32.totalorder %s40, 1
      %p131 = por %p129, %p130
      %p133 = scmp.ne.s32.totalorder %s118, %s132
      %p134 = scmp.eq.s32.totalorder %s40, 0
      %p135 = por %p133, %p134
      %s137 = sadd.s32 %s136, 1
      %p140 = scmp.eq.s32.totalorder %s34, 1
      %p141 = scmp.ne.s32.totalorder %s136, %s138
      %p142 = scmp.eq.s32.totalorder %s34, 0
      %p143 = por %p141, %p142
      %p144 = scmp.ne.s32.totalorder %s136, %s138
      %p145 = scmp.eq.s32.totalorder %s39, 1
      %p146 = por %p144, %p145
      %p147 = scmp.ne.s32.totalorder %s138, %s139
      %p148 = scmp.eq.s32.totalorder %s39, 0
      %p149 = por %p147, %p148
      %p150 = scmp.ne.s32.totalorder %s138, %s139
      %p151 = scmp.eq.s32.totalorder %s40, 1
      %p152 = por %p150, %p151
      %p154 = scmp.ne.s32.totalorder %s139, %s153
      %p155 = scmp.eq.s32.totalorder %s40, 0
      %p156 = por %p154, %p155
      %s158 = sadd.s32 %s157, 1
      %p161 = scmp.eq.s32.totalorder %s34, 1
      %p162 = scmp.ne.s32.totalorder %s157, %s159
      %p163 = scmp.eq.s32.totalorder %s34, 0
      %p164 = por %p162, %p163
      %p165 = scmp.ne.s32.totalorder %s157, %s159
      %p166 = scmp.eq.s32.totalorder %s39, 1
      %p167 = por %p165, %p166
      %p168 = scmp.ne.s32.totalorder %s159, %s160
      %p169 = scmp.eq.s32.totalorder %s39, 0
      %p170 = por %p168, %p169
      %p171 = scmp.ne.s32.totalorder %s159, %s160
      %p172 = scmp.eq.s32.totalorder %s40, 1
      %p173 = por %p171, %p172
      %p175 = scmp.ne.s32.totalorder %s160, %s174
      %p176 = scmp.eq.s32.totalorder %s40, 0
      %p177 = por %p175, %p176
      %s179 = sadd.s32 %s178, 1
      %p182 = scmp.eq.s32.totalorder %s34, 1
      %p183 = scmp.ne.s32.totalorder %s178, %s180
      %p184 = scmp.eq.s32.totalorder %s34, 0
      %p185 = por %p183, %p184
      %p186 = scmp.ne.s32.totalorder %s178, %s180
      %p187 = scmp.eq.s32.totalorder %s39, 1
      %p188 = por %p186, %p187
      %p189 = scmp.ne.s32.totalorder %s180, %s181
      %p190 = scmp.eq.s32.totalorder %s39, 0
      %p191 = por %p189, %p190
      %p192 = scmp.ne.s32.totalorder %s180, %s181
      %p193 = scmp.eq.s32.totalorder %s40, 1
      %p194 = por %p192, %p193
      %p196 = scmp.ne.s32.totalorder %s181, %s195
      %p197 = scmp.eq.s32.totalorder %s40, 0
      %p198 = por %p196, %p197
      %s200 = sadd.s32 %s199, 1
      %p203 = scmp.eq.s32.totalorder %s34, 1
      %p204 = scmp.ne.s32.totalorder %s199, %s201
      %p205 = scmp.eq.s32.totalorder %s34, 0
      %p206 = por %p204, %p205
      %p207 = scmp.ne.s32.totalorder %s199, %s201
      %p208 = scmp.eq.s32.totalorder %s39, 1
      %p209 = por %p207, %p208
      %p210 = scmp.ne.s32.totalorder %s201, %s202
      %p211 = scmp.eq.s32.totalorder %s39, 0
      %p212 = por %p210, %p211
      %p213 = scmp.ne.s32.totalorder %s201, %s202
      %p214 = scmp.eq.s32.totalorder %s40, 1
      %p215 = por %p213, %p214
      %p217 = scmp.ne.s32.totalorder %s202, %s216
      %p218 = scmp.eq.s32.totalorder %s40, 0
      %p219 = por %p217, %p218
      %s221 = sadd.s32 %s220, 1
      %p224 = scmp.eq.s32.totalorder %s34, 1
      %p225 = scmp.ne.s32.totalorder %s220, %s222
      %p226 = scmp.eq.s32.totalorder %s34, 0
      %p227 = por %p225, %p226
      %p228 = scmp.ne.s32.totalorder %s220, %s222
      %p229 = scmp.eq.s32.totalorder %s39, 1
      %p230 = por %p228, %p229
      %p231 = scmp.ne.s32.totalorder %s222, %s223
      %p232 = scmp.eq.s32.totalorder %s39, 0
      %p233 = por %p231, %p232
      %p234 = scmp.ne.s32.totalorder %s222, %s223
      %p235 = scmp.eq.s32.totalorder %s40, 1
      %p236 = por %p234, %p235
      %p238 = scmp.ne.s32.totalorder %s223, %s237
      %p239 = scmp.eq.s32.totalorder %s40, 0
      %p240 = por %p238, %p239
      %s242 = sadd.s32 %s241, 1
      %p245 = scmp.eq.s32.totalorder %s34, 1
      %p246 = scmp.ne.s32.totalorder %s241, %s243
      %p247 = scmp.eq.s32.totalorder %s34, 0
      %p248 = por %p246, %p247
      %p249 = scmp.ne.s32.totalorder %s241, %s243
      %p250 = scmp.eq.s32.totalorder %s39, 1
      %p251 = por %p249, %p250
      %p252 = scmp.ne.s32.totalorder %s243, %s244
      %p253 = scmp.eq.s32.totalorder %s39, 0
      %p254 = por %p252, %p253
      %p255 = scmp.ne.s32.totalorder %s243, %s244
      %p256 = scmp.eq.s32.totalorder %s40, 1
      %p257 = por %p255, %p256
      %p259 = scmp.ne.s32.totalorder %s244, %s258
      %p260 = scmp.eq.s32.totalorder %s40, 0
      %p261 = por %p259, %p260
      %s263 = sadd.s32 %s262, 1
      %p266 = scmp.eq.s32.totalorder %s34, 1
      %p267 = scmp.ne.s32.totalorder %s262, %s264
      %p268 = scmp.eq.s32.totalorder %s34, 0
      %p269 = por %p267, %p268
      %p270 = scmp.ne.s32.totalorder %s262, %s264
      %p271 = scmp.eq.s32.totalorder %s39, 1
      %p272 = por %p270, %p271
      %p273 = scmp.ne.s32.totalorder %s264, %s265
      %p274 = scmp.eq.s32.totalorder %s39, 0
      %p275 = por %p273, %p274
      %p276 = scmp.ne.s32.totalorder %s264, %s265
      %p277 = scmp.eq.s32.totalorder %s40, 1
      %p278 = por %p276, %p277
      %p280 = scmp.ne.s32.totalorder %s265, %s279
      %p281 = scmp.eq.s32.totalorder %s40, 0
      %p282 = por %p280, %p281
      %s284 = sadd.s32 %s283, 1
      %p287 = scmp.eq.s32.totalorder %s34, 1
      %p288 = scmp.ne.s32.totalorder %s283, %s285
      %p289 = scmp.eq.s32.totalorder %s34, 0
      %p290 = por %p288, %p289
      %p291 = scmp.ne.s32.totalorder %s283, %s285
      %p292 = scmp.eq.s32.totalorder %s39, 1
      %p293 = por %p291, %p292
      %p294 = scmp.ne.s32.totalorder %s285, %s286
      %p295 = scmp.eq.s32.totalorder %s39, 0
      %p296 = por %p294, %p295
      %p297 = scmp.ne.s32.totalorder %s285, %s286
      %p298 = scmp.eq.s32.totalorder %s40, 1
      %p299 = por %p297, %p298
      %p301 = scmp.ne.s32.totalorder %s286, %s300
      %p302 = scmp.eq.s32.totalorder %s40, 0
      %p303 = por %p301, %p302
      %s305 = sadd.s32 %s304, 1
      %p308 = scmp.eq.s32.totalorder %s34, 1
      %p309 = scmp.ne.s32.totalorder %s304, %s306
      %p310 = scmp.eq.s32.totalorder %s34, 0
      %p311 = por %p309, %p310
      %p312 = scmp.ne.s32.totalorder %s304, %s306
      %p313 = scmp.eq.s32.totalorder %s39, 1
      %p314 = por %p312, %p313
      %p315 = scmp.ne.s32.totalorder %s306, %s307
      %p316 = scmp.eq.s32.totalorder %s39, 0
      %p317 = por %p315, %p316
      %p318 = scmp.ne.s32.totalorder %s306, %s307
      %p319 = scmp.eq.s32.totalorder %s40, 1
      %p320 = por %p318, %p319
      %p322 = scmp.ne.s32.totalorder %s307, %s321
      %p323 = scmp.eq.s32.totalorder %s40, 0
      %p324 = por %p322, %p323
      %s326 = sadd.s32 %s325, 1
      %p329 = scmp.eq.s32.totalorder %s34, 1
      %p330 = scmp.ne.s32.totalorder %s325, %s327
      %p331 = scmp.eq.s32.totalorder %s34, 0
      %p332 = por %p330, %p331
      %p333 = scmp.ne.s32.totalorder %s325, %s327
      %p334 = scmp.eq.s32.totalorder %s39, 1
      %p335 = por %p333, %p334
      %p336 = scmp.ne.s32.totalorder %s327, %s328
      %p337 = scmp.eq.s32.totalorder %s39, 0
      %p338 = por %p336, %p337
      %p339 = scmp.ne.s32.totalorder %s327, %s328
      %p340 = scmp.eq.s32.totalorder %s40, 1
      %p341 = por %p339, %p340
      %p343 = scmp.ne.s32.totalorder %s328, %s342
      %p344 = scmp.eq.s32.totalorder %s40, 0
      %p345 = por %p343, %p344
      %s347 = sadd.s32 %s346, 1
      %p350 = scmp.eq.s32.totalorder %s34, 1
      %p351 = scmp.ne.s32.totalorder %s346, %s348
      %p352 = scmp.eq.s32.totalorder %s34, 0
      %p353 = por %p351, %p352
      %p354 = scmp.ne.s32.totalorder %s346, %s348
      %p355 = scmp.eq.s32.totalorder %s39, 1
      %p356 = por %p354, %p355
      %p357 = scmp.ne.s32.totalorder %s348, %s349
      %p358 = scmp.eq.s32.totalorder %s39, 0
      %p359 = por %p357, %p358
      %p360 = scmp.ne.s32.totalorder %s348, %s349
      %p361 = scmp.eq.s32.totalorder %s40, 1
      %p362 = por %p360, %p361
      %p364 = scmp.ne.s32.totalorder %s349, %s363
      %p365 = scmp.eq.s32.totalorder %s40, 0
      %p366 = por %p364, %p365
      %s368 = sadd.s32 %s367, 1
      %p371 = scmp.eq.s32.totalorder %s34, 1
      %p372 = scmp.ne.s32.totalorder %s367, %s369
      %p373 = scmp.eq.s32.totalorder %s34, 0
      %p374 = por %p372, %p373
      %p375 = scmp.ne.s32.totalorder %s367, %s369
      %p376 = scmp.eq.s32.totalorder %s39, 1
      %p377 = por %p375, %p376
      %p378 = scmp.ne.s32.totalorder %s369, %s370
      %p379 = scmp.eq.s32.totalorder %s39, 0
      %p380 = por %p378, %p379
      %p381 = scmp.ne.s32.totalorder %s369, %s370
      %p382 = scmp.eq.s32.totalorder %s40, 1
      %p383 = por %p381, %p382
      %p385 = scmp.ne.s32.totalorder %s370, %s384
      %p386 = scmp.eq.s32.totalorder %s40, 0
      %p387 = por %p385, %p386
      %s389 = sadd.s32 %s388, 1
      %p392 = scmp.eq.s32.totalorder %s34, 1
      %p393 = scmp.ne.s32.totalorder %s388, %s390
      %p394 = scmp.eq.s32.totalorder %s34, 0
      %p395 = por %p393, %p394
      %p396 = scmp.ne.s32.totalorder %s388, %s390
      %p397 = scmp.eq.s32.totalorder %s39, 1
      %p398 = por %p396, %p397
      %p399 = scmp.ne.s32.totalorder %s390, %s391
      %p400 = scmp.eq.s32.totalorder %s39, 0
      %p401 = por %p399, %p400
      %p402 = scmp.ne.s32.totalorder %s390, %s391
      %p403 = scmp.eq.s32.totalorder %s40, 1
      %p404 = por %p402, %p403
      %p406 = scmp.ne.s32.totalorder %s391, %s405
      %p407 = scmp.eq.s32.totalorder %s40, 0
      %p408 = por %p406, %p407
      %s410 = sadd.s32 %s409, 1
      %p413 = scmp.eq.s32.totalorder %s34, 1
      %p414 = scmp.ne.s32.totalorder %s409, %s411
      %p415 = scmp.eq.s32.totalorder %s34, 0
      %p416 = por %p414, %p415
      %p417 = scmp.ne.s32.totalorder %s409, %s411
      %p418 = scmp.eq.s32.totalorder %s39, 1
      %p419 = por %p417, %p418
      %p420 = scmp.ne.s32.totalorder %s411, %s412
      %p421 = scmp.eq.s32.totalorder %s39, 0
      %p422 = por %p420, %p421
      %p423 = scmp.ne.s32.totalorder %s411, %s412
      %p424 = scmp.eq.s32.totalorder %s40, 1
      %p425 = por %p423, %p424
      %p427 = scmp.ne.s32.totalorder %s412, %s426
      %p428 = scmp.eq.s32.totalorder %s40, 0
      %p429 = por %p427, %p428
      %s431 = sadd.s32 %s430, 1
      %p434 = scmp.eq.s32.totalorder %s34, 1
      %p435 = scmp.ne.s32.totalorder %s430, %s432
      %p436 = scmp.eq.s32.totalorder %s34, 0
      %p437 = por %p435, %p436
      %p438 = scmp.ne.s32.totalorder %s430, %s432
      %p439 = scmp.eq.s32.totalorder %s39, 1
      %p440 = por %p438, %p439
      %p441 = scmp.ne.s32.totalorder %s432, %s433
      %p442 = scmp.eq.s32.totalorder %s39, 0
      %p443 = por %p441, %p442
      %p444 = scmp.ne.s32.totalorder %s432, %s433
      %p445 = scmp.eq.s32.totalorder %s40, 1
      %p446 = por %p444, %p445
      %p448 = scmp.ne.s32.totalorder %s433, %s447
      %p449 = scmp.eq.s32.totalorder %s40, 0
      %p450 = por %p448, %p449
      %s452 = sadd.s32 %s451, 1
      %p455 = scmp.eq.s32.totalorder %s34, 1
      %p456 = scmp.ne.s32.totalorder %s451, %s453
      %p457 = scmp.eq.s32.totalorder %s34, 0
      %p458 = por %p456, %p457
      %p459 = scmp.ne.s32.totalorder %s451, %s453
      %p460 = scmp.eq.s32.totalorder %s39, 1
      %p461 = por %p459, %p460
      %p462 = scmp.ne.s32.totalorder %s453, %s454
      %p463 = scmp.eq.s32.totalorder %s39, 0
      %p464 = por %p462, %p463
      %p465 = scmp.ne.s32.totalorder %s453, %s454
      %p466 = scmp.eq.s32.totalorder %s40, 1
      %p467 = por %p465, %p466
      %p469 = scmp.ne.s32.totalorder %s454, %s468
      %p470 = scmp.eq.s32.totalorder %s40, 0
      %p471 = por %p469, %p470
      %s473 = sadd.s32 %s472, 1
      %p476 = scmp.eq.s32.totalorder %s34, 1
      %p477 = scmp.ne.s32.totalorder %s472, %s474
      %p478 = scmp.eq.s32.totalorder %s34, 0
      %p479 = por %p477, %p478
      %p480 = scmp.ne.s32.totalorder %s472, %s474
      %p481 = scmp.eq.s32.totalorder %s39, 1
      %p482 = por %p480, %p481
      %p483 = scmp.ne.s32.totalorder %s474, %s475
      %p484 = scmp.eq.s32.totalorder %s39, 0
      %p485 = por %p483, %p484
      %p486 = scmp.ne.s32.totalorder %s474, %s475
      %p487 = scmp.eq.s32.totalorder %s40, 1
      %p488 = por %p486, %p487
      %p490 = scmp.ne.s32.totalorder %s475, %s489
      %p491 = scmp.eq.s32.totalorder %s40, 0
      %p492 = por %p490, %p491
      %s494 = sadd.s32 %s493, 1
      %p497 = scmp.eq.s32.totalorder %s34, 1
      %p498 = scmp.ne.s32.totalorder %s493, %s495
      %p499 = scmp.eq.s32.totalorder %s34, 0
      %p500 = por %p498, %p499
      %p501 = scmp.ne.s32.totalorder %s493, %s495
      %p502 = scmp.eq.s32.totalorder %s39, 1
      %p503 = por %p501, %p502
      %p504 = scmp.ne.s32.totalorder %s495, %s496
      %p505 = scmp.eq.s32.totalorder %s39, 0
      %p506 = por %p504, %p505
      %p507 = scmp.ne.s32.totalorder %s495, %s496
      %p508 = scmp.eq.s32.totalorder %s40, 1
      %p509 = por %p507, %p508
      %p511 = scmp.ne.s32.totalorder %s496, %s510
      %p512 = scmp.eq.s32.totalorder %s40, 0
      %p513 = por %p511, %p512
      %s515 = sadd.s32 %s514, 1
      %p518 = scmp.eq.s32.totalorder %s34, 1
      %p519 = scmp.ne.s32.totalorder %s514, %s516
      %p520 = scmp.eq.s32.totalorder %s34, 0
      %p521 = por %p519, %p520
      %p522 = scmp.ne.s32.totalorder %s514, %s516
      %p523 = scmp.eq.s32.totalorder %s39, 1
      %p524 = por %p522, %p523
      %p525 = scmp.ne.s32.totalorder %s516, %s517
      %p526 = scmp.eq.s32.totalorder %s39, 0
      %p527 = por %p525, %p526
      %p528 = scmp.ne.s32.totalorder %s516, %s517
      %p529 = scmp.eq.s32.totalorder %s40, 1
      %p530 = por %p528, %p529
      %p532 = scmp.ne.s32.totalorder %s517, %s531
      %p533 = scmp.eq.s32.totalorder %s40, 0
      %p534 = por %p532, %p533
      %s536 = sadd.s32 %s535, 1
      %p539 = scmp.eq.s32.totalorder %s34, 1
      %p540 = scmp.ne.s32.totalorder %s535, %s537
      %p541 = scmp.eq.s32.totalorder %s34, 0
      %p542 = por %p540, %p541
      %p543 = scmp.ne.s32.totalorder %s535, %s537
      %p544 = scmp.eq.s32.totalorder %s39, 1
      %p545 = por %p543, %p544
      %p546 = scmp.ne.s32.totalorder %s537, %s538
      %p547 = scmp.eq.s32.totalorder %s39, 0
      %p548 = por %p546, %p547
      %p549 = scmp.ne.s32.totalorder %s537, %s538
      %p550 = scmp.eq.s32.totalorder %s40, 1
      %p551 = por %p549, %p550
      %p553 = scmp.ne.s32.totalorder %s538, %s552
      %p554 = scmp.eq.s32.totalorder %s40, 0
      %p555 = por %p553, %p554
      %s557 = sadd.s32 %s556, 1
      %p560 = scmp.eq.s32.totalorder %s34, 1
      %p561 = scmp.ne.s32.totalorder %s556, %s558
      %p562 = scmp.eq.s32.totalorder %s34, 0
      %p563 = por %p561, %p562
      %p564 = scmp.ne.s32.totalorder %s556, %s558
      %p565 = scmp.eq.s32.totalorder %s39, 1
      %p566 = por %p564, %p565
      %p567 = scmp.ne.s32.totalorder %s558, %s559
      %p568 = scmp.eq.s32.totalorder %s39, 0
      %p569 = por %p567, %p568
      %p570 = scmp.ne.s32.totalorder %s558, %s559
      %p571 = scmp.eq.s32.totalorder %s40, 1
      %p572 = por %p570, %p571
      %p574 = scmp.ne.s32.totalorder %s559, %s573
      %p575 = scmp.eq.s32.totalorder %s40, 0
      %p576 = por %p574, %p575
      %s577 = ssub.s32 %s34, %s41
      %p578 = scmp.eq.s32.totalorder %s577, 0
      %s580 = sadd.s32 %s579, 1
      %s581 = scalar_select %p578, %s579, %s580
      %p584 = pneg %p578
      %p585 = scmp.eq.s32.totalorder %s34, 1
      %p586 = por %p584, %p585
      %p587 = scmp.ne.s32.totalorder %s579, %s582
      %p588 = scmp.eq.s32.totalorder %s34, 0
      %p589 = por %p587, %p588
      %p590 = scmp.ne.s32.totalorder %s579, %s582
      %p591 = scmp.eq.s32.totalorder %s39, 1
      %p592 = por %p590, %p591
      %p593 = scmp.ne.s32.totalorder %s582, %s583
      %p594 = scmp.eq.s32.totalorder %s39, 0
      %p595 = por %p593, %p594
      %p596 = scmp.ne.s32.totalorder %s582, %s583
      %p597 = scmp.eq.s32.totalorder %s40, 1
      %p598 = por %p596, %p597
      %p600 = scmp.ne.s32.totalorder %s583, %s599
      %p601 = scmp.eq.s32.totalorder %s40, 0
      %p602 = por %p600, %p601
      %p603 = scmp.le.s32.totalorder 1, %s34
      %p604 = scmp.lt.s32.totalorder %s34, 3
      %p605 = pnand %p603, %p604
      %p606 = pneg %p605
      // Predicated region
      $region9: #{dit_encoder_forward.1} parent=5 // pred_check
        _
      $region10: #{dit_encoder_forward.1} parent=5 // pred_check_branch
        %608 = sbr.rel (%p605) target = $region12
      $region11: #{dit_encoder_forward.1} parent=5 // pred_region
        %s609 = ssub.s32 %s34, 1
        // Predicated region
        $region13: #{dit_encoder_forward.1} parent=11 // pred_check
          %p610 = pneg %p107
        $region14: #{dit_encoder_forward.1} parent=11 // pred_check_branch
          %612 = sbr.rel (%p610) target = $region16
        $region15: #{dit_encoder_forward.1} parent=11 // pred_region
          _
        $region16: #{dit_encoder_forward.1} parent=11 // pred_fallthru
          _
        // Predicated region
        $region17: #{dit_encoder_forward.1} parent=11 // pred_check
          %p613 = pneg %p128
        $region18: #{dit_encoder_forward.1} parent=11 // pred_check_branch
          %615 = sbr.rel (%p613) target = $region20
        $region19: #{dit_encoder_forward.1} parent=11 // pred_region
          _
        $region20: #{dit_encoder_forward.1} parent=11 // pred_fallthru
          _
        // Predicated region
        $region21: #{dit_encoder_forward.1} parent=11 // pred_check
          %p616 = pneg %p149
        $region22: #{dit_encoder_forward.1} parent=11 // pred_check_branch
          %618 = sbr.rel (%p616) target = $region24
        $region23: #{dit_encoder_forward.1} parent=11 // pred_region
          _
        $region24: #{dit_encoder_forward.1} parent=11 // pred_fallthru
          _
        // Predicated region
        $region25: #{dit_encoder_forward.1} parent=11 // pred_check
          %p619 = pneg %p170
        $region26: #{dit_encoder_forward.1} parent=11 // pred_check_branch
          %621 = sbr.rel (%p619) target = $region28
        $region27: #{dit_encoder_forward.1} parent=11 // pred_region
          _
        $region28: #{dit_encoder_forward.1} parent=11 // pred_fallthru
          _
        // Predicated region
        $region29: #{dit_encoder_forward.1} parent=11 // pred_check
          %p622 = pneg %p191
        $region30: #{dit_encoder_forward.1} parent=11 // pred_check_branch
          %624 = sbr.rel (%p622) target = $region32
        $region31: #{dit_encoder_forward.1} parent=11 // pred_region
          _
        $region32: #{dit_encoder_forward.1} parent=11 // pred_fallthru
          _
        // Predicated region
        $region33: #{dit_encoder_forward.1} parent=11 // pred_check
          %p625 = pneg %p212
        $region34: #{dit_encoder_forward.1} parent=11 // pred_check_branch
          %627 = sbr.rel (%p625) target = $region36
        $region35: #{dit_encoder_forward.1} parent=11 // pred_region
          _
        $region36: #{dit_encoder_forward.1} parent=11 // pred_fallthru
          _
        // Predicated region
        $region37: #{dit_encoder_forward.1} parent=11 // pred_check
          %p628 = pneg %p233
        $region38: #{dit_encoder_forward.1} parent=11 // pred_check_branch
          %630 = sbr.rel (%p628) target = $region40
        $region39: #{dit_encoder_forward.1} parent=11 // pred_region
          _
        $region40: #{dit_encoder_forward.1} parent=11 // pred_fallthru
          _
        // Predicated region
        $region41: #{dit_encoder_forward.1} parent=11 // pred_check
          %p631 = pneg %p254
        $region42: #{dit_encoder_forward.1} parent=11 // pred_check_branch
          %633 = sbr.rel (%p631) target = $region44
        $region43: #{dit_encoder_forward.1} parent=11 // pred_region
          _
        $region44: #{dit_encoder_forward.1} parent=11 // pred_fallthru
          _
        // Predicated region
        $region45: #{dit_encoder_forward.1} parent=11 // pred_check
          %p634 = pneg %p275
        $region46: #{dit_encoder_forward.1} parent=11 // pred_check_branch
          %636 = sbr.rel (%p634) target = $region48
        $region47: #{dit_encoder_forward.1} parent=11 // pred_region
          _
        $region48: #{dit_encoder_forward.1} parent=11 // pred_fallthru
          _
        // Predicated region
        $region49: #{dit_encoder_forward.1} parent=11 // pred_check
          %p637 = pneg %p296
        $region50: #{dit_encoder_forward.1} parent=11 // pred_check_branch
          %639 = sbr.rel (%p637) target = $region52
        $region51: #{dit_encoder_forward.1} parent=11 // pred_region
          _
        $region52: #{dit_encoder_forward.1} parent=11 // pred_fallthru
          _
        // Predicated region
        $region53: #{dit_encoder_forward.1} parent=11 // pred_check
          %p640 = pneg %p317
        $region54: #{dit_encoder_forward.1} parent=11 // pred_check_branch
          %642 = sbr.rel (%p640) target = $region56
        $region55: #{dit_encoder_forward.1} parent=11 // pred_region
          _
        $region56: #{dit_encoder_forward.1} parent=11 // pred_fallthru
          _
        // Predicated region
        $region57: #{dit_encoder_forward.1} parent=11 // pred_check
          %p643 = pneg %p338
        $region58: #{dit_encoder_forward.1} parent=11 // pred_check_branch
          %645 = sbr.rel (%p643) target = $region60
        $region59: #{dit_encoder_forward.1} parent=11 // pred_region
          _
        $region60: #{dit_encoder_forward.1} parent=11 // pred_fallthru
          _
        // Predicated region
        $region61: #{dit_encoder_forward.1} parent=11 // pred_check
          %p646 = pneg %p359
        $region62: #{dit_encoder_forward.1} parent=11 // pred_check_branch
          %648 = sbr.rel (%p646) target = $region64
        $region63: #{dit_encoder_forward.1} parent=11 // pred_region
          _
        $region64: #{dit_encoder_forward.1} parent=11 // pred_fallthru
          _
        // Predicated region
        $region65: #{dit_encoder_forward.1} parent=11 // pred_check
          %p649 = pneg %p380
        $region66: #{dit_encoder_forward.1} parent=11 // pred_check_branch
          %651 = sbr.rel (%p649) target = $region68
        $region67: #{dit_encoder_forward.1} parent=11 // pred_region
          _
        $region68: #{dit_encoder_forward.1} parent=11 // pred_fallthru
          _
        // Predicated region
        $region69: #{dit_encoder_forward.1} parent=11 // pred_check
          %p652 = pneg %p401
        $region70: #{dit_encoder_forward.1} parent=11 // pred_check_branch
          %654 = sbr.rel (%p652) target = $region72
        $region71: #{dit_encoder_forward.1} parent=11 // pred_region
          _
        $region72: #{dit_encoder_forward.1} parent=11 // pred_fallthru
          _
        // Predicated region
        $region73: #{dit_encoder_forward.1} parent=11 // pred_check
          %p655 = pneg %p422
        $region74: #{dit_encoder_forward.1} parent=11 // pred_check_branch
          %657 = sbr.rel (%p655) target = $region76
        $region75: #{dit_encoder_forward.1} parent=11 // pred_region
          _
        $region76: #{dit_encoder_forward.1} parent=11 // pred_fallthru
          _
        // Predicated region
        $region77: #{dit_encoder_forward.1} parent=11 // pred_check
          %p658 = pneg %p443
        $region78: #{dit_encoder_forward.1} parent=11 // pred_check_branch
          %660 = sbr.rel (%p658) target = $region80
        $region79: #{dit_encoder_forward.1} parent=11 // pred_region
          _
        $region80: #{dit_encoder_forward.1} parent=11 // pred_fallthru
          _
        // Predicated region
        $region81: #{dit_encoder_forward.1} parent=11 // pred_check
          %p661 = pneg %p464
        $region82: #{dit_encoder_forward.1} parent=11 // pred_check_branch
          %663 = sbr.rel (%p661) target = $region84
        $region83: #{dit_encoder_forward.1} parent=11 // pred_region
          _
        $region84: #{dit_encoder_forward.1} parent=11 // pred_fallthru
          _
        // Predicated region
        $region85: #{dit_encoder_forward.1} parent=11 // pred_check
          %p664 = pneg %p485
        $region86: #{dit_encoder_forward.1} parent=11 // pred_check_branch
          %666 = sbr.rel (%p664) target = $region88
        $region87: #{dit_encoder_forward.1} parent=11 // pred_region
          _
        $region88: #{dit_encoder_forward.1} parent=11 // pred_fallthru
          _
        // Predicated region
        $region89: #{dit_encoder_forward.1} parent=11 // pred_check
          %p667 = pneg %p506
        $region90: #{dit_encoder_forward.1} parent=11 // pred_check_branch
          %669 = sbr.rel (%p667) target = $region92
        $region91: #{dit_encoder_forward.1} parent=11 // pred_region
          _
        $region92: #{dit_encoder_forward.1} parent=11 // pred_fallthru
          _
        // Predicated region
        $region93: #{dit_encoder_forward.1} parent=11 // pred_check
          %p670 = pneg %p527
        $region94: #{dit_encoder_forward.1} parent=11 // pred_check_branch
          %672 = sbr.rel (%p670) target = $region96
        $region95: #{dit_encoder_forward.1} parent=11 // pred_region
          _
        $region96: #{dit_encoder_forward.1} parent=11 // pred_fallthru
          _
        // Predicated region
        $region97: #{dit_encoder_forward.1} parent=11 // pred_check
          %p673 = pneg %p548
        $region98: #{dit_encoder_forward.1} parent=11 // pred_check_branch
          %675 = sbr.rel (%p673) target = $region100
        $region99: #{dit_encoder_forward.1} parent=11 // pred_region
          _
        $region100: #{dit_encoder_forward.1} parent=11 // pred_fallthru
          _
        // Predicated region
        $region101: #{dit_encoder_forward.1} parent=11 // pred_check
          %p676 = pneg %p569
        $region102: #{dit_encoder_forward.1} parent=11 // pred_check_branch
          %678 = sbr.rel (%p676) target = $region104
        $region103: #{dit_encoder_forward.1} parent=11 // pred_region
          _
        $region104: #{dit_encoder_forward.1} parent=11 // pred_fallthru
          _
      $region12: #{dit_encoder_forward.1} parent=5 // pred_fallthru
        _
      %p679 = scmp.lt.s32.totalorder %s34, 2
      // Predicated region
      $region105: #{dit_encoder_forward.1} parent=5 // pred_check
        %p680 = pneg %p679
      $region106: #{dit_encoder_forward.1} parent=5 // pred_check_branch
        %682 = sbr.rel (%p680) target = $region108
      $region107: #{dit_encoder_forward.1} parent=5 // pred_region
        // Predicated region
        $region109: #{dit_encoder_forward.1} parent=107 // pred_check
          %p683 = pneg %p54
        $region110: #{dit_encoder_forward.1} parent=107 // pred_check_branch
          %685 = sbr.rel (%p683) target = $region112
        $region111: #{dit_encoder_forward.1} parent=107 // pred_region
          %p686 = scmp.lt.s32.totalorder %s34, 1
          %s687 = scalar_select %p686, %s34, 1
          %s688 = smul.addr %s687, 2
          %s689 = smul.addr %s688, 8
          %s690 = scalar_lea.vmem %s0, %s689
        $region112: #{dit_encoder_forward.1} parent=107 // pred_fallthru
          _
        // Predicated region
        $region113: #{dit_encoder_forward.1} parent=107 // pred_check
          %p691 = pneg %p80
        $region114: #{dit_encoder_forward.1} parent=107 // pred_check_branch
          %693 = sbr.rel (%p691) target = $region116
        $region115: #{dit_encoder_forward.1} parent=107 // pred_region
          %p694 = scmp.lt.s32.totalorder %s34, 1
          %s695 = scalar_select %p694, %s34, 1
          %s696 = smul.addr %s695, 2
          %s697 = smul.addr %s696, 8
          %s698 = scalar_lea.vmem %s1, %s697
        $region116: #{dit_encoder_forward.1} parent=107 // pred_fallthru
          _
      $region108: #{dit_encoder_forward.1} parent=5 // pred_fallthru
        _
      %p699 = scmp.le.s32.totalorder 1, %s34
      %p700 = scmp.lt.s32.totalorder %s34, 3
      %p701 = pnand %p699, %p700
      %p702 = pneg %p701
      // Predicated region
      $region117: #{dit_encoder_forward.1} parent=5 // pred_check
        _
      $region118: #{dit_encoder_forward.1} parent=5 // pred_check_branch
        %704 = sbr.rel (%p701) target = $region120
      $region119: #{dit_encoder_forward.1} parent=5 // pred_region
        %s705 = ssub.s32 %s34, 1
        %p706 = scmp.lt.s32.totalorder %s39, 1
        %s707 = scalar_select %p706, %s39, 1
        %s708 = smul.addr %s707, 2
        %s709 = smul.addr %s708, 8
        %s710 = scalar_lea.vmem %s0, %s709
        %p711 = pneg %p60
        %p712 = pneg %p57
        %p713 = scmp.lt.s32.totalorder %s39, 1
        %s714 = scalar_select %p713, %s39, 1
        %s715 = smul.addr %s714, 2
        %s716 = smul.addr %s715, 8
        %s717 = scalar_lea.vmem %s1, %s716
        %p718 = pneg %p86
        %p719 = pneg %p83
        %p720 = pneg %p107
        %p721 = pneg %p104
        %p722 = pneg %p128
        %p723 = pneg %p125
        %p724 = pneg %p149
        %p725 = pneg %p146
        %p726 = pneg %p170
        %p727 = pneg %p167
        %p728 = pneg %p191
        %p729 = pneg %p188
        %p730 = pneg %p212
        %p731 = pneg %p209
        %p732 = pneg %p233
        %p733 = pneg %p230
        %p734 = pneg %p254
        %p735 = pneg %p251
        %p736 = pneg %p275
        %p737 = pneg %p272
        %p738 = pneg %p296
        %p739 = pneg %p293
        %p740 = pneg %p317
        %p741 = pneg %p314
        %p742 = pneg %p338
        %p743 = pneg %p335
        %p744 = pneg %p359
        %p745 = pneg %p356
        %p746 = pneg %p380
        %p747 = pneg %p377
        %p748 = pneg %p401
        %p749 = pneg %p398
        %p750 = pneg %p422
        %p751 = pneg %p419
        %p752 = pneg %p443
        %p753 = pneg %p440
        %p754 = pneg %p464
        %p755 = pneg %p461
        %p756 = pneg %p485
        %p757 = pneg %p482
        %p758 = pneg %p506
        %p759 = pneg %p503
        %p760 = pneg %p527
        %p761 = pneg %p524
        %p762 = pneg %p548
        %p763 = pneg %p545
        %p764 = pneg %p569
        %p765 = pneg %p566
        %p766 = pneg %p595
        %p767 = pneg %p592
        %s768 = sand.u32 %s582, 1
        %s769 = scalar_lea.sflag [#allocation3], %s768
        %s770 = sand.u32 %s582, 1
        %s771 = smul.addr %s770, 8
        %s772 = scalar_lea.vmem [#allocation2], %s771
        %p773 = scmp.lt.s32.totalorder %s39, 1
        %s774 = scalar_select %p773, %s39, 1
        %s775 = smul.addr %s774, 2
        %s776 = smul.addr %s775, 8
        %s777 = scalar_lea.vmem %s0, %s776
        %p778 = scmp.lt.s32.totalorder %s39, 1
        %s779 = scalar_select %p778, %s39, 1
        %s780 = smul.addr %s779, 2
        %s781 = smul.addr %s780, 8
        %s782 = scalar_lea.vmem %s1, %s781
        %v784 = vld [vmem:[%s777] sm:$0xff]
        %v785 = vld [vmem:[%s777 + $0x8] sm:$0xff]
        %v786 = vld [vmem:[%s3] sm:$0xf]
        %v787 = vld [vmem:[%s3 + $0x4] sm:$0xf]
        %v788 = vld [vmem:[%s3 + $0x8] sm:$0xf]
        %v789 = vld [vmem:[%s3 + $0xc] sm:$0xf]
        %v790 = vld [vmem:[%s3 + $0x10] sm:$0xf]
        %v791 = vld [vmem:[%s3 + $0x14] sm:$0xf]
        %v792 = vld [vmem:[%s3 + $0x18] sm:$0xf]
        %v793 = vld [vmem:[%s3 + $0x1c] sm:$0xf]
        %v794 = vld [vmem:[%s3 + $0x20] sm:$0xf]
        %v795 = vld [vmem:[%s3 + $0x24] sm:$0xf]
        %v796 = vld [vmem:[%s3 + $0x28] sm:$0xf]
        %v797 = vld [vmem:[%s3 + $0x2c] sm:$0xf]
        %v798 = vld [vmem:[%s3 + $0x30] sm:$0xf]
        %v799 = vld [vmem:[%s3 + $0x34] sm:$0xf]
        %v800 = vld [vmem:[%s3 + $0x38] sm:$0xf]
        %v801 = vld [vmem:[%s3 + $0x3c] sm:$0xf]
        %v802 = vld [vmem:[%s3 + $0x40] sm:$0xf]
        %v803 = vld [vmem:[%s3 + $0x44] sm:$0xf]
        %v804 = vld [vmem:[%s3 + $0x48] sm:$0xf]
        %v805 = vld [vmem:[%s3 + $0x4c] sm:$0xf]
        %v806 = vld [vmem:[%s3 + $0x50] sm:$0xf]
        %v807 = vld [vmem:[%s3 + $0x54] sm:$0xf]
        %v808 = vld [vmem:[%s3 + $0x58] sm:$0xf]
        %v809 = vld [vmem:[%s3 + $0x5c] sm:$0xf]
        %v810 = vld [vmem:[%s3 + $0x60] sm:$0xf]
        %v811 = vld [vmem:[%s3 + $0x64] sm:$0xf]
        %v812 = vld [vmem:[%s3 + $0x68] sm:$0xf]
        %v813 = vld [vmem:[%s3 + $0x6c] sm:$0xf]
        %v814 = vld [vmem:[%s3 + $0x70] sm:$0xf]
        %v815 = vld [vmem:[%s3 + $0x74] sm:$0xf]
        %v816 = vld [vmem:[%s3 + $0x78] sm:$0xf]
        %v817 = vld [vmem:[%s3 + $0x7c] sm:$0xf]
        %v818 = vpack.c.bf16 %v784, %v784
        %v819 = vpack.c.bf16 %v785, %v785
        %v820 = vld [vmem:[%s4] sm:$0x1]
        %v822 = vperm.slane %v820, 0
        %v856 = vunpack.c.l.b16 %v786
        %v857 = vunpack.c.l.b16 %v787
        %v858 = vunpack.c.l.b16 %v788
        %v859 = vunpack.c.l.b16 %v789
        %v860 = vunpack.c.l.b16 %v790
        %v861 = vunpack.c.l.b16 %v791
        %v862 = vunpack.c.l.b16 %v792
        %v863 = vunpack.c.l.b16 %v793
        %v864 = vunpack.c.l.b16 %v794
        %v865 = vunpack.c.l.b16 %v795
        %v866 = vunpack.c.l.b16 %v796
        %v867 = vunpack.c.l.b16 %v797
        %v868 = vunpack.c.l.b16 %v798
        %v869 = vunpack.c.l.b16 %v799
        %v870 = vunpack.c.l.b16 %v800
        %v871 = vunpack.c.l.b16 %v801
        %v872 = vunpack.c.l.b16 %v802
        %v873 = vunpack.c.l.b16 %v803
        %v874 = vunpack.c.l.b16 %v804
        %v875 = vunpack.c.l.b16 %v805
        %v876 = vunpack.c.l.b16 %v806
        %v877 = vunpack.c.l.b16 %v807
        %v878 = vunpack.c.l.b16 %v808
        %v879 = vunpack.c.l.b16 %v809
        %v880 = vunpack.c.l.b16 %v810
        %v881 = vunpack.c.l.b16 %v811
        %v882 = vunpack.c.l.b16 %v812
        %v883 = vunpack.c.l.b16 %v813
        %v884 = vunpack.c.l.b16 %v814
        %v885 = vunpack.c.l.b16 %v815
        %v886 = vunpack.c.l.b16 %v816
        %v887 = vunpack.c.l.b16 %v817
        %v888 = vpack.c.b16 %v857, %v856
        %v889 = vpack.c.b16 %v859, %v858
        %v890 = vpack.c.b16 %v861, %v860
        %v891 = vpack.c.b16 %v863, %v862
        %v892 = vpack.c.b16 %v865, %v864
        %v893 = vpack.c.b16 %v867, %v866
        %v894 = vpack.c.b16 %v869, %v868
        %v895 = vpack.c.b16 %v871, %v870
        %v896 = vpack.c.b16 %v873, %v872
        %v897 = vpack.c.b16 %v875, %v874
        %v898 = vpack.c.b16 %v877, %v876
        %v899 = vpack.c.b16 %v879, %v878
        %v900 = vpack.c.b16 %v881, %v880
        %v901 = vpack.c.b16 %v883, %v882
        %v902 = vpack.c.b16 %v885, %v884
        %v903 = vpack.c.b16 %v887, %v886
        %920 = vmatpush.bf16.msra.mxu0 %v895
        %921 = vmatpush.bf16.msra.mxu0 %v894
        %922 = vmatpush.bf16.msra.mxu0 %v893
        %923 = vmatpush.bf16.msra.mxu0 %v892
        %924 = vmatpush.bf16.msra.mxu0 %v891
        %925 = vmatpush.bf16.msra.mxu0 %v890
        %926 = vmatpush.bf16.msra.mxu0 %v889
        %927 = vmatpush.bf16.msra.mxu0 %v888
        %928 = vmatmul.bf16.gmra.mxu0 %v818
        %v929 = vpop.f32.mrf.mxu0
        %v930 = vadd.f32 %v822, %v929
        %v931 = vpop.f32.mrf.mxu0
        %932 = vdwg.mxu0
        %933 = vmatpush.bf16.msra.mxu0 %v903
        %934 = vmatpush.bf16.msra.mxu0 %v902
        %935 = vmatpush.bf16.msra.mxu0 %v901
        %936 = vmatpush.bf16.msra.mxu0 %v900
        %937 = vmatpush.bf16.msra.mxu0 %v899
        %938 = vmatpush.bf16.msra.mxu0 %v898
        %939 = vmatpush.bf16.msra.mxu0 %v897
        %940 = vmatpush.bf16.msra.mxu0 %v896
        %941 = vmatmul.bf16.gmra.mxu0 %v819
        %v942 = vpop.f32.mrf.mxu0
        %v943 = vadd.f32 %v930, %v942
        %v944 = vpop.f32.mrf.mxu0
        %945 = vdwg.mxu0
        %vm946 = vcmask 261120
        %v947 = vsel %vm946, %v943, 0.0
        %948 = vadd.xlane.f32.xlu0 %v947
        %v949 = vpop.xlane.xlu0 %948
        %v950 = vrcp.pop 32.0
        %v951 = vmul.f32 32.0, %v950
        %v952 = vsub.f32 1.0, %v951
        %v953 = vmul.f32 %v950, %v952
        %v954 = vadd.f32 %v950, %v953
        %vm955 = vweird.f32 %v950
        %v956 = vsel %vm955, %v950, %v954
        %v957 = vmul.f32 %v949, %v956
        %v958 = vsub.f32 %v943, %v957
        %v959 = vmul.f32 %v958, %v958
        %v960 = vsel %vm946, %v959, 0.0
        %961 = vadd.xlane.f32.xlu0 %v960
        %v962 = vpop.xlane.xlu0 %961
        %v963 = vmul.f32 %v962, %v956
        %v964 = vadd.f32 %v963, 1e-05
        %v965 = vrsqrt.pop %v964
        %v966 = vmul.f32 %v965, %v964
        %v967 = vmul.f32 %v966, %v965
        %v968 = vmul.f32 0.5, %v967
        %v969 = vsub.f32 1.5, %v968
        %v970 = vmul.f32 %v965, %v969
        %vm971 = vweird.f32 %v964
        %vm972 = vweird.f32 %v965
        %vm973 = vmor %vm971, %vm972
        %v974 = vsel %vm973, %v965, %v970
        %v975 = vmul.f32 %v958, %v974
        %v976 = vld [vmem:[%s5] sm:$0x1]
        %v978 = vperm.slane %v976, 0
        %v980 = vmul.f32 %v975, %v978
        %v981 = vld [vmem:[%s6] sm:$0x1]
        %v983 = vperm.slane %v981, 0
        %v985 = vadd.f32 %v980, %v983
        %v986 = vld [vmem:[%s2] sm:$0xff]
        %v987 = vadd.f32 %v985, %v986
        %v988 = vld [vmem:[%s782] sm:$0xff]
        %v989 = vld [vmem:[%s782 + $0x8] sm:$0xff]
        %v990 = vld [vmem:[%s7] sm:$0xf]
        %v991 = vld [vmem:[%s7 + $0x4] sm:$0xf]
        %v992 = vld [vmem:[%s7 + $0x8] sm:$0xf]
        %v993 = vld [vmem:[%s7 + $0xc] sm:$0xf]
        %v994 = vld [vmem:[%s7 + $0x10] sm:$0xf]
        %v995 = vld [vmem:[%s7 + $0x14] sm:$0xf]
        %v996 = vld [vmem:[%s7 + $0x18] sm:$0xf]
        %v997 = vld [vmem:[%s7 + $0x1c] sm:$0xf]
        %v998 = vld [vmem:[%s7 + $0x20] sm:$0xf]
        %v999 = vld [vmem:[%s7 + $0x24] sm:$0xf]
        %v1000 = vld [vmem:[%s7 + $0x28] sm:$0xf]
        %v1001 = vld [vmem:[%s7 + $0x2c] sm:$0xf]
        %v1002 = vld [vmem:[%s7 + $0x30] sm:$0xf]
        %v1003 = vld [vmem:[%s7 + $0x34] sm:$0xf]
        %v1004 = vld [vmem:[%s7 + $0x38] sm:$0xf]
        %v1005 = vld [vmem:[%s7 + $0x3c] sm:$0xf]
        %v1006 = vld [vmem:[%s7 + $0x40] sm:$0xf]
        %v1007 = vld [vmem:[%s7 + $0x44] sm:$0xf]
        %v1008 = vld [vmem:[%s7 + $0x48] sm:$0xf]
        %v1009 = vld [vmem:[%s7 + $0x4c] sm:$0xf]
        %v1010 = vld [vmem:[%s7 + $0x50] sm:$0xf]
        %v1011 = vld [vmem:[%s7 + $0x54] sm:$0xf]
        %v1012 = vld [vmem:[%s7 + $0x58] sm:$0xf]
        %v1013 = vld [vmem:[%s7 + $0x5c] sm:$0xf]
        %v1014 = vld [vmem:[%s7 + $0x60] sm:$0xf]
        %v1015 = vld [vmem:[%s7 + $0x64] sm:$0xf]
        %v1016 = vld [vmem:[%s7 + $0x68] sm:$0xf]
        %v1017 = vld [vmem:[%s7 + $0x6c] sm:$0xf]
        %v1018 = vld [vmem:[%s7 + $0x70] sm:$0xf]
        %v1019 = vld [vmem:[%s7 + $0x74] sm:$0xf]
        %v1020 = vld [vmem:[%s7 + $0x78] sm:$0xf]
        %v1021 = vld [vmem:[%s7 + $0x7c] sm:$0xf]
        %v1022 = vpack.c.bf16 %v988, %v988
        %v1023 = vpack.c.bf16 %v989, %v989
        %v1024 = vld [vmem:[%s8] sm:$0x1]
        %v1026 = vperm.slane %v1024, 0
        %v1060 = vunpack.c.l.b16 %v990
        %v1061 = vunpack.c.l.b16 %v991
        %v1062 = vunpack.c.l.b16 %v992
        %v1063 = vunpack.c.l.b16 %v993
        %v1064 = vunpack.c.l.b16 %v994
        %v1065 = vunpack.c.l.b16 %v995
        %v1066 = vunpack.c.l.b16 %v996
        %v1067 = vunpack.c.l.b16 %v997
        %v1068 = vunpack.c.l.b16 %v998
        %v1069 = vunpack.c.l.b16 %v999
        %v1070 = vunpack.c.l.b16 %v1000
        %v1071 = vunpack.c.l.b16 %v1001
        %v1072 = vunpack.c.l.b16 %v1002
        %v1073 = vunpack.c.l.b16 %v1003
        %v1074 = vunpack.c.l.b16 %v1004
        %v1075 = vunpack.c.l.b16 %v1005
        %v1076 = vunpack.c.l.b16 %v1006
        %v1077 = vunpack.c.l.b16 %v1007
        %v1078 = vunpack.c.l.b16 %v1008
        %v1079 = vunpack.c.l.b16 %v1009
        %v1080 = vunpack.c.l.b16 %v1010
        %v1081 = vunpack.c.l.b16 %v1011
        %v1082 = vunpack.c.l.b16 %v1012
        %v1083 = vunpack.c.l.b16 %v1013
        %v1084 = vunpack.c.l.b16 %v1014
        %v1085 = vunpack.c.l.b16 %v1015
        %v1086 = vunpack.c.l.b16 %v1016
        %v1087 = vunpack.c.l.b16 %v1017
        %v1088 = vunpack.c.l.b16 %v1018
        %v1089 = vunpack.c.l.b16 %v1019
        %v1090 = vunpack.c.l.b16 %v1020
        %v1091 = vunpack.c.l.b16 %v1021
        %v1092 = vpack.c.b16 %v1061, %v1060
        %v1093 = vpack.c.b16 %v1063, %v1062
        %v1094 = vpack.c.b16 %v1065, %v1064
        %v1095 = vpack.c.b16 %v1067, %v1066
        %v1096 = vpack.c.b16 %v1069, %v1068
        %v1097 = vpack.c.b16 %v1071, %v1070
        %v1098 = vpack.c.b16 %v1073, %v1072
        %v1099 = vpack.c.b16 %v1075, %v1074
        %v1100 = vpack.c.b16 %v1077, %v1076
        %v1101 = vpack.c.b16 %v1079, %v1078
        %v1102 = vpack.c.b16 %v1081, %v1080
        %v1103 = vpack.c.b16 %v1083, %v1082
        %v1104 = vpack.c.b16 %v1085, %v1084
        %v1105 = vpack.c.b16 %v1087, %v1086
        %v1106 = vpack.c.b16 %v1089, %v1088
        %v1107 = vpack.c.b16 %v1091, %v1090
        %1124 = vmatpush.bf16.msra.mxu0 %v1099
        %1125 = vmatpush.bf16.msra.mxu0 %v1098
        %1126 = vmatpush.bf16.msra.mxu0 %v1097
        %1127 = vmatpush.bf16.msra.mxu0 %v1096
        %1128 = vmatpush.bf16.msra.mxu0 %v1095
        %1129 = vmatpush.bf16.msra.mxu0 %v1094
        %1130 = vmatpush.bf16.msra.mxu0 %v1093
        %1131 = vmatpush.bf16.msra.mxu0 %v1092
        %1132 = vmatmul.bf16.gmra.mxu0 %v1022
        %v1133 = vpop.f32.mrf.mxu0
        %v1134 = vadd.f32 %v1026, %v1133
        %v1135 = vpop.f32.mrf.mxu0
        %1136 = vdwg.mxu0
        %1137 = vmatpush.bf16.msra.mxu0 %v1107
        %1138 = vmatpush.bf16.msra.mxu0 %v1106
        %1139 = vmatpush.bf16.msra.mxu0 %v1105
        %1140 = vmatpush.bf16.msra.mxu0 %v1104
        %1141 = vmatpush.bf16.msra.mxu0 %v1103
        %1142 = vmatpush.bf16.msra.mxu0 %v1102
        %1143 = vmatpush.bf16.msra.mxu0 %v1101
        %1144 = vmatpush.bf16.msra.mxu0 %v1100
        %1145 = vmatmul.bf16.gmra.mxu0 %v1023
        %v1146 = vpop.f32.mrf.mxu0
        %v1147 = vadd.f32 %v1134, %v1146
        %v1148 = vpop.f32.mrf.mxu0
        %1149 = vdwg.mxu0
        %v1150 = vxor.u32 %v1147, 2147483648
        %v1151 = vmul.f32 %v1150, 1.442695
        %v1152 = vpow.pop %v1151
        %v1153 = vadd.f32 %v1152, 1.0
        %v1154 = vrcp.pop %v1153
        %v1155 = vmul.f32 %v1153, %v1154
        %v1156 = vsub.f32 1.0, %v1155
        %v1157 = vmul.f32 %v1154, %v1156
        %v1158 = vadd.f32 %v1154, %v1157
        %vm1159 = vweird.f32 %v1153
        %vm1160 = vweird.f32 %v1154
        %vm1161 = vmor %vm1159, %vm1160
        %v1162 = vsel %vm1161, %v1154, %v1158
        %v1163 = vand.u32 2147483647, %v1153
        %vm1164 = vcmp.eq.f32.partialorder %v1163, 8.507059e+37
        %v1165 = vand.u32 %v1153, 2147483648
        %v1166 = vor.u32 1.1754944e-38, %v1165
        %v1167 = vsel %vm1164, %v1166, %v1162
        %v1168 = vmul.f32 1.0, %v1167
        %v1169 = vmul.f32 %v1147, %v1168
        %v1170 = vld [vmem:[%s9] sm:$0xf]
        %v1171 = vld [vmem:[%s9 + $0x4] sm:$0xf]
        %v1172 = vld [vmem:[%s9 + $0x8] sm:$0xf]
        %v1173 = vld [vmem:[%s9 + $0xc] sm:$0xf]
        %v1174 = vpack.c.bf16 %v1169, %v1169
        %v1175 = vld [vmem:[%s10] sm:$0x1]
        %v1177 = vperm.slane %v1175, 0
        %v1183 = vunpack.c.l.b16 %v1170
        %v1184 = vunpack.c.l.b16 %v1171
        %v1185 = vunpack.c.l.b16 %v1172
        %v1186 = vunpack.c.l.b16 %v1173
        %v1187 = vpack.c.b16 %v1184, %v1183
        %v1188 = vpack.c.b16 %v1186, %v1185
        %v1192 = vsel %vm946, %v1174, 0
        %1194 = vmatpush.bf16.msra.mxu0 0
        %1195 = vmatpush.bf16.msra.mxu0 0
        %1196 = vmatpush.bf16.msra.mxu0 0
        %1197 = vmatpush.bf16.msra.mxu0 0
        %1198 = vmatpush.bf16.msra.mxu0 0
        %1199 = vmatpush.bf16.msra.mxu0 0
        %1200 = vmatpush.bf16.msra.mxu0 %v1188
        %1201 = vmatpush.bf16.msra.mxu0 %v1187
        %1202 = vmatmul.bf16.gmra.mxu0 %v1192
        %v1203 = vpop.f32.mrf.mxu0
        %v1204 = vadd.f32 %v1177, %v1203
        %v1205 = vpop.f32.mrf.mxu0
        %1206 = vdwg.mxu0
        %v1207 = vxor.u32 %v1204, 2147483648
        %v1208 = vmul.f32 %v1207, 1.442695
        %v1209 = vpow.pop %v1208
        %v1210 = vadd.f32 %v1209, 1.0
        %v1211 = vrcp.pop %v1210
        %v1212 = vmul.f32 %v1210, %v1211
        %v1213 = vsub.f32 1.0, %v1212
        %v1214 = vmul.f32 %v1211, %v1213
        %v1215 = vadd.f32 %v1211, %v1214
        %vm1216 = vweird.f32 %v1210
        %vm1217 = vweird.f32 %v1211
        %vm1218 = vmor %vm1216, %vm1217
        %v1219 = vsel %vm1218, %v1211, %v1215
        %v1220 = vand.u32 2147483647, %v1210
        %vm1221 = vcmp.eq.f32.partialorder %v1220, 8.507059e+37
        %v1222 = vand.u32 %v1210, 2147483648
        %v1223 = vor.u32 1.1754944e-38, %v1222
        %v1224 = vsel %vm1221, %v1223, %v1219
        %v1225 = vmul.f32 1.0, %v1224
        %v1226 = vmul.f32 %v1204, %v1225
        %v1227 = vlaneseq
        %v1228 = vand.u32 %v1227, 127
        %vm1229 = vcmp.ge.s32.totalorder %v1228, 0
        %vm1230 = vcmp.lt.s32.totalorder %v1228, 8
        %vm1231 = vmand %vm1229, %vm1230
        %v1232 = vsel %vm1231, 1, 0
        %v1233 = vcvt.s32.f32 %v1232
        %vm1234 = vcmp.ge.s32.totalorder %v1228, 8
        %vm1235 = vcmp.lt.s32.totalorder %v1228, 16
        %vm1236 = vmand %vm1234, %vm1235
        %v1237 = vsel %vm1236, 1, 0
        %v1238 = vcvt.s32.f32 %v1237
        %vm1239 = vcmp.ge.s32.totalorder %v1228, 16
        %vm1240 = vcmp.lt.s32.totalorder %v1228, 24
        %vm1241 = vmand %vm1239, %vm1240
        %v1242 = vsel %vm1241, 1, 0
        %v1243 = vcvt.s32.f32 %v1242
        %vm1244 = vcmp.ge.s32.totalorder %v1228, 24
        %vm1245 = vcmp.lt.s32.totalorder %v1228, 32
        %vm1246 = vmand %vm1244, %vm1245
        %v1247 = vsel %vm1246, 1, 0
        %v1248 = vcvt.s32.f32 %v1247
        %v1249 = vld [vmem:[%s11] sm:$0xf]
        %v1250 = vld [vmem:[%s11 + $0x4] sm:$0xf]
        %v1251 = vld [vmem:[%s11 + $0x8] sm:$0xf]
        %v1252 = vld [vmem:[%s11 + $0xc] sm:$0xf]
        %v1253 = vpack.c.bf16 %v1226, %v1226
        %v1254 = vld [vmem:[%s12] sm:$0x1]
        %v1256 = vperm.slane %v1254, 0
        %v1262 = vunpack.c.l.b16 %v1249
        %v1263 = vunpack.c.l.b16 %v1250
        %v1264 = vunpack.c.l.b16 %v1251
        %v1265 = vunpack.c.l.b16 %v1252
        %v1266 = vpack.c.b16 %v1263, %v1262
        %v1267 = vpack.c.b16 %v1265, %v1264
        %v1271 = vsel %vm946, %v1253, 0
        %1273 = vmatpush.bf16.msra.mxu0 0
        %1274 = vmatpush.bf16.msra.mxu0 0
        %1275 = vmatpush.bf16.msra.mxu0 0
        %1276 = vmatpush.bf16.msra.mxu0 0
        %1277 = vmatpush.bf16.msra.mxu0 0
        %1278 = vmatpush.bf16.msra.mxu0 0
        %1279 = vmatpush.bf16.msra.mxu0 %v1267
        %1280 = vmatpush.bf16.msra.mxu0 %v1266
        %1281 = vmatmul.bf16.gmra.mxu0 %v1271
        %v1282 = vpop.f32.mrf.mxu0
        %v1283 = vadd.f32 %v1256, %v1282
        %v1284 = vpop.f32.mrf.mxu0
        %1285 = vdwg.mxu0
        %s1286 = scalar_lea.vmem %s11, 16
        %v1287 = vld [vmem:[%s1286] sm:$0xf]
        %v1288 = vld [vmem:[%s1286 + $0x4] sm:$0xf]
        %v1289 = vld [vmem:[%s1286 + $0x8] sm:$0xf]
        %v1290 = vld [vmem:[%s1286 + $0xc] sm:$0xf]
        %s1291 = scalar_lea.vmem %s12, 1
        %v1292 = vld [vmem:[%s1291] sm:$0x1]
        %v1294 = vperm.slane %v1292, 0
        %v1300 = vunpack.c.l.b16 %v1287
        %v1301 = vunpack.c.l.b16 %v1288
        %v1302 = vunpack.c.l.b16 %v1289
        %v1303 = vunpack.c.l.b16 %v1290
        %v1304 = vpack.c.b16 %v1301, %v1300
        %v1305 = vpack.c.b16 %v1303, %v1302
        %1308 = vmatpush.bf16.msra.mxu0 0
        %1309 = vmatpush.bf16.msra.mxu0 0
        %1310 = vmatpush.bf16.msra.mxu0 0
        %1311 = vmatpush.bf16.msra.mxu0 0
        %1312 = vmatpush.bf16.msra.mxu0 0
        %1313 = vmatpush.bf16.msra.mxu0 0
        %1314 = vmatpush.bf16.msra.mxu0 %v1305
        %1315 = vmatpush.bf16.msra.mxu0 %v1304
        %1316 = vmatmul.bf16.gmra.mxu0 %v1271
        %v1317 = vpop.f32.mrf.mxu0
        %v1318 = vadd.f32 %v1294, %v1317
        %v1319 = vpop.f32.mrf.mxu0
        %1320 = vdwg.mxu0
        %s1321 = scalar_lea.vmem %s11, 32
        %v1322 = vld [vmem:[%s1321] sm:$0xf]
        %v1323 = vld [vmem:[%s1321 + $0x4] sm:$0xf]
        %v1324 = vld [vmem:[%s1321 + $0x8] sm:$0xf]
        %v1325 = vld [vmem:[%s1321 + $0xc] sm:$0xf]
        %s1326 = scalar_lea.vmem %s12, 2
        %v1327 = vld [vmem:[%s1326] sm:$0x1]
        %v1329 = vperm.slane %v1327, 0
        %v1335 = vunpack.c.l.b16 %v1322
        %v1336 = vunpack.c.l.b16 %v1323
        %v1337 = vunpack.c.l.b16 %v1324
        %v1338 = vunpack.c.l.b16 %v1325
        %v1339 = vpack.c.b16 %v1336, %v1335
        %v1340 = vpack.c.b16 %v1338, %v1337
        %1343 = vmatpush.bf16.msra.mxu0 0
        %1344 = vmatpush.bf16.msra.mxu0 0
        %1345 = vmatpush.bf16.msra.mxu0 0
        %1346 = vmatpush.bf16.msra.mxu0 0
        %1347 = vmatpush.bf16.msra.mxu0 0
        %1348 = vmatpush.bf16.msra.mxu0 0
        %1349 = vmatpush.bf16.msra.mxu0 %v1340
        %1350 = vmatpush.bf16.msra.mxu0 %v1339
        %1351 = vmatmul.bf16.gmra.mxu0 %v1271
        %v1352 = vpop.f32.mrf.mxu0
        %v1353 = vadd.f32 %v1329, %v1352
        %v1354 = vpop.f32.mrf.mxu0
        %1355 = vdwg.mxu0
        %s1356 = scalar_lea.vmem %s11, 48
        %v1357 = vld [vmem:[%s1356] sm:$0xf]
        %v1358 = vld [vmem:[%s1356 + $0x4] sm:$0xf]
        %v1359 = vld [vmem:[%s1356 + $0x8] sm:$0xf]
        %v1360 = vld [vmem:[%s1356 + $0xc] sm:$0xf]
        %s1361 = scalar_lea.vmem %s12, 3
        %v1362 = vld [vmem:[%s1361] sm:$0x1]
        %v1364 = vperm.slane %v1362, 0
        %v1370 = vunpack.c.l.b16 %v1357
        %v1371 = vunpack.c.l.b16 %v1358
        %v1372 = vunpack.c.l.b16 %v1359
        %v1373 = vunpack.c.l.b16 %v1360
        %v1374 = vpack.c.b16 %v1371, %v1370
        %v1375 = vpack.c.b16 %v1373, %v1372
        %1378 = vmatpush.bf16.msra.mxu0 0
        %1379 = vmatpush.bf16.msra.mxu0 0
        %1380 = vmatpush.bf16.msra.mxu0 0
        %1381 = vmatpush.bf16.msra.mxu0 0
        %1382 = vmatpush.bf16.msra.mxu0 0
        %1383 = vmatpush.bf16.msra.mxu0 0
        %1384 = vmatpush.bf16.msra.mxu0 %v1375
        %1385 = vmatpush.bf16.msra.mxu0 %v1374
        %1386 = vmatmul.bf16.gmra.mxu0 %v1271
        %v1387 = vpop.f32.mrf.mxu0
        %v1388 = vadd.f32 %v1364, %v1387
        %v1389 = vpop.f32.mrf.mxu0
        %1390 = vdwg.mxu0
        %s1391 = scalar_lea.vmem %s11, 64
        %v1392 = vld [vmem:[%s1391] sm:$0xf]
        %v1393 = vld [vmem:[%s1391 + $0x4] sm:$0xf]
        %v1394 = vld [vmem:[%s1391 + $0x8] sm:$0xf]
        %v1395 = vld [vmem:[%s1391 + $0xc] sm:$0xf]
        %s1396 = scalar_lea.vmem %s12, 4
        %v1397 = vld [vmem:[%s1396] sm:$0x1]
        %v1399 = vperm.slane %v1397, 0
        %v1405 = vunpack.c.l.b16 %v1392
        %v1406 = vunpack.c.l.b16 %v1393
        %v1407 = vunpack.c.l.b16 %v1394
        %v1408 = vunpack.c.l.b16 %v1395
        %v1409 = vpack.c.b16 %v1406, %v1405
        %v1410 = vpack.c.b16 %v1408, %v1407
        %1413 = vmatpush.bf16.msra.mxu0 0
        %1414 = vmatpush.bf16.msra.mxu0 0
        %1415 = vmatpush.bf16.msra.mxu0 0
        %1416 = vmatpush.bf16.msra.mxu0 0
        %1417 = vmatpush.bf16.msra.mxu0 0
        %1418 = vmatpush.bf16.msra.mxu0 0
        %1419 = vmatpush.bf16.msra.mxu0 %v1410
        %1420 = vmatpush.bf16.msra.mxu0 %v1409
        %1421 = vmatmul.bf16.gmra.mxu0 %v1271
        %v1422 = vpop.f32.mrf.mxu0
        %v1423 = vadd.f32 %v1399, %v1422
        %v1424 = vpop.f32.mrf.mxu0
        %1425 = vdwg.mxu0
        %s1426 = scalar_lea.vmem %s11, 80
        %v1427 = vld [vmem:[%s1426] sm:$0xf]
        %v1428 = vld [vmem:[%s1426 + $0x4] sm:$0xf]
        %v1429 = vld [vmem:[%s1426 + $0x8] sm:$0xf]
        %v1430 = vld [vmem:[%s1426 + $0xc] sm:$0xf]
        %s1431 = scalar_lea.vmem %s12, 5
        %v1432 = vld [vmem:[%s1431] sm:$0x1]
        %v1434 = vperm.slane %v1432, 0
        %v1440 = vunpack.c.l.b16 %v1427
        %v1441 = vunpack.c.l.b16 %v1428
        %v1442 = vunpack.c.l.b16 %v1429
        %v1443 = vunpack.c.l.b16 %v1430
        %v1444 = vpack.c.b16 %v1441, %v1440
        %v1445 = vpack.c.b16 %v1443, %v1442
        %1448 = vmatpush.bf16.msra.mxu0 0
        %1449 = vmatpush.bf16.msra.mxu0 0
        %1450 = vmatpush.bf16.msra.mxu0 0
        %1451 = vmatpush.bf16.msra.mxu0 0
        %1452 = vmatpush.bf16.msra.mxu0 0
        %1453 = vmatpush.bf16.msra.mxu0 0
        %1454 = vmatpush.bf16.msra.mxu0 %v1445
        %1455 = vmatpush.bf16.msra.mxu0 %v1444
        %1456 = vmatmul.bf16.gmra.mxu0 %v1271
        %v1457 = vpop.f32.mrf.mxu0
        %v1458 = vadd.f32 %v1434, %v1457
        %v1459 = vpop.f32.mrf.mxu0
        %1460 = vdwg.mxu0
        %v1461 = vsel %vm946, %v987, 0.0
        %1462 = vadd.xlane.f32.xlu0 %v1461
        %v1463 = vpop.xlane.xlu0 %1462
        %v1464 = vmul.f32 %v1463, %v956
        %v1465 = vsub.f32 %v987, %v1464
        %v1466 = vmul.f32 %v1465, %v1465
        %v1467 = vsel %vm946, %v1466, 0.0
        %1468 = vadd.xlane.f32.xlu0 %v1467
        %v1469 = vpop.xlane.xlu0 %1468
        %v1470 = vmul.f32 %v1469, %v956
        %v1471 = vadd.f32 %v1470, 1e-06
        %v1472 = vrsqrt.pop %v1471
        %v1473 = vmul.f32 %v1472, %v1471
        %v1474 = vmul.f32 %v1473, %v1472
        %v1475 = vmul.f32 0.5, %v1474
        %v1476 = vsub.f32 1.5, %v1475
        %v1477 = vmul.f32 %v1472, %v1476
        %vm1478 = vweird.f32 %v1471
        %vm1479 = vweird.f32 %v1472
        %vm1480 = vmor %vm1478, %vm1479
        %v1481 = vsel %vm1480, %v1472, %v1477
        %v1482 = vmul.f32 %v1465, %v1481
        %v1483 = vadd.f32 %v1318, 1.0
        %v1484 = vmul.f32 %v1482, %v1483
        %v1485 = vadd.f32 %v1484, %v1283
        %v1486 = vld [vmem:[%s13] sm:$0xf]
        %v1487 = vld [vmem:[%s13 + $0x4] sm:$0xf]
        %v1488 = vld [vmem:[%s13 + $0x8] sm:$0xf]
        %v1489 = vld [vmem:[%s13 + $0xc] sm:$0xf]
        %v1490 = vpack.c.bf16 %v1485, %v1485
        %v1491 = vld [vmem:[%s14] sm:$0x1]
        %v1493 = vperm.slane %v1491, 0
        %v1499 = vunpack.c.l.b16 %v1486
        %v1500 = vunpack.c.l.b16 %v1487
        %v1501 = vunpack.c.l.b16 %v1488
        %v1502 = vunpack.c.l.b16 %v1489
        %v1503 = vpack.c.b16 %v1500, %v1499
        %v1504 = vpack.c.b16 %v1502, %v1501
        %v1508 = vsel %vm946, %v1490, 0
        %1510 = vmatpush.bf16.msra.mxu0 0
        %1511 = vmatpush.bf16.msra.mxu0 0
        %1512 = vmatpush.bf16.msra.mxu0 0
        %1513 = vmatpush.bf16.msra.mxu0 0
        %1514 = vmatpush.bf16.msra.mxu0 0
        %1515 = vmatpush.bf16.msra.mxu0 0
        %1516 = vmatpush.bf16.msra.mxu0 %v1504
        %1517 = vmatpush.bf16.msra.mxu0 %v1503
        %1518 = vmatmul.bf16.gmra.mxu0 %v1508
        %v1519 = vpop.f32.mrf.mxu0
        %v1520 = vadd.f32 %v1493, %v1519
        %v1521 = vpop.f32.mrf.mxu0
        %1522 = vdwg.mxu0
        %v1523 = vld [vmem:[%s15] sm:$0xf]
        %v1524 = vld [vmem:[%s15 + $0x4] sm:$0xf]
        %v1525 = vld [vmem:[%s15 + $0x8] sm:$0xf]
        %v1526 = vld [vmem:[%s15 + $0xc] sm:$0xf]
        %v1527 = vld [vmem:[%s16] sm:$0x1]
        %v1529 = vperm.slane %v1527, 0
        %v1535 = vunpack.c.l.b16 %v1523
        %v1536 = vunpack.c.l.b16 %v1524
        %v1537 = vunpack.c.l.b16 %v1525
        %v1538 = vunpack.c.l.b16 %v1526
        %v1539 = vpack.c.b16 %v1536, %v1535
        %v1540 = vpack.c.b16 %v1538, %v1537
        %1543 = vmatpush.bf16.msra.mxu0 0
        %1544 = vmatpush.bf16.msra.mxu0 0
        %1545 = vmatpush.bf16.msra.mxu0 0
        %1546 = vmatpush.bf16.msra.mxu0 0
        %1547 = vmatpush.bf16.msra.mxu0 0
        %1548 = vmatpush.bf16.msra.mxu0 0
        %1549 = vmatpush.bf16.msra.mxu0 %v1540
        %1550 = vmatpush.bf16.msra.mxu0 %v1539
        %1551 = vmatmul.bf16.gmra.mxu0 %v1508
        %v1552 = vpop.f32.mrf.mxu0
        %v1553 = vadd.f32 %v1529, %v1552
        %v1554 = vpop.f32.mrf.mxu0
        %1555 = vdwg.mxu0
        %v1556 = vld [vmem:[%s17] sm:$0xf]
        %v1557 = vld [vmem:[%s17 + $0x4] sm:$0xf]
        %v1558 = vld [vmem:[%s17 + $0x8] sm:$0xf]
        %v1559 = vld [vmem:[%s17 + $0xc] sm:$0xf]
        %v1560 = vld [vmem:[%s18] sm:$0x1]
        %v1562 = vperm.slane %v1560, 0
        %v1568 = vunpack.c.l.b16 %v1556
        %v1569 = vunpack.c.l.b16 %v1557
        %v1570 = vunpack.c.l.b16 %v1558
        %v1571 = vunpack.c.l.b16 %v1559
        %v1572 = vpack.c.b16 %v1569, %v1568
        %v1573 = vpack.c.b16 %v1571, %v1570
        %1576 = vmatpush.bf16.msra.mxu0 0
        %1577 = vmatpush.bf16.msra.mxu0 0
        %1578 = vmatpush.bf16.msra.mxu0 0
        %1579 = vmatpush.bf16.msra.mxu0 0
        %1580 = vmatpush.bf16.msra.mxu0 0
        %1581 = vmatpush.bf16.msra.mxu0 0
        %1582 = vmatpush.bf16.msra.mxu0 %v1573
        %1583 = vmatpush.bf16.msra.mxu0 %v1572
        %1584 = vmatmul.bf16.gmra.mxu0 %v1508
        %v1585 = vpop.f32.mrf.mxu0
        %v1586 = vadd.f32 %v1562, %v1585
        %v1587 = vpop.f32.mrf.mxu0
        %1588 = vdwg.mxu0
        %v1589 = vpack.c.bf16 %v1553, %v1553
        %v1590 = vmul.f32 %v1520, %v1233
        %v1591 = vpack.c.bf16 %v1590, %v1590
        %v1593 = vsel %vm946, %v1591, 0
        %v1596 = vsel %vm946, %v1589, 0
        %1598 = vmatpush.bf16.xpose.msra.mxu0 0
        %1599 = vmatpush.bf16.xpose.msra.mxu0 0
        %1600 = vmatpush.bf16.xpose.msra.mxu0 0
        %1601 = vmatpush.bf16.xpose.msra.mxu0 0
        %1602 = vmatpush.bf16.xpose.msra.mxu0 0
        %1603 = vmatpush.bf16.xpose.msra.mxu0 0
        %1604 = vmatpush.bf16.xpose.msra.mxu0 0
        %1605 = vmatpush.bf16.xpose.msra.mxu0 %v1596
        %1606 = vmatmul.bf16.gmra.mxu0 %v1593
        %v1607 = vpop.f32.mrf.mxu0
        %v1608 = vadd.f32 0.0, %v1607
        %v1609 = vpop.f32.mrf.mxu0
        %1610 = vdwg.mxu0
        %v1611 = vmul.f32 %v1608, 0.35355338
        %vm1612 = vcmask 64512
        %v1613 = vsel %vm1612, %v1611, -inf
        %1614 = vmax.xlane.f32.xlu0 %v1613
        %v1615 = vpop.xlane.xlu0 %1614
        %v1616 = vsub.f32 %v1611, %v1615
        %v1617 = vmul.f32 %v1616, 1.442695
        %v1618 = vpow.pop %v1617
        %v1619 = vsel %vm1612, %v1618, 0.0
        %1620 = vadd.xlane.f32.xlu0 %v1619
        %v1621 = vpop.xlane.xlu0 %1620
        %v1622 = vrcp.pop %v1621
        %v1623 = vmul.f32 %v1618, %v1622
        %v1624 = vmul.f32 %v1586, %v1233
        %v1625 = vpack.c.bf16 %v1624, %v1624
        %v1626 = vpack.c.bf16 %v1623, %v1623
        %v1627 = vmul.f32 %v1520, %v1238
        %v1628 = vpack.c.bf16 %v1627, %v1627
        %v1630 = vsel %vm946, %v1628, 0
        %1632 = vmatpush.bf16.xpose.msra.mxu0 0
        %1633 = vmatpush.bf16.xpose.msra.mxu0 0
        %1634 = vmatpush.bf16.xpose.msra.mxu0 0
        %1635 = vmatpush.bf16.xpose.msra.mxu0 0
        %1636 = vmatpush.bf16.xpose.msra.mxu0 0
        %1637 = vmatpush.bf16.xpose.msra.mxu0 0
        %1638 = vmatpush.bf16.xpose.msra.mxu0 0
        %1639 = vmatpush.bf16.xpose.msra.mxu0 %v1596
        %1640 = vmatmul.bf16.gmra.mxu0 %v1630
        %v1641 = vpop.f32.mrf.mxu0
        %v1642 = vadd.f32 0.0, %v1641
        %v1643 = vpop.f32.mrf.mxu0
        %1644 = vdwg.mxu0
        %v1645 = vmul.f32 %v1642, 0.35355338
        %v1646 = vsel %vm1612, %v1645, -inf
        %1647 = vmax.xlane.f32.xlu0 %v1646
        %v1648 = vpop.xlane.xlu0 %1647
        %v1649 = vsub.f32 %v1645, %v1648
        %v1650 = vmul.f32 %v1649, 1.442695
        %v1651 = vpow.pop %v1650
        %v1652 = vsel %vm1612, %v1651, 0.0
        %1653 = vadd.xlane.f32.xlu0 %v1652
        %v1654 = vpop.xlane.xlu0 %1653
        %v1655 = vrcp.pop %v1654
        %v1656 = vmul.f32 %v1651, %v1655
        %v1657 = vmul.f32 %v1586, %v1238
        %v1658 = vpack.c.bf16 %v1657, %v1657
        %v1659 = vpack.c.bf16 %v1656, %v1656
        %v1661 = vsel %vm1612, %v1659, 0
        %vm1663 = vcmask 1043456
        %v1665 = vsel %vm1663, %v1658, 0
        %1667 = vmatpush.bf16.msra.mxu0 0
        %1668 = vmatpush.bf16.msra.mxu0 0
        %1669 = vmatpush.bf16.msra.mxu0 0
        %1670 = vmatpush.bf16.msra.mxu0 0
        %1671 = vmatpush.bf16.msra.mxu0 0
        %1672 = vmatpush.bf16.msra.mxu0 0
        %1673 = vmatpush.bf16.msra.mxu0 0
        %1674 = vmatpush.bf16.msra.mxu0 %v1665
        %1675 = vmatmul.bf16.gmra.mxu0 %v1661
        %v1676 = vpop.f32.mrf.mxu0
        %v1677 = vadd.f32 0.0, %v1676
        %v1678 = vpop.f32.mrf.mxu0
        %1679 = vdwg.mxu0
        %v1681 = vsel %vm1612, %v1626, 0
        %v1684 = vsel %vm1663, %v1625, 0
        %1686 = vmatpush.bf16.msra.mxu0 0
        %1687 = vmatpush.bf16.msra.mxu0 0
        %1688 = vmatpush.bf16.msra.mxu0 0
        %1689 = vmatpush.bf16.msra.mxu0 0
        %1690 = vmatpush.bf16.msra.mxu0 0
        %1691 = vmatpush.bf16.msra.mxu0 0
        %1692 = vmatpush.bf16.msra.mxu0 0
        %1693 = vmatpush.bf16.msra.mxu0 %v1684
        %1694 = vmatmul.bf16.gmra.mxu0 %v1681
        %v1695 = vpop.f32.mrf.mxu0
        %v1696 = vadd.f32 %v1677, %v1695
        %v1697 = vpop.f32.mrf.mxu0
        %1698 = vdwg.mxu0
        %v1699 = vmul.f32 %v1520, %v1243
        %v1700 = vpack.c.bf16 %v1699, %v1699
        %v1702 = vsel %vm946, %v1700, 0
        %1704 = vmatpush.bf16.xpose.msra.mxu0 0
        %1705 = vmatpush.bf16.xpose.msra.mxu0 0
        %1706 = vmatpush.bf16.xpose.msra.mxu0 0
        %1707 = vmatpush.bf16.xpose.msra.mxu0 0
        %1708 = vmatpush.bf16.xpose.msra.mxu0 0
        %1709 = vmatpush.bf16.xpose.msra.mxu0 0
        %1710 = vmatpush.bf16.xpose.msra.mxu0 0
        %1711 = vmatpush.bf16.xpose.msra.mxu0 %v1596
        %1712 = vmatmul.bf16.gmra.mxu0 %v1702
        %v1713 = vpop.f32.mrf.mxu0
        %v1714 = vadd.f32 0.0, %v1713
        %v1715 = vpop.f32.mrf.mxu0
        %1716 = vdwg.mxu0
        %v1717 = vmul.f32 %v1714, 0.35355338
        %v1718 = vsel %vm1612, %v1717, -inf
        %1719 = vmax.xlane.f32.xlu0 %v1718
        %v1720 = vpop.xlane.xlu0 %1719
        %v1721 = vsub.f32 %v1717, %v1720
        %v1722 = vmul.f32 %v1721, 1.442695
        %v1723 = vpow.pop %v1722
        %v1724 = vsel %vm1612, %v1723, 0.0
        %1725 = vadd.xlane.f32.xlu0 %v1724
        %v1726 = vpop.xlane.xlu0 %1725
        %v1727 = vrcp.pop %v1726
        %v1728 = vmul.f32 %v1723, %v1727
        %v1729 = vmul.f32 %v1586, %v1243
        %v1730 = vpack.c.bf16 %v1729, %v1729
        %v1731 = vpack.c.bf16 %v1728, %v1728
        %v1733 = vsel %vm1612, %v1731, 0
        %v1736 = vsel %vm1663, %v1730, 0
        %1738 = vmatpush.bf16.msra.mxu0 0
        %1739 = vmatpush.bf16.msra.mxu0 0
        %1740 = vmatpush.bf16.msra.mxu0 0
        %1741 = vmatpush.bf16.msra.mxu0 0
        %1742 = vmatpush.bf16.msra.mxu0 0
        %1743 = vmatpush.bf16.msra.mxu0 0
        %1744 = vmatpush.bf16.msra.mxu0 0
        %1745 = vmatpush.bf16.msra.mxu0 %v1736
        %1746 = vmatmul.bf16.gmra.mxu0 %v1733
        %v1747 = vpop.f32.mrf.mxu0
        %v1748 = vadd.f32 0.0, %v1747
        %v1749 = vpop.f32.mrf.mxu0
        %1750 = vdwg.mxu0
        %v1751 = vadd.f32 %v1696, %v1748
        %v1752 = vmul.f32 %v1520, %v1248
        %v1753 = vpack.c.bf16 %v1752, %v1752
        %v1755 = vsel %vm946, %v1753, 0
        %1757 = vmatpush.bf16.xpose.msra.mxu0 0
        %1758 = vmatpush.bf16.xpose.msra.mxu0 0
        %1759 = vmatpush.bf16.xpose.msra.mxu0 0
        %1760 = vmatpush.bf16.xpose.msra.mxu0 0
        %1761 = vmatpush.bf16.xpose.msra.mxu0 0
        %1762 = vmatpush.bf16.xpose.msra.mxu0 0
        %1763 = vmatpush.bf16.xpose.msra.mxu0 0
        %1764 = vmatpush.bf16.xpose.msra.mxu0 %v1596
        %1765 = vmatmul.bf16.gmra.mxu0 %v1755
        %v1766 = vpop.f32.mrf.mxu0
        %v1767 = vadd.f32 0.0, %v1766
        %v1768 = vpop.f32.mrf.mxu0
        %1769 = vdwg.mxu0
        %v1770 = vmul.f32 %v1767, 0.35355338
        %v1771 = vsel %vm1612, %v1770, -inf
        %1772 = vmax.xlane.f32.xlu0 %v1771
        %v1773 = vpop.xlane.xlu0 %1772
        %v1774 = vsub.f32 %v1770, %v1773
        %v1775 = vmul.f32 %v1774, 1.442695
        %v1776 = vpow.pop %v1775
        %v1777 = vsel %vm1612, %v1776, 0.0
        %1778 = vadd.xlane.f32.xlu0 %v1777
        %v1779 = vpop.xlane.xlu0 %1778
        %v1780 = vrcp.pop %v1779
        %v1781 = vmul.f32 %v1776, %v1780
        %v1782 = vmul.f32 %v1586, %v1248
        %v1783 = vpack.c.bf16 %v1782, %v1782
        %v1784 = vpack.c.bf16 %v1781, %v1781
        %v1786 = vsel %vm1612, %v1784, 0
        %v1789 = vsel %vm1663, %v1783, 0
        %1791 = vmatpush.bf16.msra.mxu0 0
        %1792 = vmatpush.bf16.msra.mxu0 0
        %1793 = vmatpush.bf16.msra.mxu0 0
        %1794 = vmatpush.bf16.msra.mxu0 0
        %1795 = vmatpush.bf16.msra.mxu0 0
        %1796 = vmatpush.bf16.msra.mxu0 0
        %1797 = vmatpush.bf16.msra.mxu0 0
        %1798 = vmatpush.bf16.msra.mxu0 %v1789
        %1799 = vmatmul.bf16.gmra.mxu0 %v1786
        %v1800 = vpop.f32.mrf.mxu0
        %v1801 = vadd.f32 0.0, %v1800
        %v1802 = vpop.f32.mrf.mxu0
        %1803 = vdwg.mxu0
        %v1804 = vadd.f32 %v1751, %v1801
        %v1805 = vld [vmem:[%s19] sm:$0xf]
        %v1806 = vld [vmem:[%s19 + $0x4] sm:$0xf]
        %v1807 = vld [vmem:[%s19 + $0x8] sm:$0xf]
        %v1808 = vld [vmem:[%s19 + $0xc] sm:$0xf]
        %v1809 = vpack.c.bf16 %v1804, %v1804
        %v1810 = vld [vmem:[%s20] sm:$0x1]
        %v1812 = vperm.slane %v1810, 0
        %v1818 = vunpack.c.l.b16 %v1805
        %v1819 = vunpack.c.l.b16 %v1806
        %v1820 = vunpack.c.l.b16 %v1807
        %v1821 = vunpack.c.l.b16 %v1808
        %v1822 = vpack.c.b16 %v1819, %v1818
        %v1823 = vpack.c.b16 %v1821, %v1820
        %v1827 = vsel %vm946, %v1809, 0
        %1829 = vmatpush.bf16.msra.mxu0 0
        %1830 = vmatpush.bf16.msra.mxu0 0
        %1831 = vmatpush.bf16.msra.mxu0 0
        %1832 = vmatpush.bf16.msra.mxu0 0
        %1833 = vmatpush.bf16.msra.mxu0 0
        %1834 = vmatpush.bf16.msra.mxu0 0
        %1835 = vmatpush.bf16.msra.mxu0 %v1823
        %1836 = vmatpush.bf16.msra.mxu0 %v1822
        %1837 = vmatmul.bf16.gmra.mxu0 %v1827
        %v1838 = vpop.f32.mrf.mxu0
        %v1839 = vadd.f32 %v1812, %v1838
        %v1840 = vpop.f32.mrf.mxu0
        %1841 = vdwg.mxu0
        %v1842 = vmul.f32 %v1353, %v1839
        %v1843 = vadd.f32 %v987, %v1842
        %v1844 = vsel %vm946, %v1843, 0.0
        %1845 = vadd.xlane.f32.xlu0 %v1844
        %v1846 = vpop.xlane.xlu0 %1845
        %v1847 = vmul.f32 %v1846, %v956
        %v1848 = vsub.f32 %v1843, %v1847
        %v1849 = vmul.f32 %v1848, %v1848
        %v1850 = vsel %vm946, %v1849, 0.0
        %1851 = vadd.xlane.f32.xlu0 %v1850
        %v1852 = vpop.xlane.xlu0 %1851
        %v1853 = vmul.f32 %v1852, %v956
        %v1854 = vadd.f32 %v1853, 1e-06
        %v1855 = vrsqrt.pop %v1854
        %v1856 = vmul.f32 %v1855, %v1854
        %v1857 = vmul.f32 %v1856, %v1855
        %v1858 = vmul.f32 0.5, %v1857
        %v1859 = vsub.f32 1.5, %v1858
        %v1860 = vmul.f32 %v1855, %v1859
        %vm1861 = vweird.f32 %v1854
        %vm1862 = vweird.f32 %v1855
        %vm1863 = vmor %vm1861, %vm1862
        %v1864 = vsel %vm1863, %v1855, %v1860
        %v1865 = vmul.f32 %v1848, %v1864
        %v1866 = vadd.f32 %v1423, 1.0
        %v1867 = vmul.f32 %v1865, %v1866
        %v1868 = vadd.f32 %v1867, %v1388
        %v1869 = vld [vmem:[%s21] sm:$0xf]
        %v1870 = vld [vmem:[%s21 + $0x4] sm:$0xf]
        %v1871 = vld [vmem:[%s21 + $0x8] sm:$0xf]
        %v1872 = vld [vmem:[%s21 + $0xc] sm:$0xf]
        %v1873 = vpack.c.bf16 %v1868, %v1868
        %v1874 = vld [vmem:[%s22] sm:$0x1]
        %v1876 = vperm.slane %v1874, 0
        %v1882 = vunpack.c.l.b16 %v1869
        %v1883 = vunpack.c.l.b16 %v1870
        %v1884 = vunpack.c.l.b16 %v1871
        %v1885 = vunpack.c.l.b16 %v1872
        %v1886 = vpack.c.b16 %v1883, %v1882
        %v1887 = vpack.c.b16 %v1885, %v1884
        %v1891 = vsel %vm946, %v1873, 0
        %1893 = vmatpush.bf16.msra.mxu0 0
        %1894 = vmatpush.bf16.msra.mxu0 0
        %1895 = vmatpush.bf16.msra.mxu0 0
        %1896 = vmatpush.bf16.msra.mxu0 0
        %1897 = vmatpush.bf16.msra.mxu0 0
        %1898 = vmatpush.bf16.msra.mxu0 0
        %1899 = vmatpush.bf16.msra.mxu0 %v1887
        %1900 = vmatpush.bf16.msra.mxu0 %v1886
        %1901 = vmatmul.bf16.gmra.mxu0 %v1891
        %v1902 = vpop.f32.mrf.mxu0
        %v1903 = vadd.f32 %v1876, %v1902
        %v1904 = vpop.f32.mrf.mxu0
        %1905 = vdwg.mxu0
        %v1906 = vmul.f32 %v1903, 0.5
        %v1907 = vmul.f32 %v1903, 0.044715
        %v1908 = vmul.f32 %v1907, %v1903
        %v1909 = vmul.f32 %v1908, %v1903
        %v1910 = vadd.f32 %v1903, %v1909
        %v1911 = vmul.f32 %v1910, 0.7978846
        %v1912 = vtanh.pop %v1911
        %v1913 = vadd.f32 %v1912, 1.0
        %v1914 = vmul.f32 %v1906, %v1913
        %v1915 = vld [vmem:[%s23] sm:$0xf]
        %v1916 = vld [vmem:[%s23 + $0x4] sm:$0xf]
        %v1917 = vld [vmem:[%s23 + $0x8] sm:$0xf]
        %v1918 = vld [vmem:[%s23 + $0xc] sm:$0xf]
        %v1919 = vld [vmem:[%s23 + $0x10] sm:$0xf]
        %v1920 = vld [vmem:[%s23 + $0x14] sm:$0xf]
        %v1921 = vld [vmem:[%s23 + $0x18] sm:$0xf]
        %v1922 = vld [vmem:[%s23 + $0x1c] sm:$0xf]
        %v1923 = vld [vmem:[%s23 + $0x20] sm:$0xf]
        %v1924 = vld [vmem:[%s23 + $0x24] sm:$0xf]
        %v1925 = vld [vmem:[%s23 + $0x28] sm:$0xf]
        %v1926 = vld [vmem:[%s23 + $0x2c] sm:$0xf]
        %v1927 = vld [vmem:[%s23 + $0x30] sm:$0xf]
        %v1928 = vld [vmem:[%s23 + $0x34] sm:$0xf]
        %v1929 = vld [vmem:[%s23 + $0x38] sm:$0xf]
        %v1930 = vld [vmem:[%s23 + $0x3c] sm:$0xf]
        %v1931 = vpack.c.bf16 %v1914, %v1914
        %v1932 = vld [vmem:[%s24] sm:$0x1]
        %v1934 = vperm.slane %v1932, 0
        %v1952 = vunpack.c.l.b16 %v1915
        %v1953 = vunpack.c.l.b16 %v1916
        %v1954 = vunpack.c.l.b16 %v1917
        %v1955 = vunpack.c.l.b16 %v1918
        %v1956 = vunpack.c.l.b16 %v1919
        %v1957 = vunpack.c.l.b16 %v1920
        %v1958 = vunpack.c.l.b16 %v1921
        %v1959 = vunpack.c.l.b16 %v1922
        %v1960 = vunpack.c.l.b16 %v1923
        %v1961 = vunpack.c.l.b16 %v1924
        %v1962 = vunpack.c.l.b16 %v1925
        %v1963 = vunpack.c.l.b16 %v1926
        %v1964 = vunpack.c.l.b16 %v1927
        %v1965 = vunpack.c.l.b16 %v1928
        %v1966 = vunpack.c.l.b16 %v1929
        %v1967 = vunpack.c.l.b16 %v1930
        %v1968 = vpack.c.b16 %v1953, %v1952
        %v1969 = vpack.c.b16 %v1955, %v1954
        %v1970 = vpack.c.b16 %v1957, %v1956
        %v1971 = vpack.c.b16 %v1959, %v1958
        %v1972 = vpack.c.b16 %v1961, %v1960
        %v1973 = vpack.c.b16 %v1963, %v1962
        %v1974 = vpack.c.b16 %v1965, %v1964
        %v1975 = vpack.c.b16 %v1967, %v1966
        %1984 = vmatpush.bf16.msra.mxu0 %v1975
        %1985 = vmatpush.bf16.msra.mxu0 %v1974
        %1986 = vmatpush.bf16.msra.mxu0 %v1973
        %1987 = vmatpush.bf16.msra.mxu0 %v1972
        %1988 = vmatpush.bf16.msra.mxu0 %v1971
        %1989 = vmatpush.bf16.msra.mxu0 %v1970
        %1990 = vmatpush.bf16.msra.mxu0 %v1969
        %1991 = vmatpush.bf16.msra.mxu0 %v1968
        %1992 = vmatmul.bf16.gmra.mxu0 %v1931
        %v1993 = vpop.f32.mrf.mxu0
        %v1994 = vadd.f32 %v1934, %v1993
        %v1995 = vpop.f32.mrf.mxu0
        %1996 = vdwg.mxu0
        %v1997 = vmul.f32 %v1458, %v1994
        %v1998 = vadd.f32 %v1843, %v1997
        %s1999 = scalar_lea.vmem %s11, 96
        %v2000 = vld [vmem:[%s1999] sm:$0xf]
        %v2001 = vld [vmem:[%s1999 + $0x4] sm:$0xf]
        %v2002 = vld [vmem:[%s1999 + $0x8] sm:$0xf]
        %v2003 = vld [vmem:[%s1999 + $0xc] sm:$0xf]
        %s2004 = scalar_lea.vmem %s12, 6
        %v2005 = vld [vmem:[%s2004] sm:$0x1]
        %v2007 = vperm.slane %v2005, 0
        %v2013 = vunpack.c.l.b16 %v2000
        %v2014 = vunpack.c.l.b16 %v2001
        %v2015 = vunpack.c.l.b16 %v2002
        %v2016 = vunpack.c.l.b16 %v2003
        %v2017 = vpack.c.b16 %v2014, %v2013
        %v2018 = vpack.c.b16 %v2016, %v2015
        %2021 = vmatpush.bf16.msra.mxu0 0
        %2022 = vmatpush.bf16.msra.mxu0 0
        %2023 = vmatpush.bf16.msra.mxu0 0
        %2024 = vmatpush.bf16.msra.mxu0 0
        %2025 = vmatpush.bf16.msra.mxu0 0
        %2026 = vmatpush.bf16.msra.mxu0 0
        %2027 = vmatpush.bf16.msra.mxu0 %v2018
        %2028 = vmatpush.bf16.msra.mxu0 %v2017
        %2029 = vmatmul.bf16.gmra.mxu0 %v1271
        %v2030 = vpop.f32.mrf.mxu0
        %v2031 = vadd.f32 %v2007, %v2030
        %v2032 = vpop.f32.mrf.mxu0
        %2033 = vdwg.mxu0
        %s2034 = scalar_lea.vmem %s11, 112
        %v2035 = vld [vmem:[%s2034] sm:$0xf]
        %v2036 = vld [vmem:[%s2034 + $0x4] sm:$0xf]
        %v2037 = vld [vmem:[%s2034 + $0x8] sm:$0xf]
        %v2038 = vld [vmem:[%s2034 + $0xc] sm:$0xf]
        %s2039 = scalar_lea.vmem %s12, 7
        %v2040 = vld [vmem:[%s2039] sm:$0x1]
        %v2042 = vperm.slane %v2040, 0
        %v2048 = vunpack.c.l.b16 %v2035
        %v2049 = vunpack.c.l.b16 %v2036
        %v2050 = vunpack.c.l.b16 %v2037
        %v2051 = vunpack.c.l.b16 %v2038
        %v2052 = vpack.c.b16 %v2049, %v2048
        %v2053 = vpack.c.b16 %v2051, %v2050
        %2056 = vmatpush.bf16.msra.mxu0 0
        %2057 = vmatpush.bf16.msra.mxu0 0
        %2058 = vmatpush.bf16.msra.mxu0 0
        %2059 = vmatpush.bf16.msra.mxu0 0
        %2060 = vmatpush.bf16.msra.mxu0 0
        %2061 = vmatpush.bf16.msra.mxu0 0
        %2062 = vmatpush.bf16.msra.mxu0 %v2053
        %2063 = vmatpush.bf16.msra.mxu0 %v2052
        %2064 = vmatmul.bf16.gmra.mxu0 %v1271
        %v2065 = vpop.f32.mrf.mxu0
        %v2066 = vadd.f32 %v2042, %v2065
        %v2067 = vpop.f32.mrf.mxu0
        %2068 = vdwg.mxu0
        %s2069 = scalar_lea.vmem %s11, 128
        %v2070 = vld [vmem:[%s2069] sm:$0xf]
        %v2071 = vld [vmem:[%s2069 + $0x4] sm:$0xf]
        %v2072 = vld [vmem:[%s2069 + $0x8] sm:$0xf]
        %v2073 = vld [vmem:[%s2069 + $0xc] sm:$0xf]
        %s2074 = scalar_lea.vmem %s12, 8
        %v2075 = vld [vmem:[%s2074] sm:$0x1]
        %v2077 = vperm.slane %v2075, 0
        %v2083 = vunpack.c.l.b16 %v2070
        %v2084 = vunpack.c.l.b16 %v2071
        %v2085 = vunpack.c.l.b16 %v2072
        %v2086 = vunpack.c.l.b16 %v2073
        %v2087 = vpack.c.b16 %v2084, %v2083
        %v2088 = vpack.c.b16 %v2086, %v2085
        %2091 = vmatpush.bf16.msra.mxu0 0
        %2092 = vmatpush.bf16.msra.mxu0 0
        %2093 = vmatpush.bf16.msra.mxu0 0
        %2094 = vmatpush.bf16.msra.mxu0 0
        %2095 = vmatpush.bf16.msra.mxu0 0
        %2096 = vmatpush.bf16.msra.mxu0 0
        %2097 = vmatpush.bf16.msra.mxu0 %v2088
        %2098 = vmatpush.bf16.msra.mxu0 %v2087
        %2099 = vmatmul.bf16.gmra.mxu0 %v1271
        %v2100 = vpop.f32.mrf.mxu0
        %v2101 = vadd.f32 %v2077, %v2100
        %v2102 = vpop.f32.mrf.mxu0
        %2103 = vdwg.mxu0
        %s2104 = scalar_lea.vmem %s11, 144
        %v2105 = vld [vmem:[%s2104] sm:$0xf]
        %v2106 = vld [vmem:[%s2104 + $0x4] sm:$0xf]
        %v2107 = vld [vmem:[%s2104 + $0x8] sm:$0xf]
        %v2108 = vld [vmem:[%s2104 + $0xc] sm:$0xf]
        %s2109 = scalar_lea.vmem %s12, 9
        %v2110 = vld [vmem:[%s2109] sm:$0x1]
        %v2112 = vperm.slane %v2110, 0
        %v2118 = vunpack.c.l.b16 %v2105
        %v2119 = vunpack.c.l.b16 %v2106
        %v2120 = vunpack.c.l.b16 %v2107
        %v2121 = vunpack.c.l.b16 %v2108
        %v2122 = vpack.c.b16 %v2119, %v2118
        %v2123 = vpack.c.b16 %v2121, %v2120
        %2126 = vmatpush.bf16.msra.mxu0 0
        %2127 = vmatpush.bf16.msra.mxu0 0
        %2128 = vmatpush.bf16.msra.mxu0 0
        %2129 = vmatpush.bf16.msra.mxu0 0
        %2130 = vmatpush.bf16.msra.mxu0 0
        %2131 = vmatpush.bf16.msra.mxu0 0
        %2132 = vmatpush.bf16.msra.mxu0 %v2123
        %2133 = vmatpush.bf16.msra.mxu0 %v2122
        %2134 = vmatmul.bf16.gmra.mxu0 %v1271
        %v2135 = vpop.f32.mrf.mxu0
        %v2136 = vadd.f32 %v2112, %v2135
        %v2137 = vpop.f32.mrf.mxu0
        %2138 = vdwg.mxu0
        %s2139 = scalar_lea.vmem %s11, 160
        %v2140 = vld [vmem:[%s2139] sm:$0xf]
        %v2141 = vld [vmem:[%s2139 + $0x4] sm:$0xf]
        %v2142 = vld [vmem:[%s2139 + $0x8] sm:$0xf]
        %v2143 = vld [vmem:[%s2139 + $0xc] sm:$0xf]
        %s2144 = scalar_lea.vmem %s12, 10
        %v2145 = vld [vmem:[%s2144] sm:$0x1]
        %v2147 = vperm.slane %v2145, 0
        %v2153 = vunpack.c.l.b16 %v2140
        %v2154 = vunpack.c.l.b16 %v2141
        %v2155 = vunpack.c.l.b16 %v2142
        %v2156 = vunpack.c.l.b16 %v2143
        %v2157 = vpack.c.b16 %v2154, %v2153
        %v2158 = vpack.c.b16 %v2156, %v2155
        %2161 = vmatpush.bf16.msra.mxu0 0
        %2162 = vmatpush.bf16.msra.mxu0 0
        %2163 = vmatpush.bf16.msra.mxu0 0
        %2164 = vmatpush.bf16.msra.mxu0 0
        %2165 = vmatpush.bf16.msra.mxu0 0
        %2166 = vmatpush.bf16.msra.mxu0 0
        %2167 = vmatpush.bf16.msra.mxu0 %v2158
        %2168 = vmatpush.bf16.msra.mxu0 %v2157
        %2169 = vmatmul.bf16.gmra.mxu0 %v1271
        %v2170 = vpop.f32.mrf.mxu0
        %v2171 = vadd.f32 %v2147, %v2170
        %v2172 = vpop.f32.mrf.mxu0
        %2173 = vdwg.mxu0
        %s2174 = scalar_lea.vmem %s11, 176
        %v2175 = vld [vmem:[%s2174] sm:$0xf]
        %v2176 = vld [vmem:[%s2174 + $0x4] sm:$0xf]
        %v2177 = vld [vmem:[%s2174 + $0x8] sm:$0xf]
        %v2178 = vld [vmem:[%s2174 + $0xc] sm:$0xf]
        %s2179 = scalar_lea.vmem %s12, 11
        %v2180 = vld [vmem:[%s2179] sm:$0x1]
        %v2182 = vperm.slane %v2180, 0
        %v2188 = vunpack.c.l.b16 %v2175
        %v2189 = vunpack.c.l.b16 %v2176
        %v2190 = vunpack.c.l.b16 %v2177
        %v2191 = vunpack.c.l.b16 %v2178
        %v2192 = vpack.c.b16 %v2189, %v2188
        %v2193 = vpack.c.b16 %v2191, %v2190
        %2196 = vmatpush.bf16.msra.mxu0 0
        %2197 = vmatpush.bf16.msra.mxu0 0
        %2198 = vmatpush.bf16.msra.mxu0 0
        %2199 = vmatpush.bf16.msra.mxu0 0
        %2200 = vmatpush.bf16.msra.mxu0 0
        %2201 = vmatpush.bf16.msra.mxu0 0
        %2202 = vmatpush.bf16.msra.mxu0 %v2193
        %2203 = vmatpush.bf16.msra.mxu0 %v2192
        %2204 = vmatmul.bf16.gmra.mxu0 %v1271
        %v2205 = vpop.f32.mrf.mxu0
        %v2206 = vadd.f32 %v2182, %v2205
        %v2207 = vpop.f32.mrf.mxu0
        %2208 = vdwg.mxu0
        %v2209 = vsel %vm946, %v1998, 0.0
        %2210 = vadd.xlane.f32.xlu0 %v2209
        %v2211 = vpop.xlane.xlu0 %2210
        %v2212 = vmul.f32 %v2211, %v956
        %v2213 = vsub.f32 %v1998, %v2212
        %v2214 = vmul.f32 %v2213, %v2213
        %v2215 = vsel %vm946, %v2214, 0.0
        %2216 = vadd.xlane.f32.xlu0 %v2215
        %v2217 = vpop.xlane.xlu0 %2216
        %v2218 = vmul.f32 %v2217, %v956
        %v2219 = vadd.f32 %v2218, 1e-06
        %v2220 = vrsqrt.pop %v2219
        %v2221 = vmul.f32 %v2220, %v2219
        %v2222 = vmul.f32 %v2221, %v2220
        %v2223 = vmul.f32 0.5, %v2222
        %v2224 = vsub.f32 1.5, %v2223
        %v2225 = vmul.f32 %v2220, %v2224
        %vm2226 = vweird.f32 %v2219
        %vm2227 = vweird.f32 %v2220
        %vm2228 = vmor %vm2226, %vm2227
        %v2229 = vsel %vm2228, %v2220, %v2225
        %v2230 = vmul.f32 %v2213, %v2229
        %v2231 = vadd.f32 %v2066, 1.0
        %v2232 = vmul.f32 %v2230, %v2231
        %v2233 = vadd.f32 %v2232, %v2031
        %s2234 = scalar_lea.vmem %s13, 16
        %v2235 = vld [vmem:[%s2234] sm:$0xf]
        %v2236 = vld [vmem:[%s2234 + $0x4] sm:$0xf]
        %v2237 = vld [vmem:[%s2234 + $0x8] sm:$0xf]
        %v2238 = vld [vmem:[%s2234 + $0xc] sm:$0xf]
        %v2239 = vpack.c.bf16 %v2233, %v2233
        %s2240 = scalar_lea.vmem %s14, 1
        %v2241 = vld [vmem:[%s2240] sm:$0x1]
        %v2243 = vperm.slane %v2241, 0
        %v2249 = vunpack.c.l.b16 %v2235
        %v2250 = vunpack.c.l.b16 %v2236
        %v2251 = vunpack.c.l.b16 %v2237
        %v2252 = vunpack.c.l.b16 %v2238
        %v2253 = vpack.c.b16 %v2250, %v2249
        %v2254 = vpack.c.b16 %v2252, %v2251
        %v2258 = vsel %vm946, %v2239, 0
        %2260 = vmatpush.bf16.msra.mxu0 0
        %2261 = vmatpush.bf16.msra.mxu0 0
        %2262 = vmatpush.bf16.msra.mxu0 0
        %2263 = vmatpush.bf16.msra.mxu0 0
        %2264 = vmatpush.bf16.msra.mxu0 0
        %2265 = vmatpush.bf16.msra.mxu0 0
        %2266 = vmatpush.bf16.msra.mxu0 %v2254
        %2267 = vmatpush.bf16.msra.mxu0 %v2253
        %2268 = vmatmul.bf16.gmra.mxu0 %v2258
        %v2269 = vpop.f32.mrf.mxu0
        %v2270 = vadd.f32 %v2243, %v2269
        %v2271 = vpop.f32.mrf.mxu0
        %2272 = vdwg.mxu0
        %s2273 = scalar_lea.vmem %s15, 16
        %v2274 = vld [vmem:[%s2273] sm:$0xf]
        %v2275 = vld [vmem:[%s2273 + $0x4] sm:$0xf]
        %v2276 = vld [vmem:[%s2273 + $0x8] sm:$0xf]
        %v2277 = vld [vmem:[%s2273 + $0xc] sm:$0xf]
        %s2278 = scalar_lea.vmem %s16, 1
        %v2279 = vld [vmem:[%s2278] sm:$0x1]
        %v2281 = vperm.slane %v2279, 0
        %v2287 = vunpack.c.l.b16 %v2274
        %v2288 = vunpack.c.l.b16 %v2275
        %v2289 = vunpack.c.l.b16 %v2276
        %v2290 = vunpack.c.l.b16 %v2277
        %v2291 = vpack.c.b16 %v2288, %v2287
        %v2292 = vpack.c.b16 %v2290, %v2289
        %2295 = vmatpush.bf16.msra.mxu0 0
        %2296 = vmatpush.bf16.msra.mxu0 0
        %2297 = vmatpush.bf16.msra.mxu0 0
        %2298 = vmatpush.bf16.msra.mxu0 0
        %2299 = vmatpush.bf16.msra.mxu0 0
        %2300 = vmatpush.bf16.msra.mxu0 0
        %2301 = vmatpush.bf16.msra.mxu0 %v2292
        %2302 = vmatpush.bf16.msra.mxu0 %v2291
        %2303 = vmatmul.bf16.gmra.mxu0 %v2258
        %v2304 = vpop.f32.mrf.mxu0
        %v2305 = vadd.f32 %v2281, %v2304
        %v2306 = vpop.f32.mrf.mxu0
        %2307 = vdwg.mxu0
        %s2308 = scalar_lea.vmem %s17, 16
        %v2309 = vld [vmem:[%s2308] sm:$0xf]
        %v2310 = vld [vmem:[%s2308 + $0x4] sm:$0xf]
        %v2311 = vld [vmem:[%s2308 + $0x8] sm:$0xf]
        %v2312 = vld [vmem:[%s2308 + $0xc] sm:$0xf]
        %s2313 = scalar_lea.vmem %s18, 1
        %v2314 = vld [vmem:[%s2313] sm:$0x1]
        %v2316 = vperm.slane %v2314, 0
        %v2322 = vunpack.c.l.b16 %v2309
        %v2323 = vunpack.c.l.b16 %v2310
        %v2324 = vunpack.c.l.b16 %v2311
        %v2325 = vunpack.c.l.b16 %v2312
        %v2326 = vpack.c.b16 %v2323, %v2322
        %v2327 = vpack.c.b16 %v2325, %v2324
        %2330 = vmatpush.bf16.msra.mxu0 0
        %2331 = vmatpush.bf16.msra.mxu0 0
        %2332 = vmatpush.bf16.msra.mxu0 0
        %2333 = vmatpush.bf16.msra.mxu0 0
        %2334 = vmatpush.bf16.msra.mxu0 0
        %2335 = vmatpush.bf16.msra.mxu0 0
        %2336 = vmatpush.bf16.msra.mxu0 %v2327
        %2337 = vmatpush.bf16.msra.mxu0 %v2326
        %2338 = vmatmul.bf16.gmra.mxu0 %v2258
        %v2339 = vpop.f32.mrf.mxu0
        %v2340 = vadd.f32 %v2316, %v2339
        %v2341 = vpop.f32.mrf.mxu0
        %2342 = vdwg.mxu0
        %v2343 = vpack.c.bf16 %v2305, %v2305
        %v2344 = vmul.f32 %v2270, %v1233
        %v2345 = vpack.c.bf16 %v2344, %v2344
        %v2347 = vsel %vm946, %v2345, 0
        %v2350 = vsel %vm946, %v2343, 0
        %2352 = vmatpush.bf16.xpose.msra.mxu0 0
        %2353 = vmatpush.bf16.xpose.msra.mxu0 0
        %2354 = vmatpush.bf16.xpose.msra.mxu0 0
        %2355 = vmatpush.bf16.xpose.msra.mxu0 0
        %2356 = vmatpush.bf16.xpose.msra.mxu0 0
        %2357 = vmatpush.bf16.xpose.msra.mxu0 0
        %2358 = vmatpush.bf16.xpose.msra.mxu0 0
        %2359 = vmatpush.bf16.xpose.msra.mxu0 %v2350
        %2360 = vmatmul.bf16.gmra.mxu0 %v2347
        %v2361 = vpop.f32.mrf.mxu0
        %v2362 = vadd.f32 0.0, %v2361
        %v2363 = vpop.f32.mrf.mxu0
        %2364 = vdwg.mxu0
        %v2365 = vmul.f32 %v2362, 0.35355338
        %v2366 = vsel %vm1612, %v2365, -inf
        %2367 = vmax.xlane.f32.xlu0 %v2366
        %v2368 = vpop.xlane.xlu0 %2367
        %v2369 = vsub.f32 %v2365, %v2368
        %v2370 = vmul.f32 %v2369, 1.442695
        %v2371 = vpow.pop %v2370
        %v2372 = vsel %vm1612, %v2371, 0.0
        %2373 = vadd.xlane.f32.xlu0 %v2372
        %v2374 = vpop.xlane.xlu0 %2373
        %v2375 = vrcp.pop %v2374
        %v2376 = vmul.f32 %v2371, %v2375
        %v2377 = vmul.f32 %v2340, %v1233
        %v2378 = vpack.c.bf16 %v2377, %v2377
        %v2379 = vpack.c.bf16 %v2376, %v2376
        %v2380 = vmul.f32 %v2270, %v1238
        %v2381 = vpack.c.bf16 %v2380, %v2380
        %v2383 = vsel %vm946, %v2381, 0
        %2385 = vmatpush.bf16.xpose.msra.mxu0 0
        %2386 = vmatpush.bf16.xpose.msra.mxu0 0
        %2387 = vmatpush.bf16.xpose.msra.mxu0 0
        %2388 = vmatpush.bf16.xpose.msra.mxu0 0
        %2389 = vmatpush.bf16.xpose.msra.mxu0 0
        %2390 = vmatpush.bf16.xpose.msra.mxu0 0
        %2391 = vmatpush.bf16.xpose.msra.mxu0 0
        %2392 = vmatpush.bf16.xpose.msra.mxu0 %v2350
        %2393 = vmatmul.bf16.gmra.mxu0 %v2383
        %v2394 = vpop.f32.mrf.mxu0
        %v2395 = vadd.f32 0.0, %v2394
        %v2396 = vpop.f32.mrf.mxu0
        %2397 = vdwg.mxu0
        %v2398 = vmul.f32 %v2395, 0.35355338
        %v2399 = vsel %vm1612, %v2398, -inf
        %2400 = vmax.xlane.f32.xlu0 %v2399
        %v2401 = vpop.xlane.xlu0 %2400
        %v2402 = vsub.f32 %v2398, %v2401
        %v2403 = vmul.f32 %v2402, 1.442695
        %v2404 = vpow.pop %v2403
        %v2405 = vsel %vm1612, %v2404, 0.0
        %2406 = vadd.xlane.f32.xlu0 %v2405
        %v2407 = vpop.xlane.xlu0 %2406
        %v2408 = vrcp.pop %v2407
        %v2409 = vmul.f32 %v2404, %v2408
        %v2410 = vmul.f32 %v2340, %v1238
        %v2411 = vpack.c.bf16 %v2410, %v2410
        %v2412 = vpack.c.bf16 %v2409, %v2409
        %v2414 = vsel %vm1612, %v2412, 0
        %v2417 = vsel %vm1663, %v2411, 0
        %2419 = vmatpush.bf16.msra.mxu0 0
        %2420 = vmatpush.bf16.msra.mxu0 0
        %2421 = vmatpush.bf16.msra.mxu0 0
        %2422 = vmatpush.bf16.msra.mxu0 0
        %2423 = vmatpush.bf16.msra.mxu0 0
        %2424 = vmatpush.bf16.msra.mxu0 0
        %2425 = vmatpush.bf16.msra.mxu0 0
        %2426 = vmatpush.bf16.msra.mxu0 %v2417
        %2427 = vmatmul.bf16.gmra.mxu0 %v2414
        %v2428 = vpop.f32.mrf.mxu0
        %v2429 = vadd.f32 0.0, %v2428
        %v2430 = vpop.f32.mrf.mxu0
        %2431 = vdwg.mxu0
        %v2433 = vsel %vm1612, %v2379, 0
        %v2436 = vsel %vm1663, %v2378, 0
        %2438 = vmatpush.bf16.msra.mxu0 0
        %2439 = vmatpush.bf16.msra.mxu0 0
        %2440 = vmatpush.bf16.msra.mxu0 0
        %2441 = vmatpush.bf16.msra.mxu0 0
        %2442 = vmatpush.bf16.msra.mxu0 0
        %2443 = vmatpush.bf16.msra.mxu0 0
        %2444 = vmatpush.bf16.msra.mxu0 0
        %2445 = vmatpush.bf16.msra.mxu0 %v2436
        %2446 = vmatmul.bf16.gmra.mxu0 %v2433
        %v2447 = vpop.f32.mrf.mxu0
        %v2448 = vadd.f32 %v2429, %v2447
        %v2449 = vpop.f32.mrf.mxu0
        %2450 = vdwg.mxu0
        %v2451 = vmul.f32 %v2270, %v1243
        %v2452 = vpack.c.bf16 %v2451, %v2451
        %v2454 = vsel %vm946, %v2452, 0
        %2456 = vmatpush.bf16.xpose.msra.mxu0 0
        %2457 = vmatpush.bf16.xpose.msra.mxu0 0
        %2458 = vmatpush.bf16.xpose.msra.mxu0 0
        %2459 = vmatpush.bf16.xpose.msra.mxu0 0
        %2460 = vmatpush.bf16.xpose.msra.mxu0 0
        %2461 = vmatpush.bf16.xpose.msra.mxu0 0
        %2462 = vmatpush.bf16.xpose.msra.mxu0 0
        %2463 = vmatpush.bf16.xpose.msra.mxu0 %v2350
        %2464 = vmatmul.bf16.gmra.mxu0 %v2454
        %v2465 = vpop.f32.mrf.mxu0
        %v2466 = vadd.f32 0.0, %v2465
        %v2467 = vpop.f32.mrf.mxu0
        %2468 = vdwg.mxu0
        %v2469 = vmul.f32 %v2466, 0.35355338
        %v2470 = vsel %vm1612, %v2469, -inf
        %2471 = vmax.xlane.f32.xlu0 %v2470
        %v2472 = vpop.xlane.xlu0 %2471
        %v2473 = vsub.f32 %v2469, %v2472
        %v2474 = vmul.f32 %v2473, 1.442695
        %v2475 = vpow.pop %v2474
        %v2476 = vsel %vm1612, %v2475, 0.0
        %2477 = vadd.xlane.f32.xlu0 %v2476
        %v2478 = vpop.xlane.xlu0 %2477
        %v2479 = vrcp.pop %v2478
        %v2480 = vmul.f32 %v2475, %v2479
        %v2481 = vmul.f32 %v2340, %v1243
        %v2482 = vpack.c.bf16 %v2481, %v2481
        %v2483 = vpack.c.bf16 %v2480, %v2480
        %v2485 = vsel %vm1612, %v2483, 0
        %v2488 = vsel %vm1663, %v2482, 0
        %2490 = vmatpush.bf16.msra.mxu0 0
        %2491 = vmatpush.bf16.msra.mxu0 0
        %2492 = vmatpush.bf16.msra.mxu0 0
        %2493 = vmatpush.bf16.msra.mxu0 0
        %2494 = vmatpush.bf16.msra.mxu0 0
        %2495 = vmatpush.bf16.msra.mxu0 0
        %2496 = vmatpush.bf16.msra.mxu0 0
        %2497 = vmatpush.bf16.msra.mxu0 %v2488
        %2498 = vmatmul.bf16.gmra.mxu0 %v2485
        %v2499 = vpop.f32.mrf.mxu0
        %v2500 = vadd.f32 0.0, %v2499
        %v2501 = vpop.f32.mrf.mxu0
        %2502 = vdwg.mxu0
        %v2503 = vadd.f32 %v2448, %v2500
        %v2504 = vmul.f32 %v2270, %v1248
        %v2505 = vpack.c.bf16 %v2504, %v2504
        %v2507 = vsel %vm946, %v2505, 0
        %2509 = vmatpush.bf16.xpose.msra.mxu0 0
        %2510 = vmatpush.bf16.xpose.msra.mxu0 0
        %2511 = vmatpush.bf16.xpose.msra.mxu0 0
        %2512 = vmatpush.bf16.xpose.msra.mxu0 0
        %2513 = vmatpush.bf16.xpose.msra.mxu0 0
        %2514 = vmatpush.bf16.xpose.msra.mxu0 0
        %2515 = vmatpush.bf16.xpose.msra.mxu0 0
        %2516 = vmatpush.bf16.xpose.msra.mxu0 %v2350
        %2517 = vmatmul.bf16.gmra.mxu0 %v2507
        %v2518 = vpop.f32.mrf.mxu0
        %v2519 = vadd.f32 0.0, %v2518
        %v2520 = vpop.f32.mrf.mxu0
        %2521 = vdwg.mxu0
        %v2522 = vmul.f32 %v2519, 0.35355338
        %v2523 = vsel %vm1612, %v2522, -inf
        %2524 = vmax.xlane.f32.xlu0 %v2523
        %v2525 = vpop.xlane.xlu0 %2524
        %v2526 = vsub.f32 %v2522, %v2525
        %v2527 = vmul.f32 %v2526, 1.442695
        %v2528 = vpow.pop %v2527
        %v2529 = vsel %vm1612, %v2528, 0.0
        %2530 = vadd.xlane.f32.xlu0 %v2529
        %v2531 = vpop.xlane.xlu0 %2530
        %v2532 = vrcp.pop %v2531
        %v2533 = vmul.f32 %v2528, %v2532
        %v2534 = vmul.f32 %v2340, %v1248
        %v2535 = vpack.c.bf16 %v2534, %v2534
        %v2536 = vpack.c.bf16 %v2533, %v2533
        %v2538 = vsel %vm1612, %v2536, 0
        %v2541 = vsel %vm1663, %v2535, 0
        %2543 = vmatpush.bf16.msra.mxu0 0
        %2544 = vmatpush.bf16.msra.mxu0 0
        %2545 = vmatpush.bf16.msra.mxu0 0
        %2546 = vmatpush.bf16.msra.mxu0 0
        %2547 = vmatpush.bf16.msra.mxu0 0
        %2548 = vmatpush.bf16.msra.mxu0 0
        %2549 = vmatpush.bf16.msra.mxu0 0
        %2550 = vmatpush.bf16.msra.mxu0 %v2541
        %2551 = vmatmul.bf16.gmra.mxu0 %v2538
        %v2552 = vpop.f32.mrf.mxu0
        %v2553 = vadd.f32 0.0, %v2552
        %v2554 = vpop.f32.mrf.mxu0
        %2555 = vdwg.mxu0
        %v2556 = vadd.f32 %v2503, %v2553
        %s2557 = scalar_lea.vmem %s19, 16
        %v2558 = vld [vmem:[%s2557] sm:$0xf]
        %v2559 = vld [vmem:[%s2557 + $0x4] sm:$0xf]
        %v2560 = vld [vmem:[%s2557 + $0x8] sm:$0xf]
        %v2561 = vld [vmem:[%s2557 + $0xc] sm:$0xf]
        %v2562 = vpack.c.bf16 %v2556, %v2556
        %s2563 = scalar_lea.vmem %s20, 1
        %v2564 = vld [vmem:[%s2563] sm:$0x1]
        %v2566 = vperm.slane %v2564, 0
        %v2572 = vunpack.c.l.b16 %v2558
        %v2573 = vunpack.c.l.b16 %v2559
        %v2574 = vunpack.c.l.b16 %v2560
        %v2575 = vunpack.c.l.b16 %v2561
        %v2576 = vpack.c.b16 %v2573, %v2572
        %v2577 = vpack.c.b16 %v2575, %v2574
        %v2581 = vsel %vm946, %v2562, 0
        %2583 = vmatpush.bf16.msra.mxu0 0
        %2584 = vmatpush.bf16.msra.mxu0 0
        %2585 = vmatpush.bf16.msra.mxu0 0
        %2586 = vmatpush.bf16.msra.mxu0 0
        %2587 = vmatpush.bf16.msra.mxu0 0
        %2588 = vmatpush.bf16.msra.mxu0 0
        %2589 = vmatpush.bf16.msra.mxu0 %v2577
        %2590 = vmatpush.bf16.msra.mxu0 %v2576
        %2591 = vmatmul.bf16.gmra.mxu0 %v2581
        %v2592 = vpop.f32.mrf.mxu0
        %v2593 = vadd.f32 %v2566, %v2592
        %v2594 = vpop.f32.mrf.mxu0
        %2595 = vdwg.mxu0
        %v2596 = vmul.f32 %v2101, %v2593
        %v2597 = vadd.f32 %v1998, %v2596
        %v2598 = vsel %vm946, %v2597, 0.0
        %2599 = vadd.xlane.f32.xlu0 %v2598
        %v2600 = vpop.xlane.xlu0 %2599
        %v2601 = vmul.f32 %v2600, %v956
        %v2602 = vsub.f32 %v2597, %v2601
        %v2603 = vmul.f32 %v2602, %v2602
        %v2604 = vsel %vm946, %v2603, 0.0
        %2605 = vadd.xlane.f32.xlu0 %v2604
        %v2606 = vpop.xlane.xlu0 %2605
        %v2607 = vmul.f32 %v2606, %v956
        %v2608 = vadd.f32 %v2607, 1e-06
        %v2609 = vrsqrt.pop %v2608
        %v2610 = vmul.f32 %v2609, %v2608
        %v2611 = vmul.f32 %v2610, %v2609
        %v2612 = vmul.f32 0.5, %v2611
        %v2613 = vsub.f32 1.5, %v2612
        %v2614 = vmul.f32 %v2609, %v2613
        %vm2615 = vweird.f32 %v2608
        %vm2616 = vweird.f32 %v2609
        %vm2617 = vmor %vm2615, %vm2616
        %v2618 = vsel %vm2617, %v2609, %v2614
        %v2619 = vmul.f32 %v2602, %v2618
        %v2620 = vadd.f32 %v2171, 1.0
        %v2621 = vmul.f32 %v2619, %v2620
        %v2622 = vadd.f32 %v2621, %v2136
        %s2623 = scalar_lea.vmem %s21, 16
        %v2624 = vld [vmem:[%s2623] sm:$0xf]
        %v2625 = vld [vmem:[%s2623 + $0x4] sm:$0xf]
        %v2626 = vld [vmem:[%s2623 + $0x8] sm:$0xf]
        %v2627 = vld [vmem:[%s2623 + $0xc] sm:$0xf]
        %v2628 = vpack.c.bf16 %v2622, %v2622
        %s2629 = scalar_lea.vmem %s22, 1
        %v2630 = vld [vmem:[%s2629] sm:$0x1]
        %v2632 = vperm.slane %v2630, 0
        %v2638 = vunpack.c.l.b16 %v2624
        %v2639 = vunpack.c.l.b16 %v2625
        %v2640 = vunpack.c.l.b16 %v2626
        %v2641 = vunpack.c.l.b16 %v2627
        %v2642 = vpack.c.b16 %v2639, %v2638
        %v2643 = vpack.c.b16 %v2641, %v2640
        %v2647 = vsel %vm946, %v2628, 0
        %2649 = vmatpush.bf16.msra.mxu0 0
        %2650 = vmatpush.bf16.msra.mxu0 0
        %2651 = vmatpush.bf16.msra.mxu0 0
        %2652 = vmatpush.bf16.msra.mxu0 0
        %2653 = vmatpush.bf16.msra.mxu0 0
        %2654 = vmatpush.bf16.msra.mxu0 0
        %2655 = vmatpush.bf16.msra.mxu0 %v2643
        %2656 = vmatpush.bf16.msra.mxu0 %v2642
        %2657 = vmatmul.bf16.gmra.mxu0 %v2647
        %v2658 = vpop.f32.mrf.mxu0
        %v2659 = vadd.f32 %v2632, %v2658
        %v2660 = vpop.f32.mrf.mxu0
        %2661 = vdwg.mxu0
        %v2662 = vmul.f32 %v2659, 0.5
        %v2663 = vmul.f32 %v2659, 0.044715
        %v2664 = vmul.f32 %v2663, %v2659
        %v2665 = vmul.f32 %v2664, %v2659
        %v2666 = vadd.f32 %v2659, %v2665
        %v2667 = vmul.f32 %v2666, 0.7978846
        %v2668 = vtanh.pop %v2667
        %v2669 = vadd.f32 %v2668, 1.0
        %v2670 = vmul.f32 %v2662, %v2669
        %s2671 = scalar_lea.vmem %s23, 64
        %v2672 = vld [vmem:[%s2671] sm:$0xf]
        %v2673 = vld [vmem:[%s2671 + $0x4] sm:$0xf]
        %v2674 = vld [vmem:[%s2671 + $0x8] sm:$0xf]
        %v2675 = vld [vmem:[%s2671 + $0xc] sm:$0xf]
        %v2676 = vld [vmem:[%s2671 + $0x10] sm:$0xf]
        %v2677 = vld [vmem:[%s2671 + $0x14] sm:$0xf]
        %v2678 = vld [vmem:[%s2671 + $0x18] sm:$0xf]
        %v2679 = vld [vmem:[%s2671 + $0x1c] sm:$0xf]
        %v2680 = vld [vmem:[%s2671 + $0x20] sm:$0xf]
        %v2681 = vld [vmem:[%s2671 + $0x24] sm:$0xf]
        %v2682 = vld [vmem:[%s2671 + $0x28] sm:$0xf]
        %v2683 = vld [vmem:[%s2671 + $0x2c] sm:$0xf]
        %v2684 = vld [vmem:[%s2671 + $0x30] sm:$0xf]
        %v2685 = vld [vmem:[%s2671 + $0x34] sm:$0xf]
        %v2686 = vld [vmem:[%s2671 + $0x38] sm:$0xf]
        %v2687 = vld [vmem:[%s2671 + $0x3c] sm:$0xf]
        %v2688 = vpack.c.bf16 %v2670, %v2670
        %s2689 = scalar_lea.vmem %s24, 1
        %v2690 = vld [vmem:[%s2689] sm:$0x1]
        %v2692 = vperm.slane %v2690, 0
        %v2710 = vunpack.c.l.b16 %v2672
        %v2711 = vunpack.c.l.b16 %v2673
        %v2712 = vunpack.c.l.b16 %v2674
        %v2713 = vunpack.c.l.b16 %v2675
        %v2714 = vunpack.c.l.b16 %v2676
        %v2715 = vunpack.c.l.b16 %v2677
        %v2716 = vunpack.c.l.b16 %v2678
        %v2717 = vunpack.c.l.b16 %v2679
        %v2718 = vunpack.c.l.b16 %v2680
        %v2719 = vunpack.c.l.b16 %v2681
        %v2720 = vunpack.c.l.b16 %v2682
        %v2721 = vunpack.c.l.b16 %v2683
        %v2722 = vunpack.c.l.b16 %v2684
        %v2723 = vunpack.c.l.b16 %v2685
        %v2724 = vunpack.c.l.b16 %v2686
        %v2725 = vunpack.c.l.b16 %v2687
        %v2726 = vpack.c.b16 %v2711, %v2710
        %v2727 = vpack.c.b16 %v2713, %v2712
        %v2728 = vpack.c.b16 %v2715, %v2714
        %v2729 = vpack.c.b16 %v2717, %v2716
        %v2730 = vpack.c.b16 %v2719, %v2718
        %v2731 = vpack.c.b16 %v2721, %v2720
        %v2732 = vpack.c.b16 %v2723, %v2722
        %v2733 = vpack.c.b16 %v2725, %v2724
        %2742 = vmatpush.bf16.msra.mxu0 %v2733
        %2743 = vmatpush.bf16.msra.mxu0 %v2732
        %2744 = vmatpush.bf16.msra.mxu0 %v2731
        %2745 = vmatpush.bf16.msra.mxu0 %v2730
        %2746 = vmatpush.bf16.msra.mxu0 %v2729
        %2747 = vmatpush.bf16.msra.mxu0 %v2728
        %2748 = vmatpush.bf16.msra.mxu0 %v2727
        %2749 = vmatpush.bf16.msra.mxu0 %v2726
        %2750 = vmatmul.bf16.gmra.mxu0 %v2688
        %v2751 = vpop.f32.mrf.mxu0
        %v2752 = vadd.f32 %v2692, %v2751
        %v2753 = vpop.f32.mrf.mxu0
        %2754 = vdwg.mxu0
        %v2755 = vmul.f32 %v2206, %v2752
        %v2756 = vadd.f32 %v2597, %v2755
        %2757 = vst.msk [vmem:[%s772] sm:$0xff] %vm946, %v2756
        %s2758 = sand.u32 %s582, 1
        %s2759 = scalar_lea.sflag [#allocation3], %s2758
        %s2760 = sand.u32 %s582, 1
        %s2761 = smul.addr %s2760, 8
        %s2762 = scalar_lea.vmem [#allocation2], %s2761
        // Predicated region
        $region121: #{dit_encoder_forward.1} parent=119 // pred_check
          %p2763 = pneg %p592
        $region122: #{dit_encoder_forward.1} parent=119 // pred_check_branch
          %2765 = sbr.rel (%p2763) target = $region124
        $region123: #{dit_encoder_forward.1} parent=119 // pred_region
          %2767 = vsyncadd %s2759, 0
          %s2768 = smul.addr %s39, 8
          %s2769 = scalar_lea.hbm %s25, %s2768
          %s2771 = sshll.u32 %s2762, 4
          %s2772 = int_to_ptr.vmem [resolvable:$true] %s2771
          %s2773 = sshll.u32 %s2769, 4
          %s2774 = int_to_ptr.hbm [resolvable:$true] %s2773
          %2776 = dma.vmem_to_hbm [thread:$0]  %s2772, 128, %s2774, %s2759
        $region124: #{dit_encoder_forward.1} parent=119 // pred_fallthru
          _
      $region120: #{dit_encoder_forward.1} parent=5 // pred_fallthru
        _
      %p2777 = scmp.le.s32.totalorder 2, %s34
      // Predicated region
      $region125: #{dit_encoder_forward.1} parent=5 // pred_check
        %p2778 = pneg %p2777
      $region126: #{dit_encoder_forward.1} parent=5 // pred_check_branch
        %2780 = sbr.rel (%p2778) target = $region128
      $region127: #{dit_encoder_forward.1} parent=5 // pred_region
        %s2781 = ssub.s32 %s34, 2
        // Predicated region
        $region129: #{dit_encoder_forward.1} parent=127 // pred_check
          %p2782 = pneg %p598
        $region130: #{dit_encoder_forward.1} parent=127 // pred_check_branch
          %2784 = sbr.rel (%p2782) target = $region132
        $region131: #{dit_encoder_forward.1} parent=127 // pred_region
          %s2785 = sand.u32 %s583, 1
          %s2786 = scalar_lea.sflag [#allocation3], %s2785
          %s2787 = sand.u32 %s583, 1
          %s2788 = smul.addr %s2787, 8
          %s2789 = scalar_lea.vmem [#allocation2], %s2788
          %2791 = dma.done %s2786, 128
        $region132: #{dit_encoder_forward.1} parent=127 // pred_fallthru
          _
      $region128: #{dit_encoder_forward.1} parent=5 // pred_fallthru
        _
    $region6: #{dit_encoder_forward.1} parent=1 // loop_footer
      %s38 = sadd.s32 1, %s34
    $region7: #{dit_encoder_forward.1} parent=1 // loop_footer_branch
      %33 = sbr.rel target = $region3
    $region8: #{dit_encoder_forward.1} parent=1 // loop_exit
      _
    %2792 = vsyncpa [#allocation3], 1
    %s2793 = scalar_lea.sflag [#allocation3], 1
    %2794 = vsyncpa %s2793, 1

</llo_original>
